<compile_context>
chip_gen: v7x
topology: tpu7x:2x2x1
jax: 0.10.0
libtpu: 0.0.40
codegen_flags: <defaults>
</compile_context>

<pallas_src>
import functools
import math

import jax
import jax.numpy as jnp
from jax import lax
from jax.experimental import pallas as pl
from jax.experimental.pallas import tpu as pltpu

PARALLEL_B = pltpu.CompilerParams(dimension_semantics=("parallel",))


# ----------------------------- kernel helpers ------------------------------ #

def _ln_rows(x, g, b, eps):
    # One-pass LayerNorm statistics (single read of the tile), f32 math.
    x = x.astype(jnp.float32)
    mu = jnp.mean(x, axis=-1, keepdims=True)
    ex2 = jnp.mean(x * x, axis=-1, keepdims=True)
    var = jnp.maximum(ex2 - mu * mu, 0.0)
    return (x - mu) * lax.rsqrt(var + eps) * g + b


# ------------------------------ fused kernel ------------------------------- #

def _encoder_kernel(x_ref, mask_ref, pe_ref, *args,
                    n_layers, n_heads, d_head, eps, pe_scale):
    # args layout: n_layers * 12 layer-parameter refs, ln_f_g, ln_f_b, out_ref
    layer_refs = args[:n_layers * 12]
    lnf_g_ref, lnf_b_ref, out_ref = args[n_layers * 12:]

    d_model = n_heads * d_head
    scale = 1.0 / math.sqrt(d_head)

    # Positional encoding: x * sqrt(d_model) + pe   (applied once, layer 0)
    x = x_ref[...].astype(jnp.float32) * pe_scale + pe_ref[...]
    # Additive attention mask: 0 keep / -1e9 masked, built once, reused.
    madd = jnp.where(mask_ref[...] < 0.5, -1e9, 0.0).astype(jnp.float32)   # (1, S)

    for li in range(n_layers):                                   # static unroll
        (g1, b1, wqkv_r, bqkv_r, wo_r, bo_r,
         g2, b2, w1_r, bf1_r, w2_r, bf2_r) = layer_refs[li * 12:(li + 1) * 12]

        # ---- pre-LN + fused QKV projection (one (D,3D) matmul) ----
        xn = _ln_rows(x, g1[...], b1[...], eps)
        qkv = jnp.dot(xn, wqkv_r[...],
                      preferred_element_type=jnp.float32) + bqkv_r[...]     # (S,3D)
        q = qkv[:, :d_model]
        k = qkv[:, d_model:2 * d_model]
        v = qkv[:, 2 * d_model:]

        # ---- multi-head attention, Wo folded per head (no lane concat) ----
        wo = wo_r[...].astype(jnp.float32)                                  # (D, D)
        y = None
        for h in range(n_heads):                                 # static unroll
            sl = slice(h * d_head, (h + 1) * d_head)
            qh = q[:, sl] * scale                                # pre-scale q
            s = lax.dot_general(qh, k[:, sl], (((1,), (1,)), ((), ())),
                                preferred_element_type=jnp.float32)  # (S, S)
            s = s + madd
            s = s - jnp.max(s, axis=-1, keepdims=True)
            p = jnp.exp(s)
            p = p * pl.reciprocal(jnp.sum(p, axis=-1, keepdims=True), approx=True)
            oh = jnp.dot(p, v[:, sl], preferred_element_type=jnp.float32)   # (S,dh)
            yh = jnp.dot(oh, wo[sl, :], preferred_element_type=jnp.float32)  # (S,D)
            y = yh if y is None else y + yh
        x = x + y + bo_r[...]                                    # residual add

        # ---- pre-LN + feed-forward (relu) + residual ----
        xn2 = _ln_rows(x, g2[...], b2[...], eps)
        hdd = jnp.dot(xn2, w1_r[...],
                      preferred_element_type=jnp.float32) + bf1_r[...]
        hdd = jnp.maximum(hdd, 0.0)
        x = x + jnp.dot(hdd, w2_r[...],
                        preferred_element_type=jnp.float32) + bf2_r[...]

    # ---- final LayerNorm ----
    out_ref[...] = _ln_rows(x, lnf_g_ref[...], lnf_b_ref[...], eps).astype(out_ref.dtype)


# ------------------------------ BlockSpecs --------------------------------- #

def _batch_spec(tile_dims):
    # block (None, *tile_dims): pick batch b, squeeze the batch axis in-kernel.
    zeros = (0,) * len(tile_dims)
    return pl.BlockSpec((None,) + tuple(tile_dims), lambda b: (b,) + zeros)


def _bcast_spec(shape):
    # whole array, same block every grid step (weights / LN params / PE table)
    # -> stays resident in VMEM across the batch grid.
    zeros = (0,) * len(shape)
    return pl.BlockSpec(tuple(shape), lambda b: zeros)


# -------------------------------- wrapper ----------------------------------- #

def encoder_forward(src, mask, params, n_heads):
    B, S, D = src.shape
    n_layers = len(params["layers"])
    pe = params["pe_table"][:S]

    layer_arrays, layer_specs = [], []
    for p in params["layers"]:
        arrs = [p["ln1_g"], p["ln1_b"], p["wqkv"], p["bqkv"], p["wo"], p["bo"],
                p["ln2_g"], p["ln2_b"], p["w1"], p["b1"], p["w2"], p["b2"]]
        layer_arrays += arrs
        layer_specs += [_bcast_spec(a.shape) for a in arrs]

    kernel = functools.partial(
        _encoder_kernel, n_layers=n_layers, n_heads=n_heads,
        d_head=D // n_heads, eps=1e-6, pe_scale=math.sqrt(D))

    return pl.pallas_call(
        kernel,
        grid=(B,),
        out_shape=jax.ShapeDtypeStruct((B, S, D), src.dtype),
        in_specs=[_batch_spec((S, D)),            # src
                  _batch_spec((1, S)),            # mask (B,1,S)
                  _bcast_spec((S, D))]            # pe table
                 + layer_specs
                 + [_bcast_spec((1, D)), _bcast_spec((1, D))],   # final LN
        out_specs=_batch_spec((S, D)),
        compiler_params=PARALLEL_B,
    )(src, mask, pe, *layer_arrays, params["ln_f_g"], params["ln_f_b"])


# ---------------------------- parameter setup ------------------------------ #

def make_pe_table(max_len, d_model):
    pos = jnp.arange(max_len, dtype=jnp.float32)[:, None]
    i = jnp.arange(d_model, dtype=jnp.float32)[None, :]
    angle = pos / jnp.power(10000.0, (2.0 * jnp.floor(i / 2.0)) / d_model)
    even = (jnp.arange(d_model) % 2) == 0
    return jnp.where(even[None, :], jnp.sin(angle), jnp.cos(angle)).astype(jnp.float32)


def init_params(key, d_model, n_layers, d_ff, max_len):
    params = {"pe_table": make_pe_table(max_len, d_model), "layers": []}
    for _ in range(n_layers):
        key, *ks = jax.random.split(key, 7)
        wq = 0.02 * jax.random.normal(ks[0], (d_model, d_model), jnp.float32)
        wk = 0.02 * jax.random.normal(ks[1], (d_model, d_model), jnp.float32)
        wv = 0.02 * jax.random.normal(ks[2], (d_model, d_model), jnp.float32)
        p = {
            "ln1_g": jnp.ones((1, d_model), jnp.float32),
            "ln1_b": jnp.zeros((1, d_model), jnp.float32),
            "wqkv": jnp.concatenate([wq, wk, wv], axis=1),        # fused (D, 3D)
            "bqkv": jnp.zeros((1, 3 * d_model), jnp.float32),
            "wo": 0.02 * jax.random.normal(ks[3], (d_model, d_model), jnp.float32),
            "bo": jnp.zeros((1, d_model), jnp.float32),
            "ln2_g": jnp.ones((1, d_model), jnp.float32),
            "ln2_b": jnp.zeros((1, d_model), jnp.float32),
            "w1": 0.02 * jax.random.normal(ks[4], (d_model, d_ff), jnp.float32),
            "b1": jnp.zeros((1, d_ff), jnp.float32),
            "w2": 0.02 * jax.random.normal(ks[5], (d_ff, d_model), jnp.float32),
            "b2": jnp.zeros((1, d_model), jnp.float32),
        }
        params["layers"].append(p)
    params["ln_f_g"] = jnp.ones((1, d_model), jnp.float32)
    params["ln_f_b"] = jnp.zeros((1, d_model), jnp.float32)
    return params


# --------------------------------- main ------------------------------------ #

if __name__ == "__main__":
    B, S, D, H, N_LAYERS, D_FF = 2, 8, 32, 4, 2, 64

    key = jax.random.PRNGKey(0)
    k_x, k_p = jax.random.split(key)

    # src plays the role of already-embedded tokens: (B, S, d_model)
    src = jax.random.normal(k_x, (B, S, D), jnp.float32)
    # padding mask: 1.0 = attend, 0.0 = masked (last 2 positions of batch 1 padded)
    mask = jnp.ones((B, 1, S), jnp.float32)
    mask = mask.at[1, 0, S - 2:].set(0.0)

    params = init_params(k_p, D, N_LAYERS, D_FF, max_len=S)

    fwd = jax.jit(functools.partial(encoder_forward, n_heads=H))
    out = fwd(src, mask, params)
    jax.block_until_ready(out)
    assert out.shape == (B, S, D) and out.dtype == jnp.float32
    assert bool(jnp.all(jnp.isfinite(out)))
    print("KERNEL_OK")
</pallas_src>

<mosaic_0001>
module attributes {stable_mosaic.version = 11 : i64} {
  func.func @_encoder_kernel(%arg0: i32, %arg1: memref<1x8x32xf32, #tpu.memory_space<vmem>>, %arg2: memref<1x1x8xf32, #tpu.memory_space<vmem>>, %arg3: memref<8x32xf32, #tpu.memory_space<vmem>>, %arg4: memref<1x32xf32, #tpu.memory_space<vmem>>, %arg5: memref<1x32xf32, #tpu.memory_space<vmem>>, %arg6: memref<32x96xf32, #tpu.memory_space<vmem>>, %arg7: memref<1x96xf32, #tpu.memory_space<vmem>>, %arg8: memref<32x32xf32, #tpu.memory_space<vmem>>, %arg9: memref<1x32xf32, #tpu.memory_space<vmem>>, %arg10: memref<1x32xf32, #tpu.memory_space<vmem>>, %arg11: memref<1x32xf32, #tpu.memory_space<vmem>>, %arg12: memref<32x64xf32, #tpu.memory_space<vmem>>, %arg13: memref<1x64xf32, #tpu.memory_space<vmem>>, %arg14: memref<64x32xf32, #tpu.memory_space<vmem>>, %arg15: memref<1x32xf32, #tpu.memory_space<vmem>>, %arg16: memref<1x32xf32, #tpu.memory_space<vmem>>, %arg17: memref<1x32xf32, #tpu.memory_space<vmem>>, %arg18: memref<32x96xf32, #tpu.memory_space<vmem>>, %arg19: memref<1x96xf32, #tpu.memory_space<vmem>>, %arg20: memref<32x32xf32, #tpu.memory_space<vmem>>, %arg21: memref<1x32xf32, #tpu.memory_space<vmem>>, %arg22: memref<1x32xf32, #tpu.memory_space<vmem>>, %arg23: memref<1x32xf32, #tpu.memory_space<vmem>>, %arg24: memref<32x64xf32, #tpu.memory_space<vmem>>, %arg25: memref<1x64xf32, #tpu.memory_space<vmem>>, %arg26: memref<64x32xf32, #tpu.memory_space<vmem>>, %arg27: memref<1x32xf32, #tpu.memory_space<vmem>>, %arg28: memref<1x32xf32, #tpu.memory_space<vmem>>, %arg29: memref<1x32xf32, #tpu.memory_space<vmem>>, %arg30: memref<1x8x32xf32, #tpu.memory_space<vmem>>) attributes {dimension_semantics = [#tpu.dimension_semantics<parallel>], iteration_bounds = array<i64: 2>, scalar_prefetch = 0 : i64, scratch_operands = 0 : i64, tpu.core_type = #tpu.core_type<tc>, window_params = [{transform_indices = @transform_0, window_bounds = array<i64: 1, 8, 32>}, {transform_indices = @transform_1, window_bounds = array<i64: 1, 1, 8>}, {pipeline_mode = #tpu.pipeline_mode<synchronous>, transform_indices = @transform_2, window_bounds = array<i64: 8, 32>}, {pipeline_mode = #tpu.pipeline_mode<synchronous>, transform_indices = @transform_3, window_bounds = array<i64: 1, 32>}, {pipeline_mode = #tpu.pipeline_mode<synchronous>, transform_indices = @transform_4, window_bounds = array<i64: 1, 32>}, {pipeline_mode = #tpu.pipeline_mode<synchronous>, transform_indices = @transform_5, window_bounds = array<i64: 32, 96>}, {pipeline_mode = #tpu.pipeline_mode<synchronous>, transform_indices = @transform_6, window_bounds = array<i64: 1, 96>}, {pipeline_mode = #tpu.pipeline_mode<synchronous>, transform_indices = @transform_7, window_bounds = array<i64: 32, 32>}, {pipeline_mode = #tpu.pipeline_mode<synchronous>, transform_indices = @transform_8, window_bounds = array<i64: 1, 32>}, {pipeline_mode = #tpu.pipeline_mode<synchronous>, transform_indices = @transform_9, window_bounds = array<i64: 1, 32>}, {pipeline_mode = #tpu.pipeline_mode<synchronous>, transform_indices = @transform_10, window_bounds = array<i64: 1, 32>}, {pipeline_mode = #tpu.pipeline_mode<synchronous>, transform_indices = @transform_11, window_bounds = array<i64: 32, 64>}, {pipeline_mode = #tpu.pipeline_mode<synchronous>, transform_indices = @transform_12, window_bounds = array<i64: 1, 64>}, {pipeline_mode = #tpu.pipeline_mode<synchronous>, transform_indices = @transform_13, window_bounds = array<i64: 64, 32>}, {pipeline_mode = #tpu.pipeline_mode<synchronous>, transform_indices = @transform_14, window_bounds = array<i64: 1, 32>}, {pipeline_mode = #tpu.pipeline_mode<synchronous>, transform_indices = @transform_15, window_bounds = array<i64: 1, 32>}, {pipeline_mode = #tpu.pipeline_mode<synchronous>, transform_indices = @transform_16, window_bounds = array<i64: 1, 32>}, {pipeline_mode = #tpu.pipeline_mode<synchronous>, transform_indices = @transform_17, window_bounds = array<i64: 32, 96>}, {pipeline_mode = #tpu.pipeline_mode<synchronous>, transform_indices = @transform_18, window_bounds = array<i64: 1, 96>}, {pipeline_mode = #tpu.pipeline_mode<synchronous>, transform_indices = @transform_19, window_bounds = array<i64: 32, 32>}, {pipeline_mode = #tpu.pipeline_mode<synchronous>, transform_indices = @transform_20, window_bounds = array<i64: 1, 32>}, {pipeline_mode = #tpu.pipeline_mode<synchronous>, transform_indices = @transform_21, window_bounds = array<i64: 1, 32>}, {pipeline_mode = #tpu.pipeline_mode<synchronous>, transform_indices = @transform_22, window_bounds = array<i64: 1, 32>}, {pipeline_mode = #tpu.pipeline_mode<synchronous>, transform_indices = @transform_23, window_bounds = array<i64: 32, 64>}, {pipeline_mode = #tpu.pipeline_mode<synchronous>, transform_indices = @transform_24, window_bounds = array<i64: 1, 64>}, {pipeline_mode = #tpu.pipeline_mode<synchronous>, transform_indices = @transform_25, window_bounds = array<i64: 64, 32>}, {pipeline_mode = #tpu.pipeline_mode<synchronous>, transform_indices = @transform_26, window_bounds = array<i64: 1, 32>}, {pipeline_mode = #tpu.pipeline_mode<synchronous>, transform_indices = @transform_27, window_bounds = array<i64: 1, 32>}, {pipeline_mode = #tpu.pipeline_mode<synchronous>, transform_indices = @transform_28, window_bounds = array<i64: 1, 32>}, {transform_indices = @transform_29, window_bounds = array<i64: 1, 8, 32>}]} {
    %c0 = arith.constant 0 : index
    %c0_0 = arith.constant 0 : index
    %c0_1 = arith.constant 0 : index
    %0 = vector.load %arg1[%c0, %c0_0, %c0_1] : memref<1x8x32xf32, #tpu.memory_space<vmem>>, vector<1x8x32xf32>
    %1 = vector.shape_cast %0 : vector<1x8x32xf32> to vector<8x32xf32>
    %cst = arith.constant 5.65685415 : f32
    %2 = vector.broadcast %cst : f32 to vector<8x32xf32>
    %3 = arith.mulf %1, %2 : vector<8x32xf32>
    %c0_2 = arith.constant 0 : index
    %c0_3 = arith.constant 0 : index
    %4 = vector.load %arg3[%c0_2, %c0_3] : memref<8x32xf32, #tpu.memory_space<vmem>>, vector<8x32xf32>
    %5 = arith.addf %3, %4 : vector<8x32xf32>
    %c0_4 = arith.constant 0 : index
    %c0_5 = arith.constant 0 : index
    %c0_6 = arith.constant 0 : index
    %6 = vector.load %arg2[%c0_4, %c0_5, %c0_6] : memref<1x1x8xf32, #tpu.memory_space<vmem>>, vector<1x1x8xf32>
    %7 = vector.shape_cast %6 : vector<1x1x8xf32> to vector<1x8xf32>
    %cst_7 = arith.constant 5.000000e-01 : f32
    %8 = vector.broadcast %cst_7 : f32 to vector<1x8xf32>
    %9 = arith.cmpf olt, %7, %8 : vector<1x8xf32>
    %cst_8 = arith.constant -1.000000e+09 : f32
    %cst_9 = arith.constant 0.000000e+00 : f32
    %10 = vector.broadcast %cst_8 : f32 to vector<1x8xf32>
    %11 = vector.broadcast %cst_9 : f32 to vector<1x8xf32>
    %12 = arith.select %9, %10, %11 : vector<1x8xi1>, vector<1x8xf32>
    %c0_10 = arith.constant 0 : index
    %c0_11 = arith.constant 0 : index
    %13 = vector.load %arg4[%c0_10, %c0_11] : memref<1x32xf32, #tpu.memory_space<vmem>>, vector<1x32xf32>
    %c0_12 = arith.constant 0 : index
    %c0_13 = arith.constant 0 : index
    %14 = vector.load %arg5[%c0_12, %c0_13] : memref<1x32xf32, #tpu.memory_space<vmem>>, vector<1x32xf32>
    %cst_14 = arith.constant dense<0.000000e+00> : vector<8xf32>
    %15 = vector.multi_reduction <add>, %5, %cst_14 [1] : vector<8x32xf32> to vector<8xf32>
    %16 = vector.shape_cast %15 : vector<8xf32> to vector<8x1xf32>
    %cst_15 = arith.constant 3.200000e+01 : f32
    %17 = vector.broadcast %cst_15 : f32 to vector<8x1xf32>
    %18 = arith.divf %16, %17 : vector<8x1xf32>
    %19 = arith.mulf %5, %5 : vector<8x32xf32>
    %cst_16 = arith.constant dense<0.000000e+00> : vector<8xf32>
    %20 = vector.multi_reduction <add>, %19, %cst_16 [1] : vector<8x32xf32> to vector<8xf32>
    %21 = vector.shape_cast %20 : vector<8xf32> to vector<8x1xf32>
    %cst_17 = arith.constant 3.200000e+01 : f32
    %22 = vector.broadcast %cst_17 : f32 to vector<8x1xf32>
    %23 = arith.divf %21, %22 : vector<8x1xf32>
    %24 = arith.mulf %18, %18 : vector<8x1xf32>
    %25 = arith.subf %23, %24 : vector<8x1xf32>
    %cst_18 = arith.constant 0.000000e+00 : f32
    %26 = vector.broadcast %cst_18 : f32 to vector<8x1xf32>
    %27 = arith.maximumf %25, %26 : vector<8x1xf32>
    %28 = vector.broadcast %18 : vector<8x1xf32> to vector<8x32xf32>
    %29 = arith.subf %5, %28 : vector<8x32xf32>
    %cst_19 = arith.constant 9.99999997E-7 : f32
    %30 = vector.broadcast %cst_19 : f32 to vector<8x1xf32>
    %31 = arith.addf %27, %30 : vector<8x1xf32>
    %32 = math.rsqrt %31 : vector<8x1xf32>
    %33 = vector.broadcast %32 : vector<8x1xf32> to vector<8x32xf32>
    %34 = arith.mulf %29, %33 : vector<8x32xf32>
    %35 = vector.broadcast %13 : vector<1x32xf32> to vector<8x32xf32>
    %36 = arith.mulf %34, %35 : vector<8x32xf32>
    %37 = vector.broadcast %14 : vector<1x32xf32> to vector<8x32xf32>
    %38 = arith.addf %36, %37 : vector<8x32xf32>
    %c0_20 = arith.constant 0 : index
    %c0_21 = arith.constant 0 : index
    %39 = vector.load %arg6[%c0_20, %c0_21] : memref<32x96xf32, #tpu.memory_space<vmem>>, vector<32x96xf32>
    %cst_22 = arith.constant dense<0.000000e+00> : vector<8x96xf32>
    %40 = tpu.matmul %38, %39, %cst_22 {dimension_numbers = #tpu.dot_dimension_numbers<[1], [0], [0], [1], [0, 0, 1, 1], [], []>} : vector<8x32xf32>, vector<32x96xf32>, vector<8x96xf32> -> vector<8x96xf32>
    %c0_23 = arith.constant 0 : index
    %c0_24 = arith.constant 0 : index
    %41 = vector.load %arg7[%c0_23, %c0_24] : memref<1x96xf32, #tpu.memory_space<vmem>>, vector<1x96xf32>
    %42 = vector.broadcast %41 : vector<1x96xf32> to vector<8x96xf32>
    %43 = arith.addf %40, %42 : vector<8x96xf32>
    %44 = vector.extract_strided_slice %43 {offsets = [0, 0], sizes = [8, 32], strides = [1, 1]} : vector<8x96xf32> to vector<8x32xf32>
    %45 = vector.extract_strided_slice %43 {offsets = [0, 32], sizes = [8, 32], strides = [1, 1]} : vector<8x96xf32> to vector<8x32xf32>
    %46 = vector.extract_strided_slice %43 {offsets = [0, 64], sizes = [8, 32], strides = [1, 1]} : vector<8x96xf32> to vector<8x32xf32>
    %c0_25 = arith.constant 0 : index
    %c0_26 = arith.constant 0 : index
    %47 = vector.load %arg8[%c0_25, %c0_26] : memref<32x32xf32, #tpu.memory_space<vmem>>, vector<32x32xf32>
    %48 = vector.extract_strided_slice %44 {offsets = [0, 0], sizes = [8, 8], strides = [1, 1]} : vector<8x32xf32> to vector<8x8xf32>
    %cst_27 = arith.constant 0.353553385 : f32
    %49 = vector.broadcast %cst_27 : f32 to vector<8x8xf32>
    %50 = arith.mulf %48, %49 : vector<8x8xf32>
    %51 = vector.extract_strided_slice %45 {offsets = [0, 0], sizes = [8, 8], strides = [1, 1]} : vector<8x32xf32> to vector<8x8xf32>
    %cst_28 = arith.constant dense<0.000000e+00> : vector<8x8xf32>
    %52 = tpu.matmul %50, %51, %cst_28 {dimension_numbers = #tpu.dot_dimension_numbers<[1], [1], [0], [0], [0, 0, 1, 0], [], []>} : vector<8x8xf32>, vector<8x8xf32>, vector<8x8xf32> -> vector<8x8xf32>
    %53 = vector.broadcast %12 : vector<1x8xf32> to vector<8x8xf32>
    %54 = arith.addf %52, %53 : vector<8x8xf32>
    %cst_29 = arith.constant dense<0xFF800000> : vector<8xf32>
    %55 = vector.multi_reduction <maximumf>, %54, %cst_29 [1] : vector<8x8xf32> to vector<8xf32>
    %56 = vector.shape_cast %55 : vector<8xf32> to vector<8x1xf32>
    %57 = vector.broadcast %56 : vector<8x1xf32> to vector<8x8xf32>
    %58 = arith.subf %54, %57 : vector<8x8xf32>
    %59 = math.exp %58 : vector<8x8xf32>
    %cst_30 = arith.constant dense<0.000000e+00> : vector<8xf32>
    %60 = vector.multi_reduction <add>, %59, %cst_30 [1] : vector<8x8xf32> to vector<8xf32>
    %61 = vector.shape_cast %60 : vector<8xf32> to vector<8x1xf32>
    %62 = tpu.reciprocal %61 {approx = true} : vector<8x1xf32> -> vector<8x1xf32>
    %63 = vector.broadcast %62 : vector<8x1xf32> to vector<8x8xf32>
    %64 = arith.mulf %59, %63 : vector<8x8xf32>
    %65 = vector.extract_strided_slice %46 {offsets = [0, 0], sizes = [8, 8], strides = [1, 1]} : vector<8x32xf32> to vector<8x8xf32>
    %cst_31 = arith.constant dense<0.000000e+00> : vector<8x8xf32>
    %66 = tpu.matmul %64, %65, %cst_31 {dimension_numbers = #tpu.dot_dimension_numbers<[1], [0], [0], [1], [0, 0, 1, 1], [], []>} : vector<8x8xf32>, vector<8x8xf32>, vector<8x8xf32> -> vector<8x8xf32>
    %67 = vector.extract_strided_slice %47 {offsets = [0, 0], sizes = [8, 32], strides = [1, 1]} : vector<32x32xf32> to vector<8x32xf32>
    %cst_32 = arith.constant dense<0.000000e+00> : vector<8x32xf32>
    %68 = tpu.matmul %66, %67, %cst_32 {dimension_numbers = #tpu.dot_dimension_numbers<[1], [0], [0], [1], [0, 0, 1, 1], [], []>} : vector<8x8xf32>, vector<8x32xf32>, vector<8x32xf32> -> vector<8x32xf32>
    %69 = vector.extract_strided_slice %44 {offsets = [0, 8], sizes = [8, 8], strides = [1, 1]} : vector<8x32xf32> to vector<8x8xf32>
    %cst_33 = arith.constant 0.353553385 : f32
    %70 = vector.broadcast %cst_33 : f32 to vector<8x8xf32>
    %71 = arith.mulf %69, %70 : vector<8x8xf32>
    %72 = vector.extract_strided_slice %45 {offsets = [0, 8], sizes = [8, 8], strides = [1, 1]} : vector<8x32xf32> to vector<8x8xf32>
    %cst_34 = arith.constant dense<0.000000e+00> : vector<8x8xf32>
    %73 = tpu.matmul %71, %72, %cst_34 {dimension_numbers = #tpu.dot_dimension_numbers<[1], [1], [0], [0], [0, 0, 1, 0], [], []>} : vector<8x8xf32>, vector<8x8xf32>, vector<8x8xf32> -> vector<8x8xf32>
    %74 = vector.broadcast %12 : vector<1x8xf32> to vector<8x8xf32>
    %75 = arith.addf %73, %74 : vector<8x8xf32>
    %cst_35 = arith.constant dense<0xFF800000> : vector<8xf32>
    %76 = vector.multi_reduction <maximumf>, %75, %cst_35 [1] : vector<8x8xf32> to vector<8xf32>
    %77 = vector.shape_cast %76 : vector<8xf32> to vector<8x1xf32>
    %78 = vector.broadcast %77 : vector<8x1xf32> to vector<8x8xf32>
    %79 = arith.subf %75, %78 : vector<8x8xf32>
    %80 = math.exp %79 : vector<8x8xf32>
    %cst_36 = arith.constant dense<0.000000e+00> : vector<8xf32>
    %81 = vector.multi_reduction <add>, %80, %cst_36 [1] : vector<8x8xf32> to vector<8xf32>
    %82 = vector.shape_cast %81 : vector<8xf32> to vector<8x1xf32>
    %83 = tpu.reciprocal %82 {approx = true} : vector<8x1xf32> -> vector<8x1xf32>
    %84 = vector.broadcast %83 : vector<8x1xf32> to vector<8x8xf32>
    %85 = arith.mulf %80, %84 : vector<8x8xf32>
    %86 = vector.extract_strided_slice %46 {offsets = [0, 8], sizes = [8, 8], strides = [1, 1]} : vector<8x32xf32> to vector<8x8xf32>
    %cst_37 = arith.constant dense<0.000000e+00> : vector<8x8xf32>
    %87 = tpu.matmul %85, %86, %cst_37 {dimension_numbers = #tpu.dot_dimension_numbers<[1], [0], [0], [1], [0, 0, 1, 1], [], []>} : vector<8x8xf32>, vector<8x8xf32>, vector<8x8xf32> -> vector<8x8xf32>
    %88 = vector.extract_strided_slice %47 {offsets = [8, 0], sizes = [8, 32], strides = [1, 1]} : vector<32x32xf32> to vector<8x32xf32>
    %cst_38 = arith.constant dense<0.000000e+00> : vector<8x32xf32>
    %89 = tpu.matmul %87, %88, %cst_38 {dimension_numbers = #tpu.dot_dimension_numbers<[1], [0], [0], [1], [0, 0, 1, 1], [], []>} : vector<8x8xf32>, vector<8x32xf32>, vector<8x32xf32> -> vector<8x32xf32>
    %90 = arith.addf %68, %89 : vector<8x32xf32>
    %91 = vector.extract_strided_slice %44 {offsets = [0, 16], sizes = [8, 8], strides = [1, 1]} : vector<8x32xf32> to vector<8x8xf32>
    %cst_39 = arith.constant 0.353553385 : f32
    %92 = vector.broadcast %cst_39 : f32 to vector<8x8xf32>
    %93 = arith.mulf %91, %92 : vector<8x8xf32>
    %94 = vector.extract_strided_slice %45 {offsets = [0, 16], sizes = [8, 8], strides = [1, 1]} : vector<8x32xf32> to vector<8x8xf32>
    %cst_40 = arith.constant dense<0.000000e+00> : vector<8x8xf32>
    %95 = tpu.matmul %93, %94, %cst_40 {dimension_numbers = #tpu.dot_dimension_numbers<[1], [1], [0], [0], [0, 0, 1, 0], [], []>} : vector<8x8xf32>, vector<8x8xf32>, vector<8x8xf32> -> vector<8x8xf32>
    %96 = vector.broadcast %12 : vector<1x8xf32> to vector<8x8xf32>
    %97 = arith.addf %95, %96 : vector<8x8xf32>
    %cst_41 = arith.constant dense<0xFF800000> : vector<8xf32>
    %98 = vector.multi_reduction <maximumf>, %97, %cst_41 [1] : vector<8x8xf32> to vector<8xf32>
    %99 = vector.shape_cast %98 : vector<8xf32> to vector<8x1xf32>
    %100 = vector.broadcast %99 : vector<8x1xf32> to vector<8x8xf32>
    %101 = arith.subf %97, %100 : vector<8x8xf32>
    %102 = math.exp %101 : vector<8x8xf32>
    %cst_42 = arith.constant dense<0.000000e+00> : vector<8xf32>
    %103 = vector.multi_reduction <add>, %102, %cst_42 [1] : vector<8x8xf32> to vector<8xf32>
    %104 = vector.shape_cast %103 : vector<8xf32> to vector<8x1xf32>
    %105 = tpu.reciprocal %104 {approx = true} : vector<8x1xf32> -> vector<8x1xf32>
    %106 = vector.broadcast %105 : vector<8x1xf32> to vector<8x8xf32>
    %107 = arith.mulf %102, %106 : vector<8x8xf32>
    %108 = vector.extract_strided_slice %46 {offsets = [0, 16], sizes = [8, 8], strides = [1, 1]} : vector<8x32xf32> to vector<8x8xf32>
    %cst_43 = arith.constant dense<0.000000e+00> : vector<8x8xf32>
    %109 = tpu.matmul %107, %108, %cst_43 {dimension_numbers = #tpu.dot_dimension_numbers<[1], [0], [0], [1], [0, 0, 1, 1], [], []>} : vector<8x8xf32>, vector<8x8xf32>, vector<8x8xf32> -> vector<8x8xf32>
    %110 = vector.extract_strided_slice %47 {offsets = [16, 0], sizes = [8, 32], strides = [1, 1]} : vector<32x32xf32> to vector<8x32xf32>
    %cst_44 = arith.constant dense<0.000000e+00> : vector<8x32xf32>
    %111 = tpu.matmul %109, %110, %cst_44 {dimension_numbers = #tpu.dot_dimension_numbers<[1], [0], [0], [1], [0, 0, 1, 1], [], []>} : vector<8x8xf32>, vector<8x32xf32>, vector<8x32xf32> -> vector<8x32xf32>
    %112 = arith.addf %90, %111 : vector<8x32xf32>
    %113 = vector.extract_strided_slice %44 {offsets = [0, 24], sizes = [8, 8], strides = [1, 1]} : vector<8x32xf32> to vector<8x8xf32>
    %cst_45 = arith.constant 0.353553385 : f32
    %114 = vector.broadcast %cst_45 : f32 to vector<8x8xf32>
    %115 = arith.mulf %113, %114 : vector<8x8xf32>
    %116 = vector.extract_strided_slice %45 {offsets = [0, 24], sizes = [8, 8], strides = [1, 1]} : vector<8x32xf32> to vector<8x8xf32>
    %cst_46 = arith.constant dense<0.000000e+00> : vector<8x8xf32>
    %117 = tpu.matmul %115, %116, %cst_46 {dimension_numbers = #tpu.dot_dimension_numbers<[1], [1], [0], [0], [0, 0, 1, 0], [], []>} : vector<8x8xf32>, vector<8x8xf32>, vector<8x8xf32> -> vector<8x8xf32>
    %118 = vector.broadcast %12 : vector<1x8xf32> to vector<8x8xf32>
    %119 = arith.addf %117, %118 : vector<8x8xf32>
    %cst_47 = arith.constant dense<0xFF800000> : vector<8xf32>
    %120 = vector.multi_reduction <maximumf>, %119, %cst_47 [1] : vector<8x8xf32> to vector<8xf32>
    %121 = vector.shape_cast %120 : vector<8xf32> to vector<8x1xf32>
    %122 = vector.broadcast %121 : vector<8x1xf32> to vector<8x8xf32>
    %123 = arith.subf %119, %122 : vector<8x8xf32>
    %124 = math.exp %123 : vector<8x8xf32>
    %cst_48 = arith.constant dense<0.000000e+00> : vector<8xf32>
    %125 = vector.multi_reduction <add>, %124, %cst_48 [1] : vector<8x8xf32> to vector<8xf32>
    %126 = vector.shape_cast %125 : vector<8xf32> to vector<8x1xf32>
    %127 = tpu.reciprocal %126 {approx = true} : vector<8x1xf32> -> vector<8x1xf32>
    %128 = vector.broadcast %127 : vector<8x1xf32> to vector<8x8xf32>
    %129 = arith.mulf %124, %128 : vector<8x8xf32>
    %130 = vector.extract_strided_slice %46 {offsets = [0, 24], sizes = [8, 8], strides = [1, 1]} : vector<8x32xf32> to vector<8x8xf32>
    %cst_49 = arith.constant dense<0.000000e+00> : vector<8x8xf32>
    %131 = tpu.matmul %129, %130, %cst_49 {dimension_numbers = #tpu.dot_dimension_numbers<[1], [0], [0], [1], [0, 0, 1, 1], [], []>} : vector<8x8xf32>, vector<8x8xf32>, vector<8x8xf32> -> vector<8x8xf32>
    %132 = vector.extract_strided_slice %47 {offsets = [24, 0], sizes = [8, 32], strides = [1, 1]} : vector<32x32xf32> to vector<8x32xf32>
    %cst_50 = arith.constant dense<0.000000e+00> : vector<8x32xf32>
    %133 = tpu.matmul %131, %132, %cst_50 {dimension_numbers = #tpu.dot_dimension_numbers<[1], [0], [0], [1], [0, 0, 1, 1], [], []>} : vector<8x8xf32>, vector<8x32xf32>, vector<8x32xf32> -> vector<8x32xf32>
    %134 = arith.addf %112, %133 : vector<8x32xf32>
    %135 = arith.addf %5, %134 : vector<8x32xf32>
    %c0_51 = arith.constant 0 : index
    %c0_52 = arith.constant 0 : index
    %136 = vector.load %arg9[%c0_51, %c0_52] : memref<1x32xf32, #tpu.memory_space<vmem>>, vector<1x32xf32>
    %137 = vector.broadcast %136 : vector<1x32xf32> to vector<8x32xf32>
    %138 = arith.addf %135, %137 : vector<8x32xf32>
    %c0_53 = arith.constant 0 : index
    %c0_54 = arith.constant 0 : index
    %139 = vector.load %arg10[%c0_53, %c0_54] : memref<1x32xf32, #tpu.memory_space<vmem>>, vector<1x32xf32>
    %c0_55 = arith.constant 0 : index
    %c0_56 = arith.constant 0 : index
    %140 = vector.load %arg11[%c0_55, %c0_56] : memref<1x32xf32, #tpu.memory_space<vmem>>, vector<1x32xf32>
    %cst_57 = arith.constant dense<0.000000e+00> : vector<8xf32>
    %141 = vector.multi_reduction <add>, %138, %cst_57 [1] : vector<8x32xf32> to vector<8xf32>
    %142 = vector.shape_cast %141 : vector<8xf32> to vector<8x1xf32>
    %cst_58 = arith.constant 3.200000e+01 : f32
    %143 = vector.broadcast %cst_58 : f32 to vector<8x1xf32>
    %144 = arith.divf %142, %143 : vector<8x1xf32>
    %145 = arith.mulf %138, %138 : vector<8x32xf32>
    %cst_59 = arith.constant dense<0.000000e+00> : vector<8xf32>
    %146 = vector.multi_reduction <add>, %145, %cst_59 [1] : vector<8x32xf32> to vector<8xf32>
    %147 = vector.shape_cast %146 : vector<8xf32> to vector<8x1xf32>
    %cst_60 = arith.constant 3.200000e+01 : f32
    %148 = vector.broadcast %cst_60 : f32 to vector<8x1xf32>
    %149 = arith.divf %147, %148 : vector<8x1xf32>
    %150 = arith.mulf %144, %144 : vector<8x1xf32>
    %151 = arith.subf %149, %150 : vector<8x1xf32>
    %cst_61 = arith.constant 0.000000e+00 : f32
    %152 = vector.broadcast %cst_61 : f32 to vector<8x1xf32>
    %153 = arith.maximumf %151, %152 : vector<8x1xf32>
    %154 = vector.broadcast %144 : vector<8x1xf32> to vector<8x32xf32>
    %155 = arith.subf %138, %154 : vector<8x32xf32>
    %cst_62 = arith.constant 9.99999997E-7 : f32
    %156 = vector.broadcast %cst_62 : f32 to vector<8x1xf32>
    %157 = arith.addf %153, %156 : vector<8x1xf32>
    %158 = math.rsqrt %157 : vector<8x1xf32>
    %159 = vector.broadcast %158 : vector<8x1xf32> to vector<8x32xf32>
    %160 = arith.mulf %155, %159 : vector<8x32xf32>
    %161 = vector.broadcast %139 : vector<1x32xf32> to vector<8x32xf32>
    %162 = arith.mulf %160, %161 : vector<8x32xf32>
    %163 = vector.broadcast %140 : vector<1x32xf32> to vector<8x32xf32>
    %164 = arith.addf %162, %163 : vector<8x32xf32>
    %c0_63 = arith.constant 0 : index
    %c0_64 = arith.constant 0 : index
    %165 = vector.load %arg12[%c0_63, %c0_64] : memref<32x64xf32, #tpu.memory_space<vmem>>, vector<32x64xf32>
    %cst_65 = arith.constant dense<0.000000e+00> : vector<8x64xf32>
    %166 = tpu.matmul %164, %165, %cst_65 {dimension_numbers = #tpu.dot_dimension_numbers<[1], [0], [0], [1], [0, 0, 1, 1], [], []>} : vector<8x32xf32>, vector<32x64xf32>, vector<8x64xf32> -> vector<8x64xf32>
    %c0_66 = arith.constant 0 : index
    %c0_67 = arith.constant 0 : index
    %167 = vector.load %arg13[%c0_66, %c0_67] : memref<1x64xf32, #tpu.memory_space<vmem>>, vector<1x64xf32>
    %168 = vector.broadcast %167 : vector<1x64xf32> to vector<8x64xf32>
    %169 = arith.addf %166, %168 : vector<8x64xf32>
    %cst_68 = arith.constant 0.000000e+00 : f32
    %170 = vector.broadcast %cst_68 : f32 to vector<8x64xf32>
    %171 = arith.maximumf %169, %170 : vector<8x64xf32>
    %c0_69 = arith.constant 0 : index
    %c0_70 = arith.constant 0 : index
    %172 = vector.load %arg14[%c0_69, %c0_70] : memref<64x32xf32, #tpu.memory_space<vmem>>, vector<64x32xf32>
    %cst_71 = arith.constant dense<0.000000e+00> : vector<8x32xf32>
    %173 = tpu.matmul %171, %172, %cst_71 {dimension_numbers = #tpu.dot_dimension_numbers<[1], [0], [0], [1], [0, 0, 1, 1], [], []>} : vector<8x64xf32>, vector<64x32xf32>, vector<8x32xf32> -> vector<8x32xf32>
    %174 = arith.addf %138, %173 : vector<8x32xf32>
    %c0_72 = arith.constant 0 : index
    %c0_73 = arith.constant 0 : index
    %175 = vector.load %arg15[%c0_72, %c0_73] : memref<1x32xf32, #tpu.memory_space<vmem>>, vector<1x32xf32>
    %176 = vector.broadcast %175 : vector<1x32xf32> to vector<8x32xf32>
    %177 = arith.addf %174, %176 : vector<8x32xf32>
    %c0_74 = arith.constant 0 : index
    %c0_75 = arith.constant 0 : index
    %178 = vector.load %arg16[%c0_74, %c0_75] : memref<1x32xf32, #tpu.memory_space<vmem>>, vector<1x32xf32>
    %c0_76 = arith.constant 0 : index
    %c0_77 = arith.constant 0 : index
    %179 = vector.load %arg17[%c0_76, %c0_77] : memref<1x32xf32, #tpu.memory_space<vmem>>, vector<1x32xf32>
    %cst_78 = arith.constant dense<0.000000e+00> : vector<8xf32>
    %180 = vector.multi_reduction <add>, %177, %cst_78 [1] : vector<8x32xf32> to vector<8xf32>
    %181 = vector.shape_cast %180 : vector<8xf32> to vector<8x1xf32>
    %cst_79 = arith.constant 3.200000e+01 : f32
    %182 = vector.broadcast %cst_79 : f32 to vector<8x1xf32>
    %183 = arith.divf %181, %182 : vector<8x1xf32>
    %184 = arith.mulf %177, %177 : vector<8x32xf32>
    %cst_80 = arith.constant dense<0.000000e+00> : vector<8xf32>
    %185 = vector.multi_reduction <add>, %184, %cst_80 [1] : vector<8x32xf32> to vector<8xf32>
    %186 = vector.shape_cast %185 : vector<8xf32> to vector<8x1xf32>
    %cst_81 = arith.constant 3.200000e+01 : f32
    %187 = vector.broadcast %cst_81 : f32 to vector<8x1xf32>
    %188 = arith.divf %186, %187 : vector<8x1xf32>
    %189 = arith.mulf %183, %183 : vector<8x1xf32>
    %190 = arith.subf %188, %189 : vector<8x1xf32>
    %cst_82 = arith.constant 0.000000e+00 : f32
    %191 = vector.broadcast %cst_82 : f32 to vector<8x1xf32>
    %192 = arith.maximumf %190, %191 : vector<8x1xf32>
    %193 = vector.broadcast %183 : vector<8x1xf32> to vector<8x32xf32>
    %194 = arith.subf %177, %193 : vector<8x32xf32>
    %cst_83 = arith.constant 9.99999997E-7 : f32
    %195 = vector.broadcast %cst_83 : f32 to vector<8x1xf32>
    %196 = arith.addf %192, %195 : vector<8x1xf32>
    %197 = math.rsqrt %196 : vector<8x1xf32>
    %198 = vector.broadcast %197 : vector<8x1xf32> to vector<8x32xf32>
    %199 = arith.mulf %194, %198 : vector<8x32xf32>
    %200 = vector.broadcast %178 : vector<1x32xf32> to vector<8x32xf32>
    %201 = arith.mulf %199, %200 : vector<8x32xf32>
    %202 = vector.broadcast %179 : vector<1x32xf32> to vector<8x32xf32>
    %203 = arith.addf %201, %202 : vector<8x32xf32>
    %c0_84 = arith.constant 0 : index
    %c0_85 = arith.constant 0 : index
    %204 = vector.load %arg18[%c0_84, %c0_85] : memref<32x96xf32, #tpu.memory_space<vmem>>, vector<32x96xf32>
    %cst_86 = arith.constant dense<0.000000e+00> : vector<8x96xf32>
    %205 = tpu.matmul %203, %204, %cst_86 {dimension_numbers = #tpu.dot_dimension_numbers<[1], [0], [0], [1], [0, 0, 1, 1], [], []>} : vector<8x32xf32>, vector<32x96xf32>, vector<8x96xf32> -> vector<8x96xf32>
    %c0_87 = arith.constant 0 : index
    %c0_88 = arith.constant 0 : index
    %206 = vector.load %arg19[%c0_87, %c0_88] : memref<1x96xf32, #tpu.memory_space<vmem>>, vector<1x96xf32>
    %207 = vector.broadcast %206 : vector<1x96xf32> to vector<8x96xf32>
    %208 = arith.addf %205, %207 : vector<8x96xf32>
    %209 = vector.extract_strided_slice %208 {offsets = [0, 0], sizes = [8, 32], strides = [1, 1]} : vector<8x96xf32> to vector<8x32xf32>
    %210 = vector.extract_strided_slice %208 {offsets = [0, 32], sizes = [8, 32], strides = [1, 1]} : vector<8x96xf32> to vector<8x32xf32>
    %211 = vector.extract_strided_slice %208 {offsets = [0, 64], sizes = [8, 32], strides = [1, 1]} : vector<8x96xf32> to vector<8x32xf32>
    %c0_89 = arith.constant 0 : index
    %c0_90 = arith.constant 0 : index
    %212 = vector.load %arg20[%c0_89, %c0_90] : memref<32x32xf32, #tpu.memory_space<vmem>>, vector<32x32xf32>
    %213 = vector.extract_strided_slice %209 {offsets = [0, 0], sizes = [8, 8], strides = [1, 1]} : vector<8x32xf32> to vector<8x8xf32>
    %cst_91 = arith.constant 0.353553385 : f32
    %214 = vector.broadcast %cst_91 : f32 to vector<8x8xf32>
    %215 = arith.mulf %213, %214 : vector<8x8xf32>
    %216 = vector.extract_strided_slice %210 {offsets = [0, 0], sizes = [8, 8], strides = [1, 1]} : vector<8x32xf32> to vector<8x8xf32>
    %cst_92 = arith.constant dense<0.000000e+00> : vector<8x8xf32>
    %217 = tpu.matmul %215, %216, %cst_92 {dimension_numbers = #tpu.dot_dimension_numbers<[1], [1], [0], [0], [0, 0, 1, 0], [], []>} : vector<8x8xf32>, vector<8x8xf32>, vector<8x8xf32> -> vector<8x8xf32>
    %218 = vector.broadcast %12 : vector<1x8xf32> to vector<8x8xf32>
    %219 = arith.addf %217, %218 : vector<8x8xf32>
    %cst_93 = arith.constant dense<0xFF800000> : vector<8xf32>
    %220 = vector.multi_reduction <maximumf>, %219, %cst_93 [1] : vector<8x8xf32> to vector<8xf32>
    %221 = vector.shape_cast %220 : vector<8xf32> to vector<8x1xf32>
    %222 = vector.broadcast %221 : vector<8x1xf32> to vector<8x8xf32>
    %223 = arith.subf %219, %222 : vector<8x8xf32>
    %224 = math.exp %223 : vector<8x8xf32>
    %cst_94 = arith.constant dense<0.000000e+00> : vector<8xf32>
    %225 = vector.multi_reduction <add>, %224, %cst_94 [1] : vector<8x8xf32> to vector<8xf32>
    %226 = vector.shape_cast %225 : vector<8xf32> to vector<8x1xf32>
    %227 = tpu.reciprocal %226 {approx = true} : vector<8x1xf32> -> vector<8x1xf32>
    %228 = vector.broadcast %227 : vector<8x1xf32> to vector<8x8xf32>
    %229 = arith.mulf %224, %228 : vector<8x8xf32>
    %230 = vector.extract_strided_slice %211 {offsets = [0, 0], sizes = [8, 8], strides = [1, 1]} : vector<8x32xf32> to vector<8x8xf32>
    %cst_95 = arith.constant dense<0.000000e+00> : vector<8x8xf32>
    %231 = tpu.matmul %229, %230, %cst_95 {dimension_numbers = #tpu.dot_dimension_numbers<[1], [0], [0], [1], [0, 0, 1, 1], [], []>} : vector<8x8xf32>, vector<8x8xf32>, vector<8x8xf32> -> vector<8x8xf32>
    %232 = vector.extract_strided_slice %212 {offsets = [0, 0], sizes = [8, 32], strides = [1, 1]} : vector<32x32xf32> to vector<8x32xf32>
    %cst_96 = arith.constant dense<0.000000e+00> : vector<8x32xf32>
    %233 = tpu.matmul %231, %232, %cst_96 {dimension_numbers = #tpu.dot_dimension_numbers<[1], [0], [0], [1], [0, 0, 1, 1], [], []>} : vector<8x8xf32>, vector<8x32xf32>, vector<8x32xf32> -> vector<8x32xf32>
    %234 = vector.extract_strided_slice %209 {offsets = [0, 8], sizes = [8, 8], strides = [1, 1]} : vector<8x32xf32> to vector<8x8xf32>
    %cst_97 = arith.constant 0.353553385 : f32
    %235 = vector.broadcast %cst_97 : f32 to vector<8x8xf32>
    %236 = arith.mulf %234, %235 : vector<8x8xf32>
    %237 = vector.extract_strided_slice %210 {offsets = [0, 8], sizes = [8, 8], strides = [1, 1]} : vector<8x32xf32> to vector<8x8xf32>
    %cst_98 = arith.constant dense<0.000000e+00> : vector<8x8xf32>
    %238 = tpu.matmul %236, %237, %cst_98 {dimension_numbers = #tpu.dot_dimension_numbers<[1], [1], [0], [0], [0, 0, 1, 0], [], []>} : vector<8x8xf32>, vector<8x8xf32>, vector<8x8xf32> -> vector<8x8xf32>
    %239 = vector.broadcast %12 : vector<1x8xf32> to vector<8x8xf32>
    %240 = arith.addf %238, %239 : vector<8x8xf32>
    %cst_99 = arith.constant dense<0xFF800000> : vector<8xf32>
    %241 = vector.multi_reduction <maximumf>, %240, %cst_99 [1] : vector<8x8xf32> to vector<8xf32>
    %242 = vector.shape_cast %241 : vector<8xf32> to vector<8x1xf32>
    %243 = vector.broadcast %242 : vector<8x1xf32> to vector<8x8xf32>
    %244 = arith.subf %240, %243 : vector<8x8xf32>
    %245 = math.exp %244 : vector<8x8xf32>
    %cst_100 = arith.constant dense<0.000000e+00> : vector<8xf32>
    %246 = vector.multi_reduction <add>, %245, %cst_100 [1] : vector<8x8xf32> to vector<8xf32>
    %247 = vector.shape_cast %246 : vector<8xf32> to vector<8x1xf32>
    %248 = tpu.reciprocal %247 {approx = true} : vector<8x1xf32> -> vector<8x1xf32>
    %249 = vector.broadcast %248 : vector<8x1xf32> to vector<8x8xf32>
    %250 = arith.mulf %245, %249 : vector<8x8xf32>
    %251 = vector.extract_strided_slice %211 {offsets = [0, 8], sizes = [8, 8], strides = [1, 1]} : vector<8x32xf32> to vector<8x8xf32>
    %cst_101 = arith.constant dense<0.000000e+00> : vector<8x8xf32>
    %252 = tpu.matmul %250, %251, %cst_101 {dimension_numbers = #tpu.dot_dimension_numbers<[1], [0], [0], [1], [0, 0, 1, 1], [], []>} : vector<8x8xf32>, vector<8x8xf32>, vector<8x8xf32> -> vector<8x8xf32>
    %253 = vector.extract_strided_slice %212 {offsets = [8, 0], sizes = [8, 32], strides = [1, 1]} : vector<32x32xf32> to vector<8x32xf32>
    %cst_102 = arith.constant dense<0.000000e+00> : vector<8x32xf32>
    %254 = tpu.matmul %252, %253, %cst_102 {dimension_numbers = #tpu.dot_dimension_numbers<[1], [0], [0], [1], [0, 0, 1, 1], [], []>} : vector<8x8xf32>, vector<8x32xf32>, vector<8x32xf32> -> vector<8x32xf32>
    %255 = arith.addf %233, %254 : vector<8x32xf32>
    %256 = vector.extract_strided_slice %209 {offsets = [0, 16], sizes = [8, 8], strides = [1, 1]} : vector<8x32xf32> to vector<8x8xf32>
    %cst_103 = arith.constant 0.353553385 : f32
    %257 = vector.broadcast %cst_103 : f32 to vector<8x8xf32>
    %258 = arith.mulf %256, %257 : vector<8x8xf32>
    %259 = vector.extract_strided_slice %210 {offsets = [0, 16], sizes = [8, 8], strides = [1, 1]} : vector<8x32xf32> to vector<8x8xf32>
    %cst_104 = arith.constant dense<0.000000e+00> : vector<8x8xf32>
    %260 = tpu.matmul %258, %259, %cst_104 {dimension_numbers = #tpu.dot_dimension_numbers<[1], [1], [0], [0], [0, 0, 1, 0], [], []>} : vector<8x8xf32>, vector<8x8xf32>, vector<8x8xf32> -> vector<8x8xf32>
    %261 = vector.broadcast %12 : vector<1x8xf32> to vector<8x8xf32>
    %262 = arith.addf %260, %261 : vector<8x8xf32>
    %cst_105 = arith.constant dense<0xFF800000> : vector<8xf32>
    %263 = vector.multi_reduction <maximumf>, %262, %cst_105 [1] : vector<8x8xf32> to vector<8xf32>
    %264 = vector.shape_cast %263 : vector<8xf32> to vector<8x1xf32>
    %265 = vector.broadcast %264 : vector<8x1xf32> to vector<8x8xf32>
    %266 = arith.subf %262, %265 : vector<8x8xf32>
    %267 = math.exp %266 : vector<8x8xf32>
    %cst_106 = arith.constant dense<0.000000e+00> : vector<8xf32>
    %268 = vector.multi_reduction <add>, %267, %cst_106 [1] : vector<8x8xf32> to vector<8xf32>
    %269 = vector.shape_cast %268 : vector<8xf32> to vector<8x1xf32>
    %270 = tpu.reciprocal %269 {approx = true} : vector<8x1xf32> -> vector<8x1xf32>
    %271 = vector.broadcast %270 : vector<8x1xf32> to vector<8x8xf32>
    %272 = arith.mulf %267, %271 : vector<8x8xf32>
    %273 = vector.extract_strided_slice %211 {offsets = [0, 16], sizes = [8, 8], strides = [1, 1]} : vector<8x32xf32> to vector<8x8xf32>
    %cst_107 = arith.constant dense<0.000000e+00> : vector<8x8xf32>
    %274 = tpu.matmul %272, %273, %cst_107 {dimension_numbers = #tpu.dot_dimension_numbers<[1], [0], [0], [1], [0, 0, 1, 1], [], []>} : vector<8x8xf32>, vector<8x8xf32>, vector<8x8xf32> -> vector<8x8xf32>
    %275 = vector.extract_strided_slice %212 {offsets = [16, 0], sizes = [8, 32], strides = [1, 1]} : vector<32x32xf32> to vector<8x32xf32>
    %cst_108 = arith.constant dense<0.000000e+00> : vector<8x32xf32>
    %276 = tpu.matmul %274, %275, %cst_108 {dimension_numbers = #tpu.dot_dimension_numbers<[1], [0], [0], [1], [0, 0, 1, 1], [], []>} : vector<8x8xf32>, vector<8x32xf32>, vector<8x32xf32> -> vector<8x32xf32>
    %277 = arith.addf %255, %276 : vector<8x32xf32>
    %278 = vector.extract_strided_slice %209 {offsets = [0, 24], sizes = [8, 8], strides = [1, 1]} : vector<8x32xf32> to vector<8x8xf32>
    %cst_109 = arith.constant 0.353553385 : f32
    %279 = vector.broadcast %cst_109 : f32 to vector<8x8xf32>
    %280 = arith.mulf %278, %279 : vector<8x8xf32>
    %281 = vector.extract_strided_slice %210 {offsets = [0, 24], sizes = [8, 8], strides = [1, 1]} : vector<8x32xf32> to vector<8x8xf32>
    %cst_110 = arith.constant dense<0.000000e+00> : vector<8x8xf32>
    %282 = tpu.matmul %280, %281, %cst_110 {dimension_numbers = #tpu.dot_dimension_numbers<[1], [1], [0], [0], [0, 0, 1, 0], [], []>} : vector<8x8xf32>, vector<8x8xf32>, vector<8x8xf32> -> vector<8x8xf32>
    %283 = vector.broadcast %12 : vector<1x8xf32> to vector<8x8xf32>
    %284 = arith.addf %282, %283 : vector<8x8xf32>
    %cst_111 = arith.constant dense<0xFF800000> : vector<8xf32>
    %285 = vector.multi_reduction <maximumf>, %284, %cst_111 [1] : vector<8x8xf32> to vector<8xf32>
    %286 = vector.shape_cast %285 : vector<8xf32> to vector<8x1xf32>
    %287 = vector.broadcast %286 : vector<8x1xf32> to vector<8x8xf32>
    %288 = arith.subf %284, %287 : vector<8x8xf32>
    %289 = math.exp %288 : vector<8x8xf32>
    %cst_112 = arith.constant dense<0.000000e+00> : vector<8xf32>
    %290 = vector.multi_reduction <add>, %289, %cst_112 [1] : vector<8x8xf32> to vector<8xf32>
    %291 = vector.shape_cast %290 : vector<8xf32> to vector<8x1xf32>
    %292 = tpu.reciprocal %291 {approx = true} : vector<8x1xf32> -> vector<8x1xf32>
    %293 = vector.broadcast %292 : vector<8x1xf32> to vector<8x8xf32>
    %294 = arith.mulf %289, %293 : vector<8x8xf32>
    %295 = vector.extract_strided_slice %211 {offsets = [0, 24], sizes = [8, 8], strides = [1, 1]} : vector<8x32xf32> to vector<8x8xf32>
    %cst_113 = arith.constant dense<0.000000e+00> : vector<8x8xf32>
    %296 = tpu.matmul %294, %295, %cst_113 {dimension_numbers = #tpu.dot_dimension_numbers<[1], [0], [0], [1], [0, 0, 1, 1], [], []>} : vector<8x8xf32>, vector<8x8xf32>, vector<8x8xf32> -> vector<8x8xf32>
    %297 = vector.extract_strided_slice %212 {offsets = [24, 0], sizes = [8, 32], strides = [1, 1]} : vector<32x32xf32> to vector<8x32xf32>
    %cst_114 = arith.constant dense<0.000000e+00> : vector<8x32xf32>
    %298 = tpu.matmul %296, %297, %cst_114 {dimension_numbers = #tpu.dot_dimension_numbers<[1], [0], [0], [1], [0, 0, 1, 1], [], []>} : vector<8x8xf32>, vector<8x32xf32>, vector<8x32xf32> -> vector<8x32xf32>
    %299 = arith.addf %277, %298 : vector<8x32xf32>
    %300 = arith.addf %177, %299 : vector<8x32xf32>
    %c0_115 = arith.constant 0 : index
    %c0_116 = arith.constant 0 : index
    %301 = vector.load %arg21[%c0_115, %c0_116] : memref<1x32xf32, #tpu.memory_space<vmem>>, vector<1x32xf32>
    %302 = vector.broadcast %301 : vector<1x32xf32> to vector<8x32xf32>
    %303 = arith.addf %300, %302 : vector<8x32xf32>
    %c0_117 = arith.constant 0 : index
    %c0_118 = arith.constant 0 : index
    %304 = vector.load %arg22[%c0_117, %c0_118] : memref<1x32xf32, #tpu.memory_space<vmem>>, vector<1x32xf32>
    %c0_119 = arith.constant 0 : index
    %c0_120 = arith.constant 0 : index
    %305 = vector.load %arg23[%c0_119, %c0_120] : memref<1x32xf32, #tpu.memory_space<vmem>>, vector<1x32xf32>
    %cst_121 = arith.constant dense<0.000000e+00> : vector<8xf32>
    %306 = vector.multi_reduction <add>, %303, %cst_121 [1] : vector<8x32xf32> to vector<8xf32>
    %307 = vector.shape_cast %306 : vector<8xf32> to vector<8x1xf32>
    %cst_122 = arith.constant 3.200000e+01 : f32
    %308 = vector.broadcast %cst_122 : f32 to vector<8x1xf32>
    %309 = arith.divf %307, %308 : vector<8x1xf32>
    %310 = arith.mulf %303, %303 : vector<8x32xf32>
    %cst_123 = arith.constant dense<0.000000e+00> : vector<8xf32>
    %311 = vector.multi_reduction <add>, %310, %cst_123 [1] : vector<8x32xf32> to vector<8xf32>
    %312 = vector.shape_cast %311 : vector<8xf32> to vector<8x1xf32>
    %cst_124 = arith.constant 3.200000e+01 : f32
    %313 = vector.broadcast %cst_124 : f32 to vector<8x1xf32>
    %314 = arith.divf %312, %313 : vector<8x1xf32>
    %315 = arith.mulf %309, %309 : vector<8x1xf32>
    %316 = arith.subf %314, %315 : vector<8x1xf32>
    %cst_125 = arith.constant 0.000000e+00 : f32
    %317 = vector.broadcast %cst_125 : f32 to vector<8x1xf32>
    %318 = arith.maximumf %316, %317 : vector<8x1xf32>
    %319 = vector.broadcast %309 : vector<8x1xf32> to vector<8x32xf32>
    %320 = arith.subf %303, %319 : vector<8x32xf32>
    %cst_126 = arith.constant 9.99999997E-7 : f32
    %321 = vector.broadcast %cst_126 : f32 to vector<8x1xf32>
    %322 = arith.addf %318, %321 : vector<8x1xf32>
    %323 = math.rsqrt %322 : vector<8x1xf32>
    %324 = vector.broadcast %323 : vector<8x1xf32> to vector<8x32xf32>
    %325 = arith.mulf %320, %324 : vector<8x32xf32>
    %326 = vector.broadcast %304 : vector<1x32xf32> to vector<8x32xf32>
    %327 = arith.mulf %325, %326 : vector<8x32xf32>
    %328 = vector.broadcast %305 : vector<1x32xf32> to vector<8x32xf32>
    %329 = arith.addf %327, %328 : vector<8x32xf32>
    %c0_127 = arith.constant 0 : index
    %c0_128 = arith.constant 0 : index
    %330 = vector.load %arg24[%c0_127, %c0_128] : memref<32x64xf32, #tpu.memory_space<vmem>>, vector<32x64xf32>
    %cst_129 = arith.constant dense<0.000000e+00> : vector<8x64xf32>
    %331 = tpu.matmul %329, %330, %cst_129 {dimension_numbers = #tpu.dot_dimension_numbers<[1], [0], [0], [1], [0, 0, 1, 1], [], []>} : vector<8x32xf32>, vector<32x64xf32>, vector<8x64xf32> -> vector<8x64xf32>
    %c0_130 = arith.constant 0 : index
    %c0_131 = arith.constant 0 : index
    %332 = vector.load %arg25[%c0_130, %c0_131] : memref<1x64xf32, #tpu.memory_space<vmem>>, vector<1x64xf32>
    %333 = vector.broadcast %332 : vector<1x64xf32> to vector<8x64xf32>
    %334 = arith.addf %331, %333 : vector<8x64xf32>
    %cst_132 = arith.constant 0.000000e+00 : f32
    %335 = vector.broadcast %cst_132 : f32 to vector<8x64xf32>
    %336 = arith.maximumf %334, %335 : vector<8x64xf32>
    %c0_133 = arith.constant 0 : index
    %c0_134 = arith.constant 0 : index
    %337 = vector.load %arg26[%c0_133, %c0_134] : memref<64x32xf32, #tpu.memory_space<vmem>>, vector<64x32xf32>
    %cst_135 = arith.constant dense<0.000000e+00> : vector<8x32xf32>
    %338 = tpu.matmul %336, %337, %cst_135 {dimension_numbers = #tpu.dot_dimension_numbers<[1], [0], [0], [1], [0, 0, 1, 1], [], []>} : vector<8x64xf32>, vector<64x32xf32>, vector<8x32xf32> -> vector<8x32xf32>
    %339 = arith.addf %303, %338 : vector<8x32xf32>
    %c0_136 = arith.constant 0 : index
    %c0_137 = arith.constant 0 : index
    %340 = vector.load %arg27[%c0_136, %c0_137] : memref<1x32xf32, #tpu.memory_space<vmem>>, vector<1x32xf32>
    %341 = vector.broadcast %340 : vector<1x32xf32> to vector<8x32xf32>
    %342 = arith.addf %339, %341 : vector<8x32xf32>
    %c0_138 = arith.constant 0 : index
    %c0_139 = arith.constant 0 : index
    %343 = vector.load %arg28[%c0_138, %c0_139] : memref<1x32xf32, #tpu.memory_space<vmem>>, vector<1x32xf32>
    %c0_140 = arith.constant 0 : index
    %c0_141 = arith.constant 0 : index
    %344 = vector.load %arg29[%c0_140, %c0_141] : memref<1x32xf32, #tpu.memory_space<vmem>>, vector<1x32xf32>
    %cst_142 = arith.constant dense<0.000000e+00> : vector<8xf32>
    %345 = vector.multi_reduction <add>, %342, %cst_142 [1] : vector<8x32xf32> to vector<8xf32>
    %346 = vector.shape_cast %345 : vector<8xf32> to vector<8x1xf32>
    %cst_143 = arith.constant 3.200000e+01 : f32
    %347 = vector.broadcast %cst_143 : f32 to vector<8x1xf32>
    %348 = arith.divf %346, %347 : vector<8x1xf32>
    %349 = arith.mulf %342, %342 : vector<8x32xf32>
    %cst_144 = arith.constant dense<0.000000e+00> : vector<8xf32>
    %350 = vector.multi_reduction <add>, %349, %cst_144 [1] : vector<8x32xf32> to vector<8xf32>
    %351 = vector.shape_cast %350 : vector<8xf32> to vector<8x1xf32>
    %cst_145 = arith.constant 3.200000e+01 : f32
    %352 = vector.broadcast %cst_145 : f32 to vector<8x1xf32>
    %353 = arith.divf %351, %352 : vector<8x1xf32>
    %354 = arith.mulf %348, %348 : vector<8x1xf32>
    %355 = arith.subf %353, %354 : vector<8x1xf32>
    %cst_146 = arith.constant 0.000000e+00 : f32
    %356 = vector.broadcast %cst_146 : f32 to vector<8x1xf32>
    %357 = arith.maximumf %355, %356 : vector<8x1xf32>
    %358 = vector.broadcast %348 : vector<8x1xf32> to vector<8x32xf32>
    %359 = arith.subf %342, %358 : vector<8x32xf32>
    %cst_147 = arith.constant 9.99999997E-7 : f32
    %360 = vector.broadcast %cst_147 : f32 to vector<8x1xf32>
    %361 = arith.addf %357, %360 : vector<8x1xf32>
    %362 = math.rsqrt %361 : vector<8x1xf32>
    %363 = vector.broadcast %362 : vector<8x1xf32> to vector<8x32xf32>
    %364 = arith.mulf %359, %363 : vector<8x32xf32>
    %365 = vector.broadcast %343 : vector<1x32xf32> to vector<8x32xf32>
    %366 = arith.mulf %364, %365 : vector<8x32xf32>
    %367 = vector.broadcast %344 : vector<1x32xf32> to vector<8x32xf32>
    %368 = arith.addf %366, %367 : vector<8x32xf32>
    %c0_148 = arith.constant 0 : index
    %c0_149 = arith.constant 0 : index
    %c0_150 = arith.constant 0 : index
    %369 = vector.load %arg30[%c0_148, %c0_149, %c0_150] : memref<1x8x32xf32, #tpu.memory_space<vmem>>, vector<1x8x32xf32>
    %370 = vector.shape_cast %369 : vector<1x8x32xf32> to vector<8x32xf32>
    %371 = vector.shape_cast %368 : vector<8x32xf32> to vector<1x8x32xf32>
    tpu.vector_store %arg30[%c0_148, %c0_149, %c0_150], %371 {strides = array<i32>} : memref<1x8x32xf32, #tpu.memory_space<vmem>>, vector<1x8x32xf32>,
    return
  }
  func.func @transform_0(%arg0: i32) -> (i32, i32, i32) {
    %c0_i32 = arith.constant 0 : i32
    %c0_i32_0 = arith.constant 0 : i32
    %c0_i32_1 = arith.constant 0 : i32
    return %arg0, %c0_i32, %c0_i32_0 : i32, i32, i32
  }
  func.func @transform_1(%arg0: i32) -> (i32, i32, i32) {
    %c0_i32 = arith.constant 0 : i32
    %c0_i32_0 = arith.constant 0 : i32
    %c0_i32_1 = arith.constant 0 : i32
    return %arg0, %c0_i32, %c0_i32_0 : i32, i32, i32
  }
  func.func @transform_2(%arg0: i32) -> (i32, i32) {
    %c0_i32 = arith.constant 0 : i32
    %c0_i32_0 = arith.constant 0 : i32
    %c0_i32_1 = arith.constant 0 : i32
    return %c0_i32, %c0_i32_0 : i32, i32
  }
  func.func @transform_3(%arg0: i32) -> (i32, i32) {
    %c0_i32 = arith.constant 0 : i32
    %c0_i32_0 = arith.constant 0 : i32
    %c0_i32_1 = arith.constant 0 : i32
    return %c0_i32, %c0_i32_0 : i32, i32
  }
  func.func @transform_4(%arg0: i32) -> (i32, i32) {
    %c0_i32 = arith.constant 0 : i32
    %c0_i32_0 = arith.constant 0 : i32
    %c0_i32_1 = arith.constant 0 : i32
    return %c0_i32, %c0_i32_0 : i32, i32
  }
  func.func @transform_5(%arg0: i32) -> (i32, i32) {
    %c0_i32 = arith.constant 0 : i32
    %c0_i32_0 = arith.constant 0 : i32
    %c0_i32_1 = arith.constant 0 : i32
    return %c0_i32, %c0_i32_0 : i32, i32
  }
  func.func @transform_6(%arg0: i32) -> (i32, i32) {
    %c0_i32 = arith.constant 0 : i32
    %c0_i32_0 = arith.constant 0 : i32
    %c0_i32_1 = arith.constant 0 : i32
    return %c0_i32, %c0_i32_0 : i32, i32
  }
  func.func @transform_7(%arg0: i32) -> (i32, i32) {
    %c0_i32 = arith.constant 0 : i32
    %c0_i32_0 = arith.constant 0 : i32
    %c0_i32_1 = arith.constant 0 : i32
    return %c0_i32, %c0_i32_0 : i32, i32
  }
  func.func @transform_8(%arg0: i32) -> (i32, i32) {
    %c0_i32 = arith.constant 0 : i32
    %c0_i32_0 = arith.constant 0 : i32
    %c0_i32_1 = arith.constant 0 : i32
    return %c0_i32, %c0_i32_0 : i32, i32
  }
  func.func @transform_9(%arg0: i32) -> (i32, i32) {
    %c0_i32 = arith.constant 0 : i32
    %c0_i32_0 = arith.constant 0 : i32
    %c0_i32_1 = arith.constant 0 : i32
    return %c0_i32, %c0_i32_0 : i32, i32
  }
  func.func @transform_10(%arg0: i32) -> (i32, i32) {
    %c0_i32 = arith.constant 0 : i32
    %c0_i32_0 = arith.constant 0 : i32
    %c0_i32_1 = arith.constant 0 : i32
    return %c0_i32, %c0_i32_0 : i32, i32
  }
  func.func @transform_11(%arg0: i32) -> (i32, i32) {
    %c0_i32 = arith.constant 0 : i32
    %c0_i32_0 = arith.constant 0 : i32
    %c0_i32_1 = arith.constant 0 : i32
    return %c0_i32, %c0_i32_0 : i32, i32
  }
  func.func @transform_12(%arg0: i32) -> (i32, i32) {
    %c0_i32 = arith.constant 0 : i32
    %c0_i32_0 = arith.constant 0 : i32
    %c0_i32_1 = arith.constant 0 : i32
    return %c0_i32, %c0_i32_0 : i32, i32
  }
  func.func @transform_13(%arg0: i32) -> (i32, i32) {
    %c0_i32 = arith.constant 0 : i32
    %c0_i32_0 = arith.constant 0 : i32
    %c0_i32_1 = arith.constant 0 : i32
    return %c0_i32, %c0_i32_0 : i32, i32
  }
  func.func @transform_14(%arg0: i32) -> (i32, i32) {
    %c0_i32 = arith.constant 0 : i32
    %c0_i32_0 = arith.constant 0 : i32
    %c0_i32_1 = arith.constant 0 : i32
    return %c0_i32, %c0_i32_0 : i32, i32
  }
  func.func @transform_15(%arg0: i32) -> (i32, i32) {
    %c0_i32 = arith.constant 0 : i32
    %c0_i32_0 = arith.constant 0 : i32
    %c0_i32_1 = arith.constant 0 : i32
    return %c0_i32, %c0_i32_0 : i32, i32
  }
  func.func @transform_16(%arg0: i32) -> (i32, i32) {
    %c0_i32 = arith.constant 0 : i32
    %c0_i32_0 = arith.constant 0 : i32
    %c0_i32_1 = arith.constant 0 : i32
    return %c0_i32, %c0_i32_0 : i32, i32
  }
  func.func @transform_17(%arg0: i32) -> (i32, i32) {
    %c0_i32 = arith.constant 0 : i32
    %c0_i32_0 = arith.constant 0 : i32
    %c0_i32_1 = arith.constant 0 : i32
    return %c0_i32, %c0_i32_0 : i32, i32
  }
  func.func @transform_18(%arg0: i32) -> (i32, i32) {
    %c0_i32 = arith.constant 0 : i32
    %c0_i32_0 = arith.constant 0 : i32
    %c0_i32_1 = arith.constant 0 : i32
    return %c0_i32, %c0_i32_0 : i32, i32
  }
  func.func @transform_19(%arg0: i32) -> (i32, i32) {
    %c0_i32 = arith.constant 0 : i32
    %c0_i32_0 = arith.constant 0 : i32
    %c0_i32_1 = arith.constant 0 : i32
    return %c0_i32, %c0_i32_0 : i32, i32
  }
  func.func @transform_20(%arg0: i32) -> (i32, i32) {
    %c0_i32 = arith.constant 0 : i32
    %c0_i32_0 = arith.constant 0 : i32
    %c0_i32_1 = arith.constant 0 : i32
    return %c0_i32, %c0_i32_0 : i32, i32
  }
  func.func @transform_21(%arg0: i32) -> (i32, i32) {
    %c0_i32 = arith.constant 0 : i32
    %c0_i32_0 = arith.constant 0 : i32
    %c0_i32_1 = arith.constant 0 : i32
    return %c0_i32, %c0_i32_0 : i32, i32
  }
  func.func @transform_22(%arg0: i32) -> (i32, i32) {
    %c0_i32 = arith.constant 0 : i32
    %c0_i32_0 = arith.constant 0 : i32
    %c0_i32_1 = arith.constant 0 : i32
    return %c0_i32, %c0_i32_0 : i32, i32
  }
  func.func @transform_23(%arg0: i32) -> (i32, i32) {
    %c0_i32 = arith.constant 0 : i32
    %c0_i32_0 = arith.constant 0 : i32
    %c0_i32_1 = arith.constant 0 : i32
    return %c0_i32, %c0_i32_0 : i32, i32
  }
  func.func @transform_24(%arg0: i32) -> (i32, i32) {
    %c0_i32 = arith.constant 0 : i32
    %c0_i32_0 = arith.constant 0 : i32
    %c0_i32_1 = arith.constant 0 : i32
    return %c0_i32, %c0_i32_0 : i32, i32
  }
  func.func @transform_25(%arg0: i32) -> (i32, i32) {
    %c0_i32 = arith.constant 0 : i32
    %c0_i32_0 = arith.constant 0 : i32
    %c0_i32_1 = arith.constant 0 : i32
    return %c0_i32, %c0_i32_0 : i32, i32
  }
  func.func @transform_26(%arg0: i32) -> (i32, i32) {
    %c0_i32 = arith.constant 0 : i32
    %c0_i32_0 = arith.constant 0 : i32
    %c0_i32_1 = arith.constant 0 : i32
    return %c0_i32, %c0_i32_0 : i32, i32
  }
  func.func @transform_27(%arg0: i32) -> (i32, i32) {
    %c0_i32 = arith.constant 0 : i32
    %c0_i32_0 = arith.constant 0 : i32
    %c0_i32_1 = arith.constant 0 : i32
    return %c0_i32, %c0_i32_0 : i32, i32
  }
  func.func @transform_28(%arg0: i32) -> (i32, i32) {
    %c0_i32 = arith.constant 0 : i32
    %c0_i32_0 = arith.constant 0 : i32
    %c0_i32_1 = arith.constant 0 : i32
    return %c0_i32, %c0_i32_0 : i32, i32
  }
  func.func @transform_29(%arg0: i32) -> (i32, i32, i32) {
    %c0_i32 = arith.constant 0 : i32
    %c0_i32_0 = arith.constant 0 : i32
    %c0_i32_1 = arith.constant 0 : i32
    return %arg0, %c0_i32, %c0_i32_0 : i32, i32, i32
  }
}

</mosaic_0001>

<llo_original>
// kernel: encoder_forward.1
$region0: #{encoder_forward.1}
  #allocation0 [shape = 'u32[]', space=smem, size = 0x4, offset = 0x4, fixed_abs, tag = 'smem constant byte address 0x4 - core index']
  #allocation1 [shape = 'u32[144,128]{1,0:T(1,128)}', space=vmem, size = 0x12000, scoped, tag = 'internal scratch']
  %s0 = inlined_call_operand.smem [shape: u32[30], index: -1, kind: input, shape index: {}]
  %s1 = sld [smem:[%s0]]
  %s2 = scalar_lea.smem %s0, 1
  %s3 = sld [smem:[%s2]]
  %s4 = scalar_lea.smem %s0, 2
  %s5 = sld [smem:[%s4]]
  %s6 = scalar_lea.smem %s0, 3
  %s7 = sld [smem:[%s6]]
  %s8 = scalar_lea.smem %s0, 4
  %s9 = sld [smem:[%s8]]
  %s10 = scalar_lea.smem %s0, 5
  %s11 = sld [smem:[%s10]]
  %s12 = scalar_lea.smem %s0, 6
  %s13 = sld [smem:[%s12]]
  %s14 = scalar_lea.smem %s0, 7
  %s15 = sld [smem:[%s14]]
  %s16 = scalar_lea.smem %s0, 8
  %s17 = sld [smem:[%s16]]
  %s18 = scalar_lea.smem %s0, 9
  %s19 = sld [smem:[%s18]]
  %s20 = scalar_lea.smem %s0, 10
  %s21 = sld [smem:[%s20]]
  %s22 = scalar_lea.smem %s0, 11
  %s23 = sld [smem:[%s22]]
  %s24 = scalar_lea.smem %s0, 12
  %s25 = sld [smem:[%s24]]
  %s26 = scalar_lea.smem %s0, 13
  %s27 = sld [smem:[%s26]]
  %s28 = scalar_lea.smem %s0, 14
  %s29 = sld [smem:[%s28]]
  %s30 = scalar_lea.smem %s0, 15
  %s31 = sld [smem:[%s30]]
  %s32 = scalar_lea.smem %s0, 16
  %s33 = sld [smem:[%s32]]
  %s34 = scalar_lea.smem %s0, 17
  %s35 = sld [smem:[%s34]]
  %s36 = scalar_lea.smem %s0, 18
  %s37 = sld [smem:[%s36]]
  %s38 = scalar_lea.smem %s0, 19
  %s39 = sld [smem:[%s38]]
  %s40 = scalar_lea.smem %s0, 20
  %s41 = sld [smem:[%s40]]
  %s42 = scalar_lea.smem %s0, 21
  %s43 = sld [smem:[%s42]]
  %s44 = scalar_lea.smem %s0, 22
  %s45 = sld [smem:[%s44]]
  %s46 = scalar_lea.smem %s0, 23
  %s47 = sld [smem:[%s46]]
  %s48 = scalar_lea.smem %s0, 24
  %s49 = sld [smem:[%s48]]
  %s50 = scalar_lea.smem %s0, 25
  %s51 = sld [smem:[%s50]]
  %s52 = scalar_lea.smem %s0, 26
  %s53 = sld [smem:[%s52]]
  %s54 = scalar_lea.smem %s0, 27
  %s55 = sld [smem:[%s54]]
  %s56 = scalar_lea.smem %s0, 28
  %s57 = sld [smem:[%s56]]
  %s58 = scalar_lea.smem %s0, 29
  %s59 = sld [smem:[%s58]]
  %s60 = sld [smem:[#allocation0]]
  $region209: #{encoder_forward.1} parent=0
    _
  %s62 = ssub.s32 1, %s60
  %s63 = scalar_select 0, %s62, %s60
  $region1: #{encoder_forward.1} parent=0
    #allocation2 [shape = 'u8[8192]{0}', space=vmem, size = 0x2000, scoped, tag = 'input window, operand 0']
    #allocation3 [shape = 's32[2]{0}', space=sflag, size = 0x8, scoped, tag = 'scoped memory for encoder_forward.1']
    #allocation4 [shape = 's32[2]{0}', space=sflag, size = 0x8, scoped, tag = 'scoped memory for encoder_forward.1']
    #allocation5 [shape = 'u8[1024]{0}', space=vmem, size = 0x400, scoped, tag = 'input window, operand 1']
    #allocation6 [shape = 's32[2]{0}', space=sflag, size = 0x8, scoped, tag = 'scoped memory for encoder_forward.1']
    #allocation7 [shape = 'u8[512]{0}', space=vmem, size = 0x400, scoped, tag = 'input window, operand 3, single buffered']
    #allocation8 [shape = 'u8[512]{0}', space=vmem, size = 0x400, scoped, tag = 'input window, operand 4, single buffered']
    #allocation9 [shape = 's32[1]{0}', space=sflag, size = 0x4, scoped, tag = 'scoped memory for encoder_forward.1']
    #allocation10 [shape = 'u8[512]{0}', space=vmem, size = 0x400, scoped, tag = 'input window, operand 6, single buffered']
    #allocation11 [shape = 'u8[512]{0}', space=vmem, size = 0x400, scoped, tag = 'input window, operand 8, single buffered']
    #allocation12 [shape = 's32[1]{0}', space=sflag, size = 0x4, scoped, tag = 'scoped memory for encoder_forward.1']
    #allocation13 [shape = 'u8[512]{0}', space=vmem, size = 0x400, scoped, tag = 'input window, operand 9, single buffered']
    #allocation14 [shape = 'u8[512]{0}', space=vmem, size = 0x400, scoped, tag = 'input window, operand 10, single buffered']
    #allocation15 [shape = 's32[1]{0}', space=sflag, size = 0x4, scoped, tag = 'scoped memory for encoder_forward.1']
    #allocation16 [shape = 'u8[512]{0}', space=vmem, size = 0x400, scoped, tag = 'input window, operand 12, single buffered']
    #allocation17 [shape = 'u8[512]{0}', space=vmem, size = 0x400, scoped, tag = 'input window, operand 14, single buffered']
    #allocation18 [shape = 's32[1]{0}', space=sflag, size = 0x4, scoped, tag = 'scoped memory for encoder_forward.1']
    #allocation19 [shape = 'u8[512]{0}', space=vmem, size = 0x400, scoped, tag = 'input window, operand 18, single buffered']
    #allocation20 [shape = 'u8[512]{0}', space=vmem, size = 0x400, scoped, tag = 'input window, operand 20, single buffered']
    #allocation21 [shape = 's32[1]{0}', space=sflag, size = 0x4, scoped, tag = 'scoped memory for encoder_forward.1']
    #allocation22 [shape = 'u8[512]{0}', space=vmem, size = 0x400, scoped, tag = 'input window, operand 22, single buffered']
    #allocation23 [shape = 'u8[512]{0}', space=vmem, size = 0x400, scoped, tag = 'input window, operand 24, single buffered']
    #allocation24 [shape = 's32[1]{0}', space=sflag, size = 0x4, scoped, tag = 'scoped memory for encoder_forward.1']
    #allocation25 [shape = 'u8[512]{0}', space=vmem, size = 0x400, scoped, tag = 'input window, operand 26, single buffered']
    #allocation26 [shape = 'u8[8192]{0}', space=vmem, size = 0x2000, scoped, tag = 'output window, operand 0']
    %64 = vsyncpa [#allocation3], 0
    %s65 = scalar_lea.sflag [#allocation3], 1
    %66 = vsyncpa %s65, 0
    %67 = vsyncpa [#allocation6], 0
    %s68 = scalar_lea.sflag [#allocation6], 1
    %69 = vsyncpa %s68, 0
    %70 = vsyncpa [#allocation9], 0
    %71 = vsyncpa [#allocation12], 0
    %72 = vsyncpa [#allocation15], 0
    %73 = vsyncpa [#allocation18], 0
    %74 = vsyncpa [#allocation21], 0
    %75 = vsyncpa [#allocation24], 0
    %76 = vsyncpa [#allocation4], 0
    %s77 = scalar_lea.sflag [#allocation4], 1
    %78 = vsyncpa %s77, 0
    loop: start=0, step=1, limit=4
    $region2: #{encoder_forward.1} parent=1 // loop_pre_header
      _
    $region3: #{encoder_forward.1} parent=1 // loop_header
      %s80 = sphi 0, %s84
      %p81 = scmp.ge.s32.totalorder %s80, 4
      %s90 = sphi 0, %s92
      %s93 = sphi 0, %s90
      %s94 = sphi 0, %s93
      %s110 = sphi 0, %s94
      %s116 = sphi 0, %s118
      %s119 = sphi 0, %s116
      %s120 = sphi 0, %s119
      %s136 = sphi 0, %s120
      %s140 = sphi 0, %s140
      %s142 = sphi 0, %s140
      %s143 = sphi 0, %s142
      %s157 = sphi 0, %s143
      %s161 = sphi 0, %s161
      %s163 = sphi 0, %s161
      %s164 = sphi 0, %s163
      %s178 = sphi 0, %s164
      %s182 = sphi 0, %s182
      %s184 = sphi 0, %s182
      %s185 = sphi 0, %s184
      %s199 = sphi 0, %s185
      %s203 = sphi 0, %s203
      %s205 = sphi 0, %s203
      %s206 = sphi 0, %s205
      %s220 = sphi 0, %s206
      %s224 = sphi 0, %s224
      %s226 = sphi 0, %s224
      %s227 = sphi 0, %s226
      %s241 = sphi 0, %s227
      %s245 = sphi 0, %s245
      %s247 = sphi 0, %s245
      %s248 = sphi 0, %s247
      %s262 = sphi 0, %s248
      %s266 = sphi 0, %s266
      %s268 = sphi 0, %s266
      %s269 = sphi 0, %s268
      %s283 = sphi 0, %s269
      %s287 = sphi 0, %s287
      %s289 = sphi 0, %s287
      %s290 = sphi 0, %s289
      %s304 = sphi 0, %s290
      %s308 = sphi 0, %s308
      %s310 = sphi 0, %s308
      %s311 = sphi 0, %s310
      %s325 = sphi 0, %s311
      %s329 = sphi 0, %s329
      %s331 = sphi 0, %s329
      %s332 = sphi 0, %s331
      %s346 = sphi 0, %s332
      %s350 = sphi 0, %s350
      %s352 = sphi 0, %s350
      %s353 = sphi 0, %s352
      %s367 = sphi 0, %s353
      %s371 = sphi 0, %s371
      %s373 = sphi 0, %s371
      %s374 = sphi 0, %s373
      %s388 = sphi 0, %s374
      %s392 = sphi 0, %s392
      %s394 = sphi 0, %s392
      %s395 = sphi 0, %s394
      %s409 = sphi 0, %s395
      %s413 = sphi 0, %s413
      %s415 = sphi 0, %s413
      %s416 = sphi 0, %s415
      %s430 = sphi 0, %s416
      %s434 = sphi 0, %s434
      %s436 = sphi 0, %s434
      %s437 = sphi 0, %s436
      %s451 = sphi 0, %s437
      %s455 = sphi 0, %s455
      %s457 = sphi 0, %s455
      %s458 = sphi 0, %s457
      %s472 = sphi 0, %s458
      %s476 = sphi 0, %s476
      %s478 = sphi 0, %s476
      %s479 = sphi 0, %s478
      %s493 = sphi 0, %s479
      %s497 = sphi 0, %s497
      %s499 = sphi 0, %s497
      %s500 = sphi 0, %s499
      %s514 = sphi 0, %s500
      %s518 = sphi 0, %s518
      %s520 = sphi 0, %s518
      %s521 = sphi 0, %s520
      %s535 = sphi 0, %s521
      %s539 = sphi 0, %s539
      %s541 = sphi 0, %s539
      %s542 = sphi 0, %s541
      %s556 = sphi 0, %s542
      %s560 = sphi 0, %s560
      %s562 = sphi 0, %s560
      %s563 = sphi 0, %s562
      %s577 = sphi 0, %s563
      %s581 = sphi 0, %s581
      %s583 = sphi 0, %s581
      %s584 = sphi 0, %s583
      %s598 = sphi 0, %s584
      %s602 = sphi 0, %s602
      %s604 = sphi 0, %s602
      %s605 = sphi 0, %s604
      %s619 = sphi 0, %s605
      %s623 = sphi 0, %s623
      %s625 = sphi 0, %s623
      %s626 = sphi 0, %s625
      %s640 = sphi 0, %s626
      %s644 = sphi 0, %s644
      %s646 = sphi 0, %s644
      %s647 = sphi 0, %s646
      %s661 = sphi 0, %s647
      %s665 = sphi 0, %s665
      %s667 = sphi 0, %s665
      %s668 = sphi 0, %s667
      %s682 = sphi 0, %s668
      %s686 = sphi 0, %s686
      %s688 = sphi 0, %s686
      %s689 = sphi 0, %s688
      %s703 = sphi 0, %s689
      %s709 = sphi 0, %s711
      %s712 = sphi 0, %s709
      %s713 = sphi 0, %s712
      %s729 = sphi 0, %s713
    $region4: #{encoder_forward.1} parent=1 // loop_header_branch
      %83 = sbr.rel (%p81) target = $region8
    $region5: #{encoder_forward.1} parent=1 // loop_body
      %s85 = ssub.s32 %s80, 1
      %s86 = ssub.s32 %s80, 2
      %s87 = sadd.s32 %s80, 1
      %s88 = ssub.s32 %s80, %s87
      %p89 = scmp.eq.s32.totalorder %s88, 0
      %s91 = sadd.s32 %s90, 1
      %s92 = scalar_select %p89, %s90, %s91
      %p95 = pneg %p89
      %p96 = scmp.eq.s32.totalorder %s80, 1
      %p97 = por %p95, %p96
      %p98 = scmp.ne.s32.totalorder %s90, %s93
      %p99 = scmp.eq.s32.totalorder %s80, 0
      %p100 = por %p98, %p99
      %p101 = scmp.ne.s32.totalorder %s90, %s93
      %p102 = scmp.eq.s32.totalorder %s85, 1
      %p103 = por %p101, %p102
      %p104 = scmp.ne.s32.totalorder %s93, %s94
      %p105 = scmp.eq.s32.totalorder %s85, 0
      %p106 = por %p104, %p105
      %p107 = scmp.ne.s32.totalorder %s93, %s94
      %p108 = scmp.eq.s32.totalorder %s86, 1
      %p109 = por %p107, %p108
      %p111 = scmp.ne.s32.totalorder %s94, %s110
      %p112 = scmp.eq.s32.totalorder %s86, 0
      %p113 = por %p111, %p112
      %s114 = ssub.s32 %s80, %s87
      %p115 = scmp.eq.s32.totalorder %s114, 0
      %s117 = sadd.s32 %s116, 1
      %s118 = scalar_select %p115, %s116, %s117
      %p121 = pneg %p115
      %p122 = scmp.eq.s32.totalorder %s80, 1
      %p123 = por %p121, %p122
      %p124 = scmp.ne.s32.totalorder %s116, %s119
      %p125 = scmp.eq.s32.totalorder %s80, 0
      %p126 = por %p124, %p125
      %p127 = scmp.ne.s32.totalorder %s116, %s119
      %p128 = scmp.eq.s32.totalorder %s85, 1
      %p129 = por %p127, %p128
      %p130 = scmp.ne.s32.totalorder %s119, %s120
      %p131 = scmp.eq.s32.totalorder %s85, 0
      %p132 = por %p130, %p131
      %p133 = scmp.ne.s32.totalorder %s119, %s120
      %p134 = scmp.eq.s32.totalorder %s86, 1
      %p135 = por %p133, %p134
      %p137 = scmp.ne.s32.totalorder %s120, %s136
      %p138 = scmp.eq.s32.totalorder %s86, 0
      %p139 = por %p137, %p138
      %s141 = sadd.s32 %s140, 1
      %p144 = scmp.eq.s32.totalorder %s80, 1
      %p145 = scmp.ne.s32.totalorder %s140, %s142
      %p146 = scmp.eq.s32.totalorder %s80, 0
      %p147 = por %p145, %p146
      %p148 = scmp.ne.s32.totalorder %s140, %s142
      %p149 = scmp.eq.s32.totalorder %s85, 1
      %p150 = por %p148, %p149
      %p151 = scmp.ne.s32.totalorder %s142, %s143
      %p152 = scmp.eq.s32.totalorder %s85, 0
      %p153 = por %p151, %p152
      %p154 = scmp.ne.s32.totalorder %s142, %s143
      %p155 = scmp.eq.s32.totalorder %s86, 1
      %p156 = por %p154, %p155
      %p158 = scmp.ne.s32.totalorder %s143, %s157
      %p159 = scmp.eq.s32.totalorder %s86, 0
      %p160 = por %p158, %p159
      %s162 = sadd.s32 %s161, 1
      %p165 = scmp.eq.s32.totalorder %s80, 1
      %p166 = scmp.ne.s32.totalorder %s161, %s163
      %p167 = scmp.eq.s32.totalorder %s80, 0
      %p168 = por %p166, %p167
      %p169 = scmp.ne.s32.totalorder %s161, %s163
      %p170 = scmp.eq.s32.totalorder %s85, 1
      %p171 = por %p169, %p170
      %p172 = scmp.ne.s32.totalorder %s163, %s164
      %p173 = scmp.eq.s32.totalorder %s85, 0
      %p174 = por %p172, %p173
      %p175 = scmp.ne.s32.totalorder %s163, %s164
      %p176 = scmp.eq.s32.totalorder %s86, 1
      %p177 = por %p175, %p176
      %p179 = scmp.ne.s32.totalorder %s164, %s178
      %p180 = scmp.eq.s32.totalorder %s86, 0
      %p181 = por %p179, %p180
      %s183 = sadd.s32 %s182, 1
      %p186 = scmp.eq.s32.totalorder %s80, 1
      %p187 = scmp.ne.s32.totalorder %s182, %s184
      %p188 = scmp.eq.s32.totalorder %s80, 0
      %p189 = por %p187, %p188
      %p190 = scmp.ne.s32.totalorder %s182, %s184
      %p191 = scmp.eq.s32.totalorder %s85, 1
      %p192 = por %p190, %p191
      %p193 = scmp.ne.s32.totalorder %s184, %s185
      %p194 = scmp.eq.s32.totalorder %s85, 0
      %p195 = por %p193, %p194
      %p196 = scmp.ne.s32.totalorder %s184, %s185
      %p197 = scmp.eq.s32.totalorder %s86, 1
      %p198 = por %p196, %p197
      %p200 = scmp.ne.s32.totalorder %s185, %s199
      %p201 = scmp.eq.s32.totalorder %s86, 0
      %p202 = por %p200, %p201
      %s204 = sadd.s32 %s203, 1
      %p207 = scmp.eq.s32.totalorder %s80, 1
      %p208 = scmp.ne.s32.totalorder %s203, %s205
      %p209 = scmp.eq.s32.totalorder %s80, 0
      %p210 = por %p208, %p209
      %p211 = scmp.ne.s32.totalorder %s203, %s205
      %p212 = scmp.eq.s32.totalorder %s85, 1
      %p213 = por %p211, %p212
      %p214 = scmp.ne.s32.totalorder %s205, %s206
      %p215 = scmp.eq.s32.totalorder %s85, 0
      %p216 = por %p214, %p215
      %p217 = scmp.ne.s32.totalorder %s205, %s206
      %p218 = scmp.eq.s32.totalorder %s86, 1
      %p219 = por %p217, %p218
      %p221 = scmp.ne.s32.totalorder %s206, %s220
      %p222 = scmp.eq.s32.totalorder %s86, 0
      %p223 = por %p221, %p222
      %s225 = sadd.s32 %s224, 1
      %p228 = scmp.eq.s32.totalorder %s80, 1
      %p229 = scmp.ne.s32.totalorder %s224, %s226
      %p230 = scmp.eq.s32.totalorder %s80, 0
      %p231 = por %p229, %p230
      %p232 = scmp.ne.s32.totalorder %s224, %s226
      %p233 = scmp.eq.s32.totalorder %s85, 1
      %p234 = por %p232, %p233
      %p235 = scmp.ne.s32.totalorder %s226, %s227
      %p236 = scmp.eq.s32.totalorder %s85, 0
      %p237 = por %p235, %p236
      %p238 = scmp.ne.s32.totalorder %s226, %s227
      %p239 = scmp.eq.s32.totalorder %s86, 1
      %p240 = por %p238, %p239
      %p242 = scmp.ne.s32.totalorder %s227, %s241
      %p243 = scmp.eq.s32.totalorder %s86, 0
      %p244 = por %p242, %p243
      %s246 = sadd.s32 %s245, 1
      %p249 = scmp.eq.s32.totalorder %s80, 1
      %p250 = scmp.ne.s32.totalorder %s245, %s247
      %p251 = scmp.eq.s32.totalorder %s80, 0
      %p252 = por %p250, %p251
      %p253 = scmp.ne.s32.totalorder %s245, %s247
      %p254 = scmp.eq.s32.totalorder %s85, 1
      %p255 = por %p253, %p254
      %p256 = scmp.ne.s32.totalorder %s247, %s248
      %p257 = scmp.eq.s32.totalorder %s85, 0
      %p258 = por %p256, %p257
      %p259 = scmp.ne.s32.totalorder %s247, %s248
      %p260 = scmp.eq.s32.totalorder %s86, 1
      %p261 = por %p259, %p260
      %p263 = scmp.ne.s32.totalorder %s248, %s262
      %p264 = scmp.eq.s32.totalorder %s86, 0
      %p265 = por %p263, %p264
      %s267 = sadd.s32 %s266, 1
      %p270 = scmp.eq.s32.totalorder %s80, 1
      %p271 = scmp.ne.s32.totalorder %s266, %s268
      %p272 = scmp.eq.s32.totalorder %s80, 0
      %p273 = por %p271, %p272
      %p274 = scmp.ne.s32.totalorder %s266, %s268
      %p275 = scmp.eq.s32.totalorder %s85, 1
      %p276 = por %p274, %p275
      %p277 = scmp.ne.s32.totalorder %s268, %s269
      %p278 = scmp.eq.s32.totalorder %s85, 0
      %p279 = por %p277, %p278
      %p280 = scmp.ne.s32.totalorder %s268, %s269
      %p281 = scmp.eq.s32.totalorder %s86, 1
      %p282 = por %p280, %p281
      %p284 = scmp.ne.s32.totalorder %s269, %s283
      %p285 = scmp.eq.s32.totalorder %s86, 0
      %p286 = por %p284, %p285
      %s288 = sadd.s32 %s287, 1
      %p291 = scmp.eq.s32.totalorder %s80, 1
      %p292 = scmp.ne.s32.totalorder %s287, %s289
      %p293 = scmp.eq.s32.totalorder %s80, 0
      %p294 = por %p292, %p293
      %p295 = scmp.ne.s32.totalorder %s287, %s289
      %p296 = scmp.eq.s32.totalorder %s85, 1
      %p297 = por %p295, %p296
      %p298 = scmp.ne.s32.totalorder %s289, %s290
      %p299 = scmp.eq.s32.totalorder %s85, 0
      %p300 = por %p298, %p299
      %p301 = scmp.ne.s32.totalorder %s289, %s290
      %p302 = scmp.eq.s32.totalorder %s86, 1
      %p303 = por %p301, %p302
      %p305 = scmp.ne.s32.totalorder %s290, %s304
      %p306 = scmp.eq.s32.totalorder %s86, 0
      %p307 = por %p305, %p306
      %s309 = sadd.s32 %s308, 1
      %p312 = scmp.eq.s32.totalorder %s80, 1
      %p313 = scmp.ne.s32.totalorder %s308, %s310
      %p314 = scmp.eq.s32.totalorder %s80, 0
      %p315 = por %p313, %p314
      %p316 = scmp.ne.s32.totalorder %s308, %s310
      %p317 = scmp.eq.s32.totalorder %s85, 1
      %p318 = por %p316, %p317
      %p319 = scmp.ne.s32.totalorder %s310, %s311
      %p320 = scmp.eq.s32.totalorder %s85, 0
      %p321 = por %p319, %p320
      %p322 = scmp.ne.s32.totalorder %s310, %s311
      %p323 = scmp.eq.s32.totalorder %s86, 1
      %p324 = por %p322, %p323
      %p326 = scmp.ne.s32.totalorder %s311, %s325
      %p327 = scmp.eq.s32.totalorder %s86, 0
      %p328 = por %p326, %p327
      %s330 = sadd.s32 %s329, 1
      %p333 = scmp.eq.s32.totalorder %s80, 1
      %p334 = scmp.ne.s32.totalorder %s329, %s331
      %p335 = scmp.eq.s32.totalorder %s80, 0
      %p336 = por %p334, %p335
      %p337 = scmp.ne.s32.totalorder %s329, %s331
      %p338 = scmp.eq.s32.totalorder %s85, 1
      %p339 = por %p337, %p338
      %p340 = scmp.ne.s32.totalorder %s331, %s332
      %p341 = scmp.eq.s32.totalorder %s85, 0
      %p342 = por %p340, %p341
      %p343 = scmp.ne.s32.totalorder %s331, %s332
      %p344 = scmp.eq.s32.totalorder %s86, 1
      %p345 = por %p343, %p344
      %p347 = scmp.ne.s32.totalorder %s332, %s346
      %p348 = scmp.eq.s32.totalorder %s86, 0
      %p349 = por %p347, %p348
      %s351 = sadd.s32 %s350, 1
      %p354 = scmp.eq.s32.totalorder %s80, 1
      %p355 = scmp.ne.s32.totalorder %s350, %s352
      %p356 = scmp.eq.s32.totalorder %s80, 0
      %p357 = por %p355, %p356
      %p358 = scmp.ne.s32.totalorder %s350, %s352
      %p359 = scmp.eq.s32.totalorder %s85, 1
      %p360 = por %p358, %p359
      %p361 = scmp.ne.s32.totalorder %s352, %s353
      %p362 = scmp.eq.s32.totalorder %s85, 0
      %p363 = por %p361, %p362
      %p364 = scmp.ne.s32.totalorder %s352, %s353
      %p365 = scmp.eq.s32.totalorder %s86, 1
      %p366 = por %p364, %p365
      %p368 = scmp.ne.s32.totalorder %s353, %s367
      %p369 = scmp.eq.s32.totalorder %s86, 0
      %p370 = por %p368, %p369
      %s372 = sadd.s32 %s371, 1
      %p375 = scmp.eq.s32.totalorder %s80, 1
      %p376 = scmp.ne.s32.totalorder %s371, %s373
      %p377 = scmp.eq.s32.totalorder %s80, 0
      %p378 = por %p376, %p377
      %p379 = scmp.ne.s32.totalorder %s371, %s373
      %p380 = scmp.eq.s32.totalorder %s85, 1
      %p381 = por %p379, %p380
      %p382 = scmp.ne.s32.totalorder %s373, %s374
      %p383 = scmp.eq.s32.totalorder %s85, 0
      %p384 = por %p382, %p383
      %p385 = scmp.ne.s32.totalorder %s373, %s374
      %p386 = scmp.eq.s32.totalorder %s86, 1
      %p387 = por %p385, %p386
      %p389 = scmp.ne.s32.totalorder %s374, %s388
      %p390 = scmp.eq.s32.totalorder %s86, 0
      %p391 = por %p389, %p390
      %s393 = sadd.s32 %s392, 1
      %p396 = scmp.eq.s32.totalorder %s80, 1
      %p397 = scmp.ne.s32.totalorder %s392, %s394
      %p398 = scmp.eq.s32.totalorder %s80, 0
      %p399 = por %p397, %p398
      %p400 = scmp.ne.s32.totalorder %s392, %s394
      %p401 = scmp.eq.s32.totalorder %s85, 1
      %p402 = por %p400, %p401
      %p403 = scmp.ne.s32.totalorder %s394, %s395
      %p404 = scmp.eq.s32.totalorder %s85, 0
      %p405 = por %p403, %p404
      %p406 = scmp.ne.s32.totalorder %s394, %s395
      %p407 = scmp.eq.s32.totalorder %s86, 1
      %p408 = por %p406, %p407
      %p410 = scmp.ne.s32.totalorder %s395, %s409
      %p411 = scmp.eq.s32.totalorder %s86, 0
      %p412 = por %p410, %p411
      %s414 = sadd.s32 %s413, 1
      %p417 = scmp.eq.s32.totalorder %s80, 1
      %p418 = scmp.ne.s32.totalorder %s413, %s415
      %p419 = scmp.eq.s32.totalorder %s80, 0
      %p420 = por %p418, %p419
      %p421 = scmp.ne.s32.totalorder %s413, %s415
      %p422 = scmp.eq.s32.totalorder %s85, 1
      %p423 = por %p421, %p422
      %p424 = scmp.ne.s32.totalorder %s415, %s416
      %p425 = scmp.eq.s32.totalorder %s85, 0
      %p426 = por %p424, %p425
      %p427 = scmp.ne.s32.totalorder %s415, %s416
      %p428 = scmp.eq.s32.totalorder %s86, 1
      %p429 = por %p427, %p428
      %p431 = scmp.ne.s32.totalorder %s416, %s430
      %p432 = scmp.eq.s32.totalorder %s86, 0
      %p433 = por %p431, %p432
      %s435 = sadd.s32 %s434, 1
      %p438 = scmp.eq.s32.totalorder %s80, 1
      %p439 = scmp.ne.s32.totalorder %s434, %s436
      %p440 = scmp.eq.s32.totalorder %s80, 0
      %p441 = por %p439, %p440
      %p442 = scmp.ne.s32.totalorder %s434, %s436
      %p443 = scmp.eq.s32.totalorder %s85, 1
      %p444 = por %p442, %p443
      %p445 = scmp.ne.s32.totalorder %s436, %s437
      %p446 = scmp.eq.s32.totalorder %s85, 0
      %p447 = por %p445, %p446
      %p448 = scmp.ne.s32.totalorder %s436, %s437
      %p449 = scmp.eq.s32.totalorder %s86, 1
      %p450 = por %p448, %p449
      %p452 = scmp.ne.s32.totalorder %s437, %s451
      %p453 = scmp.eq.s32.totalorder %s86, 0
      %p454 = por %p452, %p453
      %s456 = sadd.s32 %s455, 1
      %p459 = scmp.eq.s32.totalorder %s80, 1
      %p460 = scmp.ne.s32.totalorder %s455, %s457
      %p461 = scmp.eq.s32.totalorder %s80, 0
      %p462 = por %p460, %p461
      %p463 = scmp.ne.s32.totalorder %s455, %s457
      %p464 = scmp.eq.s32.totalorder %s85, 1
      %p465 = por %p463, %p464
      %p466 = scmp.ne.s32.totalorder %s457, %s458
      %p467 = scmp.eq.s32.totalorder %s85, 0
      %p468 = por %p466, %p467
      %p469 = scmp.ne.s32.totalorder %s457, %s458
      %p470 = scmp.eq.s32.totalorder %s86, 1
      %p471 = por %p469, %p470
      %p473 = scmp.ne.s32.totalorder %s458, %s472
      %p474 = scmp.eq.s32.totalorder %s86, 0
      %p475 = por %p473, %p474
      %s477 = sadd.s32 %s476, 1
      %p480 = scmp.eq.s32.totalorder %s80, 1
      %p481 = scmp.ne.s32.totalorder %s476, %s478
      %p482 = scmp.eq.s32.totalorder %s80, 0
      %p483 = por %p481, %p482
      %p484 = scmp.ne.s32.totalorder %s476, %s478
      %p485 = scmp.eq.s32.totalorder %s85, 1
      %p486 = por %p484, %p485
      %p487 = scmp.ne.s32.totalorder %s478, %s479
      %p488 = scmp.eq.s32.totalorder %s85, 0
      %p489 = por %p487, %p488
      %p490 = scmp.ne.s32.totalorder %s478, %s479
      %p491 = scmp.eq.s32.totalorder %s86, 1
      %p492 = por %p490, %p491
      %p494 = scmp.ne.s32.totalorder %s479, %s493
      %p495 = scmp.eq.s32.totalorder %s86, 0
      %p496 = por %p494, %p495
      %s498 = sadd.s32 %s497, 1
      %p501 = scmp.eq.s32.totalorder %s80, 1
      %p502 = scmp.ne.s32.totalorder %s497, %s499
      %p503 = scmp.eq.s32.totalorder %s80, 0
      %p504 = por %p502, %p503
      %p505 = scmp.ne.s32.totalorder %s497, %s499
      %p506 = scmp.eq.s32.totalorder %s85, 1
      %p507 = por %p505, %p506
      %p508 = scmp.ne.s32.totalorder %s499, %s500
      %p509 = scmp.eq.s32.totalorder %s85, 0
      %p510 = por %p508, %p509
      %p511 = scmp.ne.s32.totalorder %s499, %s500
      %p512 = scmp.eq.s32.totalorder %s86, 1
      %p513 = por %p511, %p512
      %p515 = scmp.ne.s32.totalorder %s500, %s514
      %p516 = scmp.eq.s32.totalorder %s86, 0
      %p517 = por %p515, %p516
      %s519 = sadd.s32 %s518, 1
      %p522 = scmp.eq.s32.totalorder %s80, 1
      %p523 = scmp.ne.s32.totalorder %s518, %s520
      %p524 = scmp.eq.s32.totalorder %s80, 0
      %p525 = por %p523, %p524
      %p526 = scmp.ne.s32.totalorder %s518, %s520
      %p527 = scmp.eq.s32.totalorder %s85, 1
      %p528 = por %p526, %p527
      %p529 = scmp.ne.s32.totalorder %s520, %s521
      %p530 = scmp.eq.s32.totalorder %s85, 0
      %p531 = por %p529, %p530
      %p532 = scmp.ne.s32.totalorder %s520, %s521
      %p533 = scmp.eq.s32.totalorder %s86, 1
      %p534 = por %p532, %p533
      %p536 = scmp.ne.s32.totalorder %s521, %s535
      %p537 = scmp.eq.s32.totalorder %s86, 0
      %p538 = por %p536, %p537
      %s540 = sadd.s32 %s539, 1
      %p543 = scmp.eq.s32.totalorder %s80, 1
      %p544 = scmp.ne.s32.totalorder %s539, %s541
      %p545 = scmp.eq.s32.totalorder %s80, 0
      %p546 = por %p544, %p545
      %p547 = scmp.ne.s32.totalorder %s539, %s541
      %p548 = scmp.eq.s32.totalorder %s85, 1
      %p549 = por %p547, %p548
      %p550 = scmp.ne.s32.totalorder %s541, %s542
      %p551 = scmp.eq.s32.totalorder %s85, 0
      %p552 = por %p550, %p551
      %p553 = scmp.ne.s32.totalorder %s541, %s542
      %p554 = scmp.eq.s32.totalorder %s86, 1
      %p555 = por %p553, %p554
      %p557 = scmp.ne.s32.totalorder %s542, %s556
      %p558 = scmp.eq.s32.totalorder %s86, 0
      %p559 = por %p557, %p558
      %s561 = sadd.s32 %s560, 1
      %p564 = scmp.eq.s32.totalorder %s80, 1
      %p565 = scmp.ne.s32.totalorder %s560, %s562
      %p566 = scmp.eq.s32.totalorder %s80, 0
      %p567 = por %p565, %p566
      %p568 = scmp.ne.s32.totalorder %s560, %s562
      %p569 = scmp.eq.s32.totalorder %s85, 1
      %p570 = por %p568, %p569
      %p571 = scmp.ne.s32.totalorder %s562, %s563
      %p572 = scmp.eq.s32.totalorder %s85, 0
      %p573 = por %p571, %p572
      %p574 = scmp.ne.s32.totalorder %s562, %s563
      %p575 = scmp.eq.s32.totalorder %s86, 1
      %p576 = por %p574, %p575
      %p578 = scmp.ne.s32.totalorder %s563, %s577
      %p579 = scmp.eq.s32.totalorder %s86, 0
      %p580 = por %p578, %p579
      %s582 = sadd.s32 %s581, 1
      %p585 = scmp.eq.s32.totalorder %s80, 1
      %p586 = scmp.ne.s32.totalorder %s581, %s583
      %p587 = scmp.eq.s32.totalorder %s80, 0
      %p588 = por %p586, %p587
      %p589 = scmp.ne.s32.totalorder %s581, %s583
      %p590 = scmp.eq.s32.totalorder %s85, 1
      %p591 = por %p589, %p590
      %p592 = scmp.ne.s32.totalorder %s583, %s584
      %p593 = scmp.eq.s32.totalorder %s85, 0
      %p594 = por %p592, %p593
      %p595 = scmp.ne.s32.totalorder %s583, %s584
      %p596 = scmp.eq.s32.totalorder %s86, 1
      %p597 = por %p595, %p596
      %p599 = scmp.ne.s32.totalorder %s584, %s598
      %p600 = scmp.eq.s32.totalorder %s86, 0
      %p601 = por %p599, %p600
      %s603 = sadd.s32 %s602, 1
      %p606 = scmp.eq.s32.totalorder %s80, 1
      %p607 = scmp.ne.s32.totalorder %s602, %s604
      %p608 = scmp.eq.s32.totalorder %s80, 0
      %p609 = por %p607, %p608
      %p610 = scmp.ne.s32.totalorder %s602, %s604
      %p611 = scmp.eq.s32.totalorder %s85, 1
      %p612 = por %p610, %p611
      %p613 = scmp.ne.s32.totalorder %s604, %s605
      %p614 = scmp.eq.s32.totalorder %s85, 0
      %p615 = por %p613, %p614
      %p616 = scmp.ne.s32.totalorder %s604, %s605
      %p617 = scmp.eq.s32.totalorder %s86, 1
      %p618 = por %p616, %p617
      %p620 = scmp.ne.s32.totalorder %s605, %s619
      %p621 = scmp.eq.s32.totalorder %s86, 0
      %p622 = por %p620, %p621
      %s624 = sadd.s32 %s623, 1
      %p627 = scmp.eq.s32.totalorder %s80, 1
      %p628 = scmp.ne.s32.totalorder %s623, %s625
      %p629 = scmp.eq.s32.totalorder %s80, 0
      %p630 = por %p628, %p629
      %p631 = scmp.ne.s32.totalorder %s623, %s625
      %p632 = scmp.eq.s32.totalorder %s85, 1
      %p633 = por %p631, %p632
      %p634 = scmp.ne.s32.totalorder %s625, %s626
      %p635 = scmp.eq.s32.totalorder %s85, 0
      %p636 = por %p634, %p635
      %p637 = scmp.ne.s32.totalorder %s625, %s626
      %p638 = scmp.eq.s32.totalorder %s86, 1
      %p639 = por %p637, %p638
      %p641 = scmp.ne.s32.totalorder %s626, %s640
      %p642 = scmp.eq.s32.totalorder %s86, 0
      %p643 = por %p641, %p642
      %s645 = sadd.s32 %s644, 1
      %p648 = scmp.eq.s32.totalorder %s80, 1
      %p649 = scmp.ne.s32.totalorder %s644, %s646
      %p650 = scmp.eq.s32.totalorder %s80, 0
      %p651 = por %p649, %p650
      %p652 = scmp.ne.s32.totalorder %s644, %s646
      %p653 = scmp.eq.s32.totalorder %s85, 1
      %p654 = por %p652, %p653
      %p655 = scmp.ne.s32.totalorder %s646, %s647
      %p656 = scmp.eq.s32.totalorder %s85, 0
      %p657 = por %p655, %p656
      %p658 = scmp.ne.s32.totalorder %s646, %s647
      %p659 = scmp.eq.s32.totalorder %s86, 1
      %p660 = por %p658, %p659
      %p662 = scmp.ne.s32.totalorder %s647, %s661
      %p663 = scmp.eq.s32.totalorder %s86, 0
      %p664 = por %p662, %p663
      %s666 = sadd.s32 %s665, 1
      %p669 = scmp.eq.s32.totalorder %s80, 1
      %p670 = scmp.ne.s32.totalorder %s665, %s667
      %p671 = scmp.eq.s32.totalorder %s80, 0
      %p672 = por %p670, %p671
      %p673 = scmp.ne.s32.totalorder %s665, %s667
      %p674 = scmp.eq.s32.totalorder %s85, 1
      %p675 = por %p673, %p674
      %p676 = scmp.ne.s32.totalorder %s667, %s668
      %p677 = scmp.eq.s32.totalorder %s85, 0
      %p678 = por %p676, %p677
      %p679 = scmp.ne.s32.totalorder %s667, %s668
      %p680 = scmp.eq.s32.totalorder %s86, 1
      %p681 = por %p679, %p680
      %p683 = scmp.ne.s32.totalorder %s668, %s682
      %p684 = scmp.eq.s32.totalorder %s86, 0
      %p685 = por %p683, %p684
      %s687 = sadd.s32 %s686, 1
      %p690 = scmp.eq.s32.totalorder %s80, 1
      %p691 = scmp.ne.s32.totalorder %s686, %s688
      %p692 = scmp.eq.s32.totalorder %s80, 0
      %p693 = por %p691, %p692
      %p694 = scmp.ne.s32.totalorder %s686, %s688
      %p695 = scmp.eq.s32.totalorder %s85, 1
      %p696 = por %p694, %p695
      %p697 = scmp.ne.s32.totalorder %s688, %s689
      %p698 = scmp.eq.s32.totalorder %s85, 0
      %p699 = por %p697, %p698
      %p700 = scmp.ne.s32.totalorder %s688, %s689
      %p701 = scmp.eq.s32.totalorder %s86, 1
      %p702 = por %p700, %p701
      %p704 = scmp.ne.s32.totalorder %s689, %s703
      %p705 = scmp.eq.s32.totalorder %s86, 0
      %p706 = por %p704, %p705
      %s707 = ssub.s32 %s80, %s87
      %p708 = scmp.eq.s32.totalorder %s707, 0
      %s710 = sadd.s32 %s709, 1
      %s711 = scalar_select %p708, %s709, %s710
      %p714 = pneg %p708
      %p715 = scmp.eq.s32.totalorder %s80, 1
      %p716 = por %p714, %p715
      %p717 = scmp.ne.s32.totalorder %s709, %s712
      %p718 = scmp.eq.s32.totalorder %s80, 0
      %p719 = por %p717, %p718
      %p720 = scmp.ne.s32.totalorder %s709, %s712
      %p721 = scmp.eq.s32.totalorder %s85, 1
      %p722 = por %p720, %p721
      %p723 = scmp.ne.s32.totalorder %s712, %s713
      %p724 = scmp.eq.s32.totalorder %s85, 0
      %p725 = por %p723, %p724
      %p726 = scmp.ne.s32.totalorder %s712, %s713
      %p727 = scmp.eq.s32.totalorder %s86, 1
      %p728 = por %p726, %p727
      %p730 = scmp.ne.s32.totalorder %s713, %s729
      %p731 = scmp.eq.s32.totalorder %s86, 0
      %p732 = por %p730, %p731
      %p733 = scmp.le.s32.totalorder 1, %s80
      %p734 = scmp.lt.s32.totalorder %s80, 3
      %p735 = pnand %p733, %p734
      %p736 = pneg %p735
      // Predicated region
      $region9: #{encoder_forward.1} parent=5 // pred_check
        _
      $region10: #{encoder_forward.1} parent=5 // pred_check_branch
        %738 = sbr.rel (%p735) target = $region12
      $region11: #{encoder_forward.1} parent=5 // pred_region
        %s739 = ssub.s32 %s80, 1
        // Predicated region
        $region13: #{encoder_forward.1} parent=11 // pred_check
          %p740 = pneg %p153
        $region14: #{encoder_forward.1} parent=11 // pred_check_branch
          %742 = sbr.rel (%p740) target = $region16
        $region15: #{encoder_forward.1} parent=11 // pred_region
          _
        $region16: #{encoder_forward.1} parent=11 // pred_fallthru
          _
        // Predicated region
        $region17: #{encoder_forward.1} parent=11 // pred_check
          %p743 = pneg %p174
        $region18: #{encoder_forward.1} parent=11 // pred_check_branch
          %745 = sbr.rel (%p743) target = $region20
        $region19: #{encoder_forward.1} parent=11 // pred_region
          %s747 = ssub.s32 16, 16
          %748 = vsyncadd [#allocation6], %s747
          %s750 = sshll.u32 [#allocation7], 4
          %s751 = int_to_ptr.vmem [resolvable:$true] %s750
          %753 = dma.hbm_to_vmem [thread:$0]  %s7, 16, %s751, [#allocation6]
        $region20: #{encoder_forward.1} parent=11 // pred_fallthru
          _
        // Predicated region
        $region21: #{encoder_forward.1} parent=11 // pred_check
          %p754 = pneg %p195
        $region22: #{encoder_forward.1} parent=11 // pred_check_branch
          %756 = sbr.rel (%p754) target = $region24
        $region23: #{encoder_forward.1} parent=11 // pred_region
          %s758 = ssub.s32 16, 16
          %759 = vsyncadd [#allocation9], %s758
          %s761 = sshll.u32 [#allocation8], 4
          %s762 = int_to_ptr.vmem [resolvable:$true] %s761
          %764 = dma.hbm_to_vmem [thread:$0]  %s9, 16, %s762, [#allocation9]
        $region24: #{encoder_forward.1} parent=11 // pred_fallthru
          _
        // Predicated region
        $region25: #{encoder_forward.1} parent=11 // pred_check
          %p765 = pneg %p216
        $region26: #{encoder_forward.1} parent=11 // pred_check_branch
          %767 = sbr.rel (%p765) target = $region28
        $region27: #{encoder_forward.1} parent=11 // pred_region
          _
        $region28: #{encoder_forward.1} parent=11 // pred_fallthru
          _
        // Predicated region
        $region29: #{encoder_forward.1} parent=11 // pred_check
          %p768 = pneg %p237
        $region30: #{encoder_forward.1} parent=11 // pred_check_branch
          %770 = sbr.rel (%p768) target = $region32
        $region31: #{encoder_forward.1} parent=11 // pred_region
          %s772 = ssub.s32 16, 16
          %773 = vsyncadd [#allocation9], %s772
          %s775 = sshll.u32 [#allocation10], 4
          %s776 = int_to_ptr.vmem [resolvable:$true] %s775
          %778 = dma.hbm_to_vmem [thread:$0]  %s13, 16, %s776, [#allocation9]
        $region32: #{encoder_forward.1} parent=11 // pred_fallthru
          _
        // Predicated region
        $region33: #{encoder_forward.1} parent=11 // pred_check
          %p779 = pneg %p258
        $region34: #{encoder_forward.1} parent=11 // pred_check_branch
          %781 = sbr.rel (%p779) target = $region36
        $region35: #{encoder_forward.1} parent=11 // pred_region
          _
        $region36: #{encoder_forward.1} parent=11 // pred_fallthru
          _
        // Predicated region
        $region37: #{encoder_forward.1} parent=11 // pred_check
          %p782 = pneg %p279
        $region38: #{encoder_forward.1} parent=11 // pred_check_branch
          %784 = sbr.rel (%p782) target = $region40
        $region39: #{encoder_forward.1} parent=11 // pred_region
          %s786 = ssub.s32 16, 16
          %787 = vsyncadd [#allocation12], %s786
          %s789 = sshll.u32 [#allocation11], 4
          %s790 = int_to_ptr.vmem [resolvable:$true] %s789
          %792 = dma.hbm_to_vmem [thread:$0]  %s17, 16, %s790, [#allocation12]
        $region40: #{encoder_forward.1} parent=11 // pred_fallthru
          _
        // Predicated region
        $region41: #{encoder_forward.1} parent=11 // pred_check
          %p793 = pneg %p300
        $region42: #{encoder_forward.1} parent=11 // pred_check_branch
          %795 = sbr.rel (%p793) target = $region44
        $region43: #{encoder_forward.1} parent=11 // pred_region
          %s797 = ssub.s32 16, 16
          %798 = vsyncadd [#allocation12], %s797
          %s800 = sshll.u32 [#allocation13], 4
          %s801 = int_to_ptr.vmem [resolvable:$true] %s800
          %803 = dma.hbm_to_vmem [thread:$0]  %s19, 16, %s801, [#allocation12]
        $region44: #{encoder_forward.1} parent=11 // pred_fallthru
          _
        // Predicated region
        $region45: #{encoder_forward.1} parent=11 // pred_check
          %p804 = pneg %p321
        $region46: #{encoder_forward.1} parent=11 // pred_check_branch
          %806 = sbr.rel (%p804) target = $region48
        $region47: #{encoder_forward.1} parent=11 // pred_region
          %s808 = ssub.s32 16, 16
          %809 = vsyncadd [#allocation15], %s808
          %s811 = sshll.u32 [#allocation14], 4
          %s812 = int_to_ptr.vmem [resolvable:$true] %s811
          %814 = dma.hbm_to_vmem [thread:$0]  %s21, 16, %s812, [#allocation15]
        $region48: #{encoder_forward.1} parent=11 // pred_fallthru
          _
        // Predicated region
        $region49: #{encoder_forward.1} parent=11 // pred_check
          %p815 = pneg %p342
        $region50: #{encoder_forward.1} parent=11 // pred_check_branch
          %817 = sbr.rel (%p815) target = $region52
        $region51: #{encoder_forward.1} parent=11 // pred_region
          _
        $region52: #{encoder_forward.1} parent=11 // pred_fallthru
          _
        // Predicated region
        $region53: #{encoder_forward.1} parent=11 // pred_check
          %p818 = pneg %p363
        $region54: #{encoder_forward.1} parent=11 // pred_check_branch
          %820 = sbr.rel (%p818) target = $region56
        $region55: #{encoder_forward.1} parent=11 // pred_region
          %s822 = ssub.s32 16, 16
          %823 = vsyncadd [#allocation15], %s822
          %s825 = sshll.u32 [#allocation16], 4
          %s826 = int_to_ptr.vmem [resolvable:$true] %s825
          %828 = dma.hbm_to_vmem [thread:$0]  %s25, 16, %s826, [#allocation15]
        $region56: #{encoder_forward.1} parent=11 // pred_fallthru
          _
        // Predicated region
        $region57: #{encoder_forward.1} parent=11 // pred_check
          %p829 = pneg %p384
        $region58: #{encoder_forward.1} parent=11 // pred_check_branch
          %831 = sbr.rel (%p829) target = $region60
        $region59: #{encoder_forward.1} parent=11 // pred_region
          _
        $region60: #{encoder_forward.1} parent=11 // pred_fallthru
          _
        // Predicated region
        $region61: #{encoder_forward.1} parent=11 // pred_check
          %p832 = pneg %p405
        $region62: #{encoder_forward.1} parent=11 // pred_check_branch
          %834 = sbr.rel (%p832) target = $region64
        $region63: #{encoder_forward.1} parent=11 // pred_region
          %s836 = ssub.s32 16, 16
          %837 = vsyncadd [#allocation18], %s836
          %s839 = sshll.u32 [#allocation17], 4
          %s840 = int_to_ptr.vmem [resolvable:$true] %s839
          %842 = dma.hbm_to_vmem [thread:$0]  %s29, 16, %s840, [#allocation18]
        $region64: #{encoder_forward.1} parent=11 // pred_fallthru
          _
        // Predicated region
        $region65: #{encoder_forward.1} parent=11 // pred_check
          %p843 = pneg %p426
        $region66: #{encoder_forward.1} parent=11 // pred_check_branch
          %845 = sbr.rel (%p843) target = $region68
        $region67: #{encoder_forward.1} parent=11 // pred_region
          _
        $region68: #{encoder_forward.1} parent=11 // pred_fallthru
          _
        // Predicated region
        $region69: #{encoder_forward.1} parent=11 // pred_check
          %p846 = pneg %p447
        $region70: #{encoder_forward.1} parent=11 // pred_check_branch
          %848 = sbr.rel (%p846) target = $region72
        $region71: #{encoder_forward.1} parent=11 // pred_region
          _
        $region72: #{encoder_forward.1} parent=11 // pred_fallthru
          _
        // Predicated region
        $region73: #{encoder_forward.1} parent=11 // pred_check
          %p849 = pneg %p468
        $region74: #{encoder_forward.1} parent=11 // pred_check_branch
          %851 = sbr.rel (%p849) target = $region76
        $region75: #{encoder_forward.1} parent=11 // pred_region
          _
        $region76: #{encoder_forward.1} parent=11 // pred_fallthru
          _
        // Predicated region
        $region77: #{encoder_forward.1} parent=11 // pred_check
          %p852 = pneg %p489
        $region78: #{encoder_forward.1} parent=11 // pred_check_branch
          %854 = sbr.rel (%p852) target = $region80
        $region79: #{encoder_forward.1} parent=11 // pred_region
          %s856 = ssub.s32 16, 16
          %857 = vsyncadd [#allocation18], %s856
          %s859 = sshll.u32 [#allocation19], 4
          %s860 = int_to_ptr.vmem [resolvable:$true] %s859
          %862 = dma.hbm_to_vmem [thread:$0]  %s37, 16, %s860, [#allocation18]
        $region80: #{encoder_forward.1} parent=11 // pred_fallthru
          _
        // Predicated region
        $region81: #{encoder_forward.1} parent=11 // pred_check
          %p863 = pneg %p510
        $region82: #{encoder_forward.1} parent=11 // pred_check_branch
          %865 = sbr.rel (%p863) target = $region84
        $region83: #{encoder_forward.1} parent=11 // pred_region
          _
        $region84: #{encoder_forward.1} parent=11 // pred_fallthru
          _
        // Predicated region
        $region85: #{encoder_forward.1} parent=11 // pred_check
          %p866 = pneg %p531
        $region86: #{encoder_forward.1} parent=11 // pred_check_branch
          %868 = sbr.rel (%p866) target = $region88
        $region87: #{encoder_forward.1} parent=11 // pred_region
          %s870 = ssub.s32 16, 16
          %871 = vsyncadd [#allocation21], %s870
          %s873 = sshll.u32 [#allocation20], 4
          %s874 = int_to_ptr.vmem [resolvable:$true] %s873
          %876 = dma.hbm_to_vmem [thread:$0]  %s41, 16, %s874, [#allocation21]
        $region88: #{encoder_forward.1} parent=11 // pred_fallthru
          _
        // Predicated region
        $region89: #{encoder_forward.1} parent=11 // pred_check
          %p877 = pneg %p552
        $region90: #{encoder_forward.1} parent=11 // pred_check_branch
          %879 = sbr.rel (%p877) target = $region92
        $region91: #{encoder_forward.1} parent=11 // pred_region
          _
        $region92: #{encoder_forward.1} parent=11 // pred_fallthru
          _
        // Predicated region
        $region93: #{encoder_forward.1} parent=11 // pred_check
          %p880 = pneg %p573
        $region94: #{encoder_forward.1} parent=11 // pred_check_branch
          %882 = sbr.rel (%p880) target = $region96
        $region95: #{encoder_forward.1} parent=11 // pred_region
          %s884 = ssub.s32 16, 16
          %885 = vsyncadd [#allocation21], %s884
          %s887 = sshll.u32 [#allocation22], 4
          %s888 = int_to_ptr.vmem [resolvable:$true] %s887
          %890 = dma.hbm_to_vmem [thread:$0]  %s45, 16, %s888, [#allocation21]
        $region96: #{encoder_forward.1} parent=11 // pred_fallthru
          _
        // Predicated region
        $region97: #{encoder_forward.1} parent=11 // pred_check
          %p891 = pneg %p594
        $region98: #{encoder_forward.1} parent=11 // pred_check_branch
          %893 = sbr.rel (%p891) target = $region100
        $region99: #{encoder_forward.1} parent=11 // pred_region
          _
        $region100: #{encoder_forward.1} parent=11 // pred_fallthru
          _
        // Predicated region
        $region101: #{encoder_forward.1} parent=11 // pred_check
          %p894 = pneg %p615
        $region102: #{encoder_forward.1} parent=11 // pred_check_branch
          %896 = sbr.rel (%p894) target = $region104
        $region103: #{encoder_forward.1} parent=11 // pred_region
          %s898 = ssub.s32 16, 16
          %899 = vsyncadd [#allocation24], %s898
          %s901 = sshll.u32 [#allocation23], 4
          %s902 = int_to_ptr.vmem [resolvable:$true] %s901
          %904 = dma.hbm_to_vmem [thread:$0]  %s49, 16, %s902, [#allocation24]
        $region104: #{encoder_forward.1} parent=11 // pred_fallthru
          _
        // Predicated region
        $region105: #{encoder_forward.1} parent=11 // pred_check
          %p905 = pneg %p636
        $region106: #{encoder_forward.1} parent=11 // pred_check_branch
          %907 = sbr.rel (%p905) target = $region108
        $region107: #{encoder_forward.1} parent=11 // pred_region
          _
        $region108: #{encoder_forward.1} parent=11 // pred_fallthru
          _
        // Predicated region
        $region109: #{encoder_forward.1} parent=11 // pred_check
          %p908 = pneg %p657
        $region110: #{encoder_forward.1} parent=11 // pred_check_branch
          %910 = sbr.rel (%p908) target = $region112
        $region111: #{encoder_forward.1} parent=11 // pred_region
          %s912 = ssub.s32 16, 16
          %913 = vsyncadd [#allocation24], %s912
          %s915 = sshll.u32 [#allocation25], 4
          %s916 = int_to_ptr.vmem [resolvable:$true] %s915
          %918 = dma.hbm_to_vmem [thread:$0]  %s53, 16, %s916, [#allocation24]
        $region112: #{encoder_forward.1} parent=11 // pred_fallthru
          _
        // Predicated region
        $region113: #{encoder_forward.1} parent=11 // pred_check
          %p919 = pneg %p678
        $region114: #{encoder_forward.1} parent=11 // pred_check_branch
          %921 = sbr.rel (%p919) target = $region116
        $region115: #{encoder_forward.1} parent=11 // pred_region
          _
        $region116: #{encoder_forward.1} parent=11 // pred_fallthru
          _
        // Predicated region
        $region117: #{encoder_forward.1} parent=11 // pred_check
          %p922 = pneg %p699
        $region118: #{encoder_forward.1} parent=11 // pred_check_branch
          %924 = sbr.rel (%p922) target = $region120
        $region119: #{encoder_forward.1} parent=11 // pred_region
          _
        $region120: #{encoder_forward.1} parent=11 // pred_fallthru
          _
      $region12: #{encoder_forward.1} parent=5 // pred_fallthru
        _
      %p925 = scmp.lt.s32.totalorder %s80, 2
      // Predicated region
      $region121: #{encoder_forward.1} parent=5 // pred_check
        %p926 = pneg %p925
      $region122: #{encoder_forward.1} parent=5 // pred_check_branch
        %928 = sbr.rel (%p926) target = $region124
      $region123: #{encoder_forward.1} parent=5 // pred_region
        // Predicated region
        $region125: #{encoder_forward.1} parent=123 // pred_check
          %p929 = pneg %p100
        $region126: #{encoder_forward.1} parent=123 // pred_check_branch
          %931 = sbr.rel (%p929) target = $region128
        $region127: #{encoder_forward.1} parent=123 // pred_region
          %s932 = sand.u32 %s90, 1
          %s933 = scalar_lea.sflag [#allocation3], %s932
          %s934 = sand.u32 %s90, 1
          %s935 = smul.addr %s934, 8
          %s936 = scalar_lea.vmem [#allocation2], %s935
          %s938 = ssub.s32 128, 128
          %939 = vsyncadd %s933, %s938
          %s940 = smul.addr %s80, 128
          %s941 = scalar_lea.hbm %s1, %s940
          %s943 = sshll.u32 %s936, 4
          %s944 = int_to_ptr.vmem [resolvable:$true] %s943
          %946 = dma.hbm_to_vmem [thread:$0]  %s941, 128, %s944, %s933
        $region128: #{encoder_forward.1} parent=123 // pred_fallthru
          _
        // Predicated region
        $region129: #{encoder_forward.1} parent=123 // pred_check
          %p947 = pneg %p126
        $region130: #{encoder_forward.1} parent=123 // pred_check_branch
          %949 = sbr.rel (%p947) target = $region132
        $region131: #{encoder_forward.1} parent=123 // pred_region
          %s950 = sand.u32 %s80, 1
          %s951 = scalar_lea.sflag [#allocation6], %s950
          %s952 = sand.u32 %s116, 1
          %s953 = scalar_lea.vmem [#allocation5], %s952
          %s955 = ssub.s32 16, 16
          %956 = vsyncadd %s951, %s955
          %s957 = smul.addr %s80, 16
          %s958 = scalar_lea.hbm %s3, %s957
          %s960 = sshll.u32 %s953, 4
          %s961 = int_to_ptr.vmem [resolvable:$true] %s960
          %963 = dma.hbm_to_vmem [thread:$0]  %s958, 16, %s961, %s951
        $region132: #{encoder_forward.1} parent=123 // pred_fallthru
          _
      $region124: #{encoder_forward.1} parent=5 // pred_fallthru
        _
      %p964 = scmp.le.s32.totalorder 1, %s80
      %p965 = scmp.lt.s32.totalorder %s80, 3
      %p966 = pnand %p964, %p965
      %p967 = pneg %p966
      // Predicated region
      $region133: #{encoder_forward.1} parent=5 // pred_check
        _
      $region134: #{encoder_forward.1} parent=5 // pred_check_branch
        %969 = sbr.rel (%p966) target = $region136
      $region135: #{encoder_forward.1} parent=5 // pred_region
        %s970 = ssub.s32 %s80, 1
        %s971 = sand.u32 %s93, 1
        %s972 = scalar_lea.sflag [#allocation3], %s971
        %s973 = sand.u32 %s93, 1
        %s974 = smul.addr %s973, 8
        %s975 = scalar_lea.vmem [#allocation2], %s974
        // Predicated region
        $region137: #{encoder_forward.1} parent=135 // pred_check
          %p976 = pneg %p106
        $region138: #{encoder_forward.1} parent=135 // pred_check_branch
          %978 = sbr.rel (%p976) target = $region140
        $region139: #{encoder_forward.1} parent=135 // pred_region
          %979 = dma.done %s972, 128
        $region140: #{encoder_forward.1} parent=135 // pred_fallthru
          _
        %s980 = sand.u32 %s85, 1
        %s981 = scalar_lea.sflag [#allocation6], %s980
        %s982 = sand.u32 %s119, 1
        %s983 = scalar_lea.vmem [#allocation5], %s982
        // Predicated region
        $region141: #{encoder_forward.1} parent=135 // pred_check
          %p984 = pneg %p132
        $region142: #{encoder_forward.1} parent=135 // pred_check_branch
          %986 = sbr.rel (%p984) target = $region144
        $region143: #{encoder_forward.1} parent=135 // pred_region
          %987 = dma.done %s981, 16
        $region144: #{encoder_forward.1} parent=135 // pred_fallthru
          _
        // Predicated region
        $region145: #{encoder_forward.1} parent=135 // pred_check
          %p988 = pneg %p174
        $region146: #{encoder_forward.1} parent=135 // pred_check_branch
          %990 = sbr.rel (%p988) target = $region148
        $region147: #{encoder_forward.1} parent=135 // pred_region
          %991 = dma.done [#allocation6], 16
        $region148: #{encoder_forward.1} parent=135 // pred_fallthru
          _
        // Predicated region
        $region149: #{encoder_forward.1} parent=135 // pred_check
          %p992 = pneg %p195
        $region150: #{encoder_forward.1} parent=135 // pred_check_branch
          %994 = sbr.rel (%p992) target = $region152
        $region151: #{encoder_forward.1} parent=135 // pred_region
          %995 = dma.done [#allocation9], 16
        $region152: #{encoder_forward.1} parent=135 // pred_fallthru
          _
        // Predicated region
        $region153: #{encoder_forward.1} parent=135 // pred_check
          %p996 = pneg %p237
        $region154: #{encoder_forward.1} parent=135 // pred_check_branch
          %998 = sbr.rel (%p996) target = $region156
        $region155: #{encoder_forward.1} parent=135 // pred_region
          %999 = dma.done [#allocation9], 16
        $region156: #{encoder_forward.1} parent=135 // pred_fallthru
          _
        // Predicated region
        $region157: #{encoder_forward.1} parent=135 // pred_check
          %p1000 = pneg %p279
        $region158: #{encoder_forward.1} parent=135 // pred_check_branch
          %1002 = sbr.rel (%p1000) target = $region160
        $region159: #{encoder_forward.1} parent=135 // pred_region
          %1003 = dma.done [#allocation12], 16
        $region160: #{encoder_forward.1} parent=135 // pred_fallthru
          _
        // Predicated region
        $region161: #{encoder_forward.1} parent=135 // pred_check
          %p1004 = pneg %p300
        $region162: #{encoder_forward.1} parent=135 // pred_check_branch
          %1006 = sbr.rel (%p1004) target = $region164
        $region163: #{encoder_forward.1} parent=135 // pred_region
          %1007 = dma.done [#allocation12], 16
        $region164: #{encoder_forward.1} parent=135 // pred_fallthru
          _
        // Predicated region
        $region165: #{encoder_forward.1} parent=135 // pred_check
          %p1008 = pneg %p321
        $region166: #{encoder_forward.1} parent=135 // pred_check_branch
          %1010 = sbr.rel (%p1008) target = $region168
        $region167: #{encoder_forward.1} parent=135 // pred_region
          %1011 = dma.done [#allocation15], 16
        $region168: #{encoder_forward.1} parent=135 // pred_fallthru
          _
        // Predicated region
        $region169: #{encoder_forward.1} parent=135 // pred_check
          %p1012 = pneg %p363
        $region170: #{encoder_forward.1} parent=135 // pred_check_branch
          %1014 = sbr.rel (%p1012) target = $region172
        $region171: #{encoder_forward.1} parent=135 // pred_region
          %1015 = dma.done [#allocation15], 16
        $region172: #{encoder_forward.1} parent=135 // pred_fallthru
          _
        // Predicated region
        $region173: #{encoder_forward.1} parent=135 // pred_check
          %p1016 = pneg %p405
        $region174: #{encoder_forward.1} parent=135 // pred_check_branch
          %1018 = sbr.rel (%p1016) target = $region176
        $region175: #{encoder_forward.1} parent=135 // pred_region
          %1019 = dma.done [#allocation18], 16
        $region176: #{encoder_forward.1} parent=135 // pred_fallthru
          _
        // Predicated region
        $region177: #{encoder_forward.1} parent=135 // pred_check
          %p1020 = pneg %p489
        $region178: #{encoder_forward.1} parent=135 // pred_check_branch
          %1022 = sbr.rel (%p1020) target = $region180
        $region179: #{encoder_forward.1} parent=135 // pred_region
          %1023 = dma.done [#allocation18], 16
        $region180: #{encoder_forward.1} parent=135 // pred_fallthru
          _
        // Predicated region
        $region181: #{encoder_forward.1} parent=135 // pred_check
          %p1024 = pneg %p531
        $region182: #{encoder_forward.1} parent=135 // pred_check_branch
          %1026 = sbr.rel (%p1024) target = $region184
        $region183: #{encoder_forward.1} parent=135 // pred_region
          %1027 = dma.done [#allocation21], 16
        $region184: #{encoder_forward.1} parent=135 // pred_fallthru
          _
        // Predicated region
        $region185: #{encoder_forward.1} parent=135 // pred_check
          %p1028 = pneg %p573
        $region186: #{encoder_forward.1} parent=135 // pred_check_branch
          %1030 = sbr.rel (%p1028) target = $region188
        $region187: #{encoder_forward.1} parent=135 // pred_region
          %1031 = dma.done [#allocation21], 16
        $region188: #{encoder_forward.1} parent=135 // pred_fallthru
          _
        // Predicated region
        $region189: #{encoder_forward.1} parent=135 // pred_check
          %p1032 = pneg %p615
        $region190: #{encoder_forward.1} parent=135 // pred_check_branch
          %1034 = sbr.rel (%p1032) target = $region192
        $region191: #{encoder_forward.1} parent=135 // pred_region
          %1035 = dma.done [#allocation24], 16
        $region192: #{encoder_forward.1} parent=135 // pred_fallthru
          _
        // Predicated region
        $region193: #{encoder_forward.1} parent=135 // pred_check
          %p1036 = pneg %p657
        $region194: #{encoder_forward.1} parent=135 // pred_check_branch
          %1038 = sbr.rel (%p1036) target = $region196
        $region195: #{encoder_forward.1} parent=135 // pred_region
          %1039 = dma.done [#allocation24], 16
        $region196: #{encoder_forward.1} parent=135 // pred_fallthru
          _
        %s1040 = sand.u32 %s93, 1
        %s1041 = scalar_lea.sflag [#allocation3], %s1040
        %s1042 = sand.u32 %s93, 1
        %s1043 = smul.addr %s1042, 8
        %s1044 = scalar_lea.vmem [#allocation2], %s1043
        %p1045 = pneg %p106
        %p1046 = pneg %p103
        %s1047 = sand.u32 %s85, 1
        %s1048 = scalar_lea.sflag [#allocation6], %s1047
        %s1049 = sand.u32 %s119, 1
        %s1050 = scalar_lea.vmem [#allocation5], %s1049
        %p1051 = pneg %p132
        %p1052 = pneg %p129
        %p1053 = pneg %p153
        %p1054 = pneg %p150
        %p1055 = pneg %p174
        %p1056 = pneg %p171
        %p1057 = pneg %p195
        %p1058 = pneg %p192
        %p1059 = pneg %p216
        %p1060 = pneg %p213
        %p1061 = pneg %p237
        %p1062 = pneg %p234
        %p1063 = pneg %p258
        %p1064 = pneg %p255
        %p1065 = pneg %p279
        %p1066 = pneg %p276
        %p1067 = pneg %p300
        %p1068 = pneg %p297
        %p1069 = pneg %p321
        %p1070 = pneg %p318
        %p1071 = pneg %p342
        %p1072 = pneg %p339
        %p1073 = pneg %p363
        %p1074 = pneg %p360
        %p1075 = pneg %p384
        %p1076 = pneg %p381
        %p1077 = pneg %p405
        %p1078 = pneg %p402
        %p1079 = pneg %p426
        %p1080 = pneg %p423
        %p1081 = pneg %p447
        %p1082 = pneg %p444
        %p1083 = pneg %p468
        %p1084 = pneg %p465
        %p1085 = pneg %p489
        %p1086 = pneg %p486
        %p1087 = pneg %p510
        %p1088 = pneg %p507
        %p1089 = pneg %p531
        %p1090 = pneg %p528
        %p1091 = pneg %p552
        %p1092 = pneg %p549
        %p1093 = pneg %p573
        %p1094 = pneg %p570
        %p1095 = pneg %p594
        %p1096 = pneg %p591
        %p1097 = pneg %p615
        %p1098 = pneg %p612
        %p1099 = pneg %p636
        %p1100 = pneg %p633
        %p1101 = pneg %p657
        %p1102 = pneg %p654
        %p1103 = pneg %p678
        %p1104 = pneg %p675
        %p1105 = pneg %p699
        %p1106 = pneg %p696
        %p1107 = pneg %p725
        %p1108 = pneg %p722
        %s1109 = sand.u32 %s712, 1
        %s1110 = scalar_lea.sflag [#allocation4], %s1109
        %s1111 = sand.u32 %s712, 1
        %s1112 = smul.addr %s1111, 8
        %s1113 = scalar_lea.vmem [#allocation26], %s1112
        %v1114 = vld [vmem:[%s975] sm:$0xff]
        %v1115 = vmul.f32 %v1114, 5.656854
        %v1116 = vld [vmem:[%s5] sm:$0xff]
        %v1117 = vadd.f32 %v1115, %v1116
        %v1118 = vld [vmem:[%s983] sm:$0x1]
        %vm1119 = vcmp.lt.f32.partialorder %v1118, 0.5
        %v1120 = vsel %vm1119, -1e+09, 0.0
        %v1121 = vld [vmem:[#allocation7] sm:$0x1]
        %v1122 = vld [vmem:[#allocation8] sm:$0x1]
        %vm1123 = vcmask 261120
        %v1124 = vsel %vm1123, %v1117, 0.0
        %1125 = vadd.xlane.f32.xlu0 %v1124
        %v1126 = vpop.xlane.xlu0 %1125
        %v1127 = vrcp.pop 32.0
        %v1128 = vmul.f32 %v1126, %v1127
        %v1129 = vmul.f32 %v1117, %v1117
        %v1130 = vsel %vm1123, %v1129, 0.0
        %1131 = vadd.xlane.f32.xlu0 %v1130
        %v1132 = vpop.xlane.xlu0 %1131
        %v1133 = vmul.f32 %v1132, %v1127
        %v1134 = vmul.f32 %v1128, %v1128
        %v1135 = vsub.f32 %v1133, %v1134
        %v1136 = vmax.f32 %v1135, 0.0
        %v1137 = vsub.f32 %v1117, %v1128
        %v1138 = vadd.f32 %v1136, 1e-06
        %v1139 = vrsqrt.pop %v1138
        %v1140 = vmul.f32 %v1137, %v1139
        %v1142 = vlaneseq
        %v1143 = vshrl.u32 %v1142, 7
        %v1144 = vsub.s32 0, %v1143
        %v1145 = vrot.slane %v1121, %v1144
        %v1147 = vmul.f32 %v1140, %v1145
        %v1149 = vlaneseq
        %v1150 = vshrl.u32 %v1149, 7
        %v1151 = vsub.s32 0, %v1150
        %v1152 = vrot.slane %v1122, %v1151
        %v1154 = vadd.f32 %v1147, %v1152
        %v1155 = vld [vmem:[%s11] sm:$0xff]
        %v1156 = vld [vmem:[%s11 + $0x8] sm:$0xff]
        %v1157 = vld [vmem:[%s11 + $0x10] sm:$0xff]
        %v1158 = vld [vmem:[%s11 + $0x18] sm:$0xff]
        %v1159 = vld [vmem:[#allocation10] sm:$0x1]
        %v1161 = vlaneseq
        %v1162 = vshrl.u32 %v1161, 7
        %v1163 = vsub.s32 0, %v1162
        %v1164 = vrot.slane %v1159, %v1163
        %v1167 = vsel %vm1123, %v1154, 0
        %1169 = vmatprep.subr.mxu0 0.0
        %1170 = vmatpush1.msra.mxu0 %v1155
        %1171 = vmatprep.subr.mxu0 0.0
        %1172 = vmatpush1.msra.mxu0 %v1156
        %1173 = vmatprep.subr.mxu0 0.0
        %1174 = vmatpush1.msra.mxu0 %v1157
        %1175 = vmatprep.subr.mxu0 0.0
        %1176 = vmatpush1.msra.mxu0 %v1158
        %1177 = vmatprep.subr.mxu0 0.0
        %1178 = vmatpush1.msra.mxu0 0.0
        %1179 = vmatprep.subr.mxu0 0.0
        %1180 = vmatpush1.msra.mxu0 0.0
        %1181 = vmatprep.subr.mxu0 0.0
        %1182 = vmatpush1.msra.mxu0 0.0
        %1183 = vmatprep.subr.mxu0 0.0
        %1184 = vmatpush1.msra.mxu0 0.0
        %1185 = vmatprep.subr.mxu0 0.0
        %1186 = vmatpush1.msra.mxu0 0.0
        %1187 = vmatprep.subr.mxu0 0.0
        %1188 = vmatpush1.msra.mxu0 0.0
        %1189 = vmatprep.subr.mxu0 0.0
        %1190 = vmatpush1.msra.mxu0 0.0
        %1191 = vmatprep.subr.mxu0 0.0
        %1192 = vmatpush1.msra.mxu0 0.0
        %1193 = vmatprep.subr.mxu0 0.0
        %1194 = vmatpush1.msra.mxu0 0.0
        %1195 = vmatprep.subr.mxu0 0.0
        %1196 = vmatpush1.msra.mxu0 0.0
        %1197 = vmatprep.subr.mxu0 0.0
        %1198 = vmatpush1.msra.mxu0 0.0
        %1199 = vmatprep.subr.mxu0 0.0
        %1200 = vmatpush1.msra.mxu0 0.0
        %1201 = vmatprep.subr.mxu0 0.0
        %1202 = vmatpush1.msra.mxu0 0.0
        %1203 = vmatprep.subr.mxu0 0.0
        %1204 = vmatpush1.msra.mxu0 0.0
        %1205 = vmatprep.subr.mxu0 0.0
        %1206 = vmatpush1.msra.mxu0 0.0
        %1207 = vmatprep.subr.mxu0 0.0
        %1208 = vmatpush1.msra.mxu0 0.0
        %1209 = vmatprep.subr.mxu0 0.0
        %1210 = vmatpush1.msra.mxu0 0.0
        %1211 = vmatprep.subr.mxu0 0.0
        %1212 = vmatpush1.msra.mxu0 0.0
        %1213 = vmatprep.subr.mxu0 0.0
        %1214 = vmatpush1.msra.mxu0 0.0
        %1215 = vmatprep.subr.mxu0 0.0
        %1216 = vmatpush1.msra.mxu0 0.0
        %1217 = vmatprep.subr.mxu0 0.0
        %1218 = vmatpush1.msra.mxu0 0.0
        %1219 = vmatprep.subr.mxu0 0.0
        %1220 = vmatpush1.msra.mxu0 0.0
        %1221 = vmatprep.subr.mxu0 0.0
        %1222 = vmatpush1.msra.mxu0 0.0
        %1223 = vmatprep.subr.mxu0 0.0
        %1224 = vmatpush1.msra.mxu0 0.0
        %1225 = vmatprep.subr.mxu0 0.0
        %1226 = vmatpush1.msra.mxu0 0.0
        %1227 = vmatprep.subr.mxu0 0.0
        %1228 = vmatpush1.msra.mxu0 0.0
        %1229 = vmatprep.subr.mxu0 0.0
        %1230 = vmatpush1.msra.mxu0 0.0
        %1231 = vmatprep.subr.mxu0 0.0
        %1232 = vmatpush1.msra.mxu0 0.0
        %1233 = vmatprep.mubr.f32.mxu0 0.0
        %1234 = vmatmul.mubr.f32.gmra.mrb[0].mxu0 %v1167
        %v1235 = vpop.f32.mrb[0].mxu0
        %v1236 = vadd.f32 %v1164, %v1235
        %v1237 = vpop.f32.mrb[0].mxu0
        %1238 = vdwg.mxu0
        %v1239 = vld [vmem:[%s15] sm:$0xff]
        %v1240 = vld [vmem:[%s15 + $0x8] sm:$0xff]
        %v1241 = vld [vmem:[%s15 + $0x10] sm:$0xff]
        %v1242 = vld [vmem:[%s15 + $0x18] sm:$0xff]
        %v1243 = vmul.f32 %v1236, 0.35355338
        %v1245 = vlaneseq
        %v1246 = vshrl.u32 %v1245, 7
        %v1247 = vsub.s32 0, %v1246
        %v1248 = vrot.slane %v1120, %v1247
        %1251 = vrot.lane.b32.xlu0 %v1236, 96
        %v1252 = vpop.permute.xlu0 %1251
        %vm1253 = vcmask 64512
        %v1255 = vsel %vm1253, %v1243, 0
        %v1257 = vsel %vm1253, %v1252, 0
        %1259 = vmatprep.subr.mxu0 0.0
        %1260 = vmatpush1.xpose.msra.mxu0 %v1257
        %1261 = vmatprep.subr.mxu0 0.0
        %1262 = vmatpush1.xpose.msra.mxu0 0.0
        %1263 = vmatprep.subr.mxu0 0.0
        %1264 = vmatpush1.xpose.msra.mxu0 0.0
        %1265 = vmatprep.subr.mxu0 0.0
        %1266 = vmatpush1.xpose.msra.mxu0 0.0
        %1267 = vmatprep.subr.mxu0 0.0
        %1268 = vmatpush1.xpose.msra.mxu0 0.0
        %1269 = vmatprep.subr.mxu0 0.0
        %1270 = vmatpush1.xpose.msra.mxu0 0.0
        %1271 = vmatprep.subr.mxu0 0.0
        %1272 = vmatpush1.xpose.msra.mxu0 0.0
        %1273 = vmatprep.subr.mxu0 0.0
        %1274 = vmatpush1.xpose.msra.mxu0 0.0
        %1275 = vmatprep.subr.mxu0 0.0
        %1276 = vmatpush1.xpose.msra.mxu0 0.0
        %1277 = vmatprep.subr.mxu0 0.0
        %1278 = vmatpush1.xpose.msra.mxu0 0.0
        %1279 = vmatprep.subr.mxu0 0.0
        %1280 = vmatpush1.xpose.msra.mxu0 0.0
        %1281 = vmatprep.subr.mxu0 0.0
        %1282 = vmatpush1.xpose.msra.mxu0 0.0
        %1283 = vmatprep.subr.mxu0 0.0
        %1284 = vmatpush1.xpose.msra.mxu0 0.0
        %1285 = vmatprep.subr.mxu0 0.0
        %1286 = vmatpush1.xpose.msra.mxu0 0.0
        %1287 = vmatprep.subr.mxu0 0.0
        %1288 = vmatpush1.xpose.msra.mxu0 0.0
        %1289 = vmatprep.subr.mxu0 0.0
        %1290 = vmatpush1.xpose.msra.mxu0 0.0
        %1291 = vmatprep.subr.mxu0 0.0
        %1292 = vmatpush1.xpose.msra.mxu0 0.0
        %1293 = vmatprep.subr.mxu0 0.0
        %1294 = vmatpush1.xpose.msra.mxu0 0.0
        %1295 = vmatprep.subr.mxu0 0.0
        %1296 = vmatpush1.xpose.msra.mxu0 0.0
        %1297 = vmatprep.subr.mxu0 0.0
        %1298 = vmatpush1.xpose.msra.mxu0 0.0
        %1299 = vmatprep.subr.mxu0 0.0
        %1300 = vmatpush1.xpose.msra.mxu0 0.0
        %1301 = vmatprep.subr.mxu0 0.0
        %1302 = vmatpush1.xpose.msra.mxu0 0.0
        %1303 = vmatprep.subr.mxu0 0.0
        %1304 = vmatpush1.xpose.msra.mxu0 0.0
        %1305 = vmatprep.subr.mxu0 0.0
        %1306 = vmatpush1.xpose.msra.mxu0 0.0
        %1307 = vmatprep.subr.mxu0 0.0
        %1308 = vmatpush1.xpose.msra.mxu0 0.0
        %1309 = vmatprep.subr.mxu0 0.0
        %1310 = vmatpush1.xpose.msra.mxu0 0.0
        %1311 = vmatprep.subr.mxu0 0.0
        %1312 = vmatpush1.xpose.msra.mxu0 0.0
        %1313 = vmatprep.subr.mxu0 0.0
        %1314 = vmatpush1.xpose.msra.mxu0 0.0
        %1315 = vmatprep.subr.mxu0 0.0
        %1316 = vmatpush1.xpose.msra.mxu0 0.0
        %1317 = vmatprep.subr.mxu0 0.0
        %1318 = vmatpush1.xpose.msra.mxu0 0.0
        %1319 = vmatprep.subr.mxu0 0.0
        %1320 = vmatpush1.xpose.msra.mxu0 0.0
        %1321 = vmatprep.subr.mxu0 0.0
        %1322 = vmatpush1.xpose.msra.mxu0 0.0
        %1323 = vmatprep.mubr.f32.mxu0 0.0
        %1324 = vmatmul.mubr.f32.gmra.mrb[0].mxu0 %v1255
        %v1325 = vpop.f32.mrb[0].mxu0
        %v1326 = vadd.f32 %v1248, %v1325
        %v1327 = vpop.f32.mrb[0].mxu0
        %1328 = vdwg.mxu0
        %v1329 = vsel %vm1253, %v1326, -inf
        %1330 = vmax.xlane.f32.xlu0 %v1329
        %v1331 = vpop.xlane.xlu0 %1330
        %v1332 = vsub.f32 %v1326, %v1331
        %v1333 = vmul.f32 %v1332, 1.442695
        %v1334 = vpow.pop %v1333
        %v1335 = vsel %vm1253, %v1334, 0.0
        %1336 = vadd.xlane.f32.xlu0 %v1335
        %v1337 = vpop.xlane.xlu0 %1336
        %v1338 = vrcp.pop %v1337
        %v1339 = vmul.f32 %v1334, %v1338
        %1340 = vrot.lane.b32.xlu0 %v1236, 64
        %v1341 = vpop.permute.xlu0 %1340
        %v1344 = vsel %vm1253, %v1339, 0
        %1346 = vmatprep.subr.mxu0 0.0
        %1347 = vmatpush1.msra.mxu0 %v1341
        %1348 = vmatprep.subr.mxu0 0.0
        %1349 = vmatpush1.msra.mxu0 0.0
        %1350 = vmatprep.subr.mxu0 0.0
        %1351 = vmatpush1.msra.mxu0 0.0
        %1352 = vmatprep.subr.mxu0 0.0
        %1353 = vmatpush1.msra.mxu0 0.0
        %1354 = vmatprep.subr.mxu0 0.0
        %1355 = vmatpush1.msra.mxu0 0.0
        %1356 = vmatprep.subr.mxu0 0.0
        %1357 = vmatpush1.msra.mxu0 0.0
        %1358 = vmatprep.subr.mxu0 0.0
        %1359 = vmatpush1.msra.mxu0 0.0
        %1360 = vmatprep.subr.mxu0 0.0
        %1361 = vmatpush1.msra.mxu0 0.0
        %1362 = vmatprep.subr.mxu0 0.0
        %1363 = vmatpush1.msra.mxu0 0.0
        %1364 = vmatprep.subr.mxu0 0.0
        %1365 = vmatpush1.msra.mxu0 0.0
        %1366 = vmatprep.subr.mxu0 0.0
        %1367 = vmatpush1.msra.mxu0 0.0
        %1368 = vmatprep.subr.mxu0 0.0
        %1369 = vmatpush1.msra.mxu0 0.0
        %1370 = vmatprep.subr.mxu0 0.0
        %1371 = vmatpush1.msra.mxu0 0.0
        %1372 = vmatprep.subr.mxu0 0.0
        %1373 = vmatpush1.msra.mxu0 0.0
        %1374 = vmatprep.subr.mxu0 0.0
        %1375 = vmatpush1.msra.mxu0 0.0
        %1376 = vmatprep.subr.mxu0 0.0
        %1377 = vmatpush1.msra.mxu0 0.0
        %1378 = vmatprep.subr.mxu0 0.0
        %1379 = vmatpush1.msra.mxu0 0.0
        %1380 = vmatprep.subr.mxu0 0.0
        %1381 = vmatpush1.msra.mxu0 0.0
        %1382 = vmatprep.subr.mxu0 0.0
        %1383 = vmatpush1.msra.mxu0 0.0
        %1384 = vmatprep.subr.mxu0 0.0
        %1385 = vmatpush1.msra.mxu0 0.0
        %1386 = vmatprep.subr.mxu0 0.0
        %1387 = vmatpush1.msra.mxu0 0.0
        %1388 = vmatprep.subr.mxu0 0.0
        %1389 = vmatpush1.msra.mxu0 0.0
        %1390 = vmatprep.subr.mxu0 0.0
        %1391 = vmatpush1.msra.mxu0 0.0
        %1392 = vmatprep.subr.mxu0 0.0
        %1393 = vmatpush1.msra.mxu0 0.0
        %1394 = vmatprep.subr.mxu0 0.0
        %1395 = vmatpush1.msra.mxu0 0.0
        %1396 = vmatprep.subr.mxu0 0.0
        %1397 = vmatpush1.msra.mxu0 0.0
        %1398 = vmatprep.subr.mxu0 0.0
        %1399 = vmatpush1.msra.mxu0 0.0
        %1400 = vmatprep.subr.mxu0 0.0
        %1401 = vmatpush1.msra.mxu0 0.0
        %1402 = vmatprep.subr.mxu0 0.0
        %1403 = vmatpush1.msra.mxu0 0.0
        %1404 = vmatprep.subr.mxu0 0.0
        %1405 = vmatpush1.msra.mxu0 0.0
        %1406 = vmatprep.subr.mxu0 0.0
        %1407 = vmatpush1.msra.mxu0 0.0
        %1408 = vmatprep.subr.mxu0 0.0
        %1409 = vmatpush1.msra.mxu0 0.0
        %1410 = vmatprep.mubr.f32.mxu0 0.0
        %1411 = vmatmul.mubr.f32.gmra.mrb[0].mxu0 %v1344
        %v1412 = vpop.f32.mrb[0].mxu0
        %v1413 = vadd.f32 0.0, %v1412
        %v1414 = vpop.f32.mrb[0].mxu0
        %1415 = vdwg.mxu0
        %1416 = vrot.lane.b32.xlu0 %v1243, 120
        %v1417 = vpop.permute.xlu0 %1416
        %1418 = vrot.lane.b32.xlu0 %v1236, 88
        %v1419 = vpop.permute.xlu0 %1418
        %v1420 = vsel %vm1253, %v1417, 0
        %v1422 = vsel %vm1253, %v1419, 0
        %1424 = vmatprep.subr.mxu0 0.0
        %1425 = vmatpush1.xpose.msra.mxu0 %v1422
        %1426 = vmatprep.subr.mxu0 0.0
        %1427 = vmatpush1.xpose.msra.mxu0 0.0
        %1428 = vmatprep.subr.mxu0 0.0
        %1429 = vmatpush1.xpose.msra.mxu0 0.0
        %1430 = vmatprep.subr.mxu0 0.0
        %1431 = vmatpush1.xpose.msra.mxu0 0.0
        %1432 = vmatprep.subr.mxu0 0.0
        %1433 = vmatpush1.xpose.msra.mxu0 0.0
        %1434 = vmatprep.subr.mxu0 0.0
        %1435 = vmatpush1.xpose.msra.mxu0 0.0
        %1436 = vmatprep.subr.mxu0 0.0
        %1437 = vmatpush1.xpose.msra.mxu0 0.0
        %1438 = vmatprep.subr.mxu0 0.0
        %1439 = vmatpush1.xpose.msra.mxu0 0.0
        %1440 = vmatprep.subr.mxu0 0.0
        %1441 = vmatpush1.xpose.msra.mxu0 0.0
        %1442 = vmatprep.subr.mxu0 0.0
        %1443 = vmatpush1.xpose.msra.mxu0 0.0
        %1444 = vmatprep.subr.mxu0 0.0
        %1445 = vmatpush1.xpose.msra.mxu0 0.0
        %1446 = vmatprep.subr.mxu0 0.0
        %1447 = vmatpush1.xpose.msra.mxu0 0.0
        %1448 = vmatprep.subr.mxu0 0.0
        %1449 = vmatpush1.xpose.msra.mxu0 0.0
        %1450 = vmatprep.subr.mxu0 0.0
        %1451 = vmatpush1.xpose.msra.mxu0 0.0
        %1452 = vmatprep.subr.mxu0 0.0
        %1453 = vmatpush1.xpose.msra.mxu0 0.0
        %1454 = vmatprep.subr.mxu0 0.0
        %1455 = vmatpush1.xpose.msra.mxu0 0.0
        %1456 = vmatprep.subr.mxu0 0.0
        %1457 = vmatpush1.xpose.msra.mxu0 0.0
        %1458 = vmatprep.subr.mxu0 0.0
        %1459 = vmatpush1.xpose.msra.mxu0 0.0
        %1460 = vmatprep.subr.mxu0 0.0
        %1461 = vmatpush1.xpose.msra.mxu0 0.0
        %1462 = vmatprep.subr.mxu0 0.0
        %1463 = vmatpush1.xpose.msra.mxu0 0.0
        %1464 = vmatprep.subr.mxu0 0.0
        %1465 = vmatpush1.xpose.msra.mxu0 0.0
        %1466 = vmatprep.subr.mxu0 0.0
        %1467 = vmatpush1.xpose.msra.mxu0 0.0
        %1468 = vmatprep.subr.mxu0 0.0
        %1469 = vmatpush1.xpose.msra.mxu0 0.0
        %1470 = vmatprep.subr.mxu0 0.0
        %1471 = vmatpush1.xpose.msra.mxu0 0.0
        %1472 = vmatprep.subr.mxu0 0.0
        %1473 = vmatpush1.xpose.msra.mxu0 0.0
        %1474 = vmatprep.subr.mxu0 0.0
        %1475 = vmatpush1.xpose.msra.mxu0 0.0
        %1476 = vmatprep.subr.mxu0 0.0
        %1477 = vmatpush1.xpose.msra.mxu0 0.0
        %1478 = vmatprep.subr.mxu0 0.0
        %1479 = vmatpush1.xpose.msra.mxu0 0.0
        %1480 = vmatprep.subr.mxu0 0.0
        %1481 = vmatpush1.xpose.msra.mxu0 0.0
        %1482 = vmatprep.subr.mxu0 0.0
        %1483 = vmatpush1.xpose.msra.mxu0 0.0
        %1484 = vmatprep.subr.mxu0 0.0
        %1485 = vmatpush1.xpose.msra.mxu0 0.0
        %1486 = vmatprep.subr.mxu0 0.0
        %1487 = vmatpush1.xpose.msra.mxu0 0.0
        %1488 = vmatprep.mubr.f32.mxu0 0.0
        %1489 = vmatmul.mubr.f32.gmra.mrb[0].mxu0 %v1420
        %v1490 = vpop.f32.mrb[0].mxu0
        %v1491 = vadd.f32 %v1248, %v1490
        %v1492 = vpop.f32.mrb[0].mxu0
        %1493 = vdwg.mxu0
        %v1494 = vsel %vm1253, %v1491, -inf
        %1495 = vmax.xlane.f32.xlu0 %v1494
        %v1496 = vpop.xlane.xlu0 %1495
        %v1497 = vsub.f32 %v1491, %v1496
        %v1498 = vmul.f32 %v1497, 1.442695
        %v1499 = vpow.pop %v1498
        %v1500 = vsel %vm1253, %v1499, 0.0
        %1501 = vadd.xlane.f32.xlu0 %v1500
        %v1502 = vpop.xlane.xlu0 %1501
        %v1503 = vrcp.pop %v1502
        %v1504 = vmul.f32 %v1499, %v1503
        %1505 = vrot.lane.b32.xlu0 %v1236, 56
        %v1506 = vpop.permute.xlu0 %1505
        %v1509 = vsel %vm1253, %v1504, 0
        %1511 = vmatprep.subr.mxu0 0.0
        %1512 = vmatpush1.msra.mxu0 %v1506
        %1513 = vmatprep.subr.mxu0 0.0
        %1514 = vmatpush1.msra.mxu0 0.0
        %1515 = vmatprep.subr.mxu0 0.0
        %1516 = vmatpush1.msra.mxu0 0.0
        %1517 = vmatprep.subr.mxu0 0.0
        %1518 = vmatpush1.msra.mxu0 0.0
        %1519 = vmatprep.subr.mxu0 0.0
        %1520 = vmatpush1.msra.mxu0 0.0
        %1521 = vmatprep.subr.mxu0 0.0
        %1522 = vmatpush1.msra.mxu0 0.0
        %1523 = vmatprep.subr.mxu0 0.0
        %1524 = vmatpush1.msra.mxu0 0.0
        %1525 = vmatprep.subr.mxu0 0.0
        %1526 = vmatpush1.msra.mxu0 0.0
        %1527 = vmatprep.subr.mxu0 0.0
        %1528 = vmatpush1.msra.mxu0 0.0
        %1529 = vmatprep.subr.mxu0 0.0
        %1530 = vmatpush1.msra.mxu0 0.0
        %1531 = vmatprep.subr.mxu0 0.0
        %1532 = vmatpush1.msra.mxu0 0.0
        %1533 = vmatprep.subr.mxu0 0.0
        %1534 = vmatpush1.msra.mxu0 0.0
        %1535 = vmatprep.subr.mxu0 0.0
        %1536 = vmatpush1.msra.mxu0 0.0
        %1537 = vmatprep.subr.mxu0 0.0
        %1538 = vmatpush1.msra.mxu0 0.0
        %1539 = vmatprep.subr.mxu0 0.0
        %1540 = vmatpush1.msra.mxu0 0.0
        %1541 = vmatprep.subr.mxu0 0.0
        %1542 = vmatpush1.msra.mxu0 0.0
        %1543 = vmatprep.subr.mxu0 0.0
        %1544 = vmatpush1.msra.mxu0 0.0
        %1545 = vmatprep.subr.mxu0 0.0
        %1546 = vmatpush1.msra.mxu0 0.0
        %1547 = vmatprep.subr.mxu0 0.0
        %1548 = vmatpush1.msra.mxu0 0.0
        %1549 = vmatprep.subr.mxu0 0.0
        %1550 = vmatpush1.msra.mxu0 0.0
        %1551 = vmatprep.subr.mxu0 0.0
        %1552 = vmatpush1.msra.mxu0 0.0
        %1553 = vmatprep.subr.mxu0 0.0
        %1554 = vmatpush1.msra.mxu0 0.0
        %1555 = vmatprep.subr.mxu0 0.0
        %1556 = vmatpush1.msra.mxu0 0.0
        %1557 = vmatprep.subr.mxu0 0.0
        %1558 = vmatpush1.msra.mxu0 0.0
        %1559 = vmatprep.subr.mxu0 0.0
        %1560 = vmatpush1.msra.mxu0 0.0
        %1561 = vmatprep.subr.mxu0 0.0
        %1562 = vmatpush1.msra.mxu0 0.0
        %1563 = vmatprep.subr.mxu0 0.0
        %1564 = vmatpush1.msra.mxu0 0.0
        %1565 = vmatprep.subr.mxu0 0.0
        %1566 = vmatpush1.msra.mxu0 0.0
        %1567 = vmatprep.subr.mxu0 0.0
        %1568 = vmatpush1.msra.mxu0 0.0
        %1569 = vmatprep.subr.mxu0 0.0
        %1570 = vmatpush1.msra.mxu0 0.0
        %1571 = vmatprep.subr.mxu0 0.0
        %1572 = vmatpush1.msra.mxu0 0.0
        %1573 = vmatprep.subr.mxu0 0.0
        %1574 = vmatpush1.msra.mxu0 0.0
        %1575 = vmatprep.mubr.f32.mxu0 0.0
        %1576 = vmatmul.mubr.f32.gmra.mrb[0].mxu0 %v1509
        %v1577 = vpop.f32.mrb[0].mxu0
        %v1578 = vadd.f32 0.0, %v1577
        %v1579 = vpop.f32.mrb[0].mxu0
        %1580 = vdwg.mxu0
        %v1582 = vsel %vm1253, %v1578, 0
        %1584 = vmatprep.subr.mxu0 0.0
        %1585 = vmatpush1.msra.mxu0 %v1240
        %1586 = vmatprep.subr.mxu0 0.0
        %1587 = vmatpush1.msra.mxu0 0.0
        %1588 = vmatprep.subr.mxu0 0.0
        %1589 = vmatpush1.msra.mxu0 0.0
        %1590 = vmatprep.subr.mxu0 0.0
        %1591 = vmatpush1.msra.mxu0 0.0
        %1592 = vmatprep.subr.mxu0 0.0
        %1593 = vmatpush1.msra.mxu0 0.0
        %1594 = vmatprep.subr.mxu0 0.0
        %1595 = vmatpush1.msra.mxu0 0.0
        %1596 = vmatprep.subr.mxu0 0.0
        %1597 = vmatpush1.msra.mxu0 0.0
        %1598 = vmatprep.subr.mxu0 0.0
        %1599 = vmatpush1.msra.mxu0 0.0
        %1600 = vmatprep.subr.mxu0 0.0
        %1601 = vmatpush1.msra.mxu0 0.0
        %1602 = vmatprep.subr.mxu0 0.0
        %1603 = vmatpush1.msra.mxu0 0.0
        %1604 = vmatprep.subr.mxu0 0.0
        %1605 = vmatpush1.msra.mxu0 0.0
        %1606 = vmatprep.subr.mxu0 0.0
        %1607 = vmatpush1.msra.mxu0 0.0
        %1608 = vmatprep.subr.mxu0 0.0
        %1609 = vmatpush1.msra.mxu0 0.0
        %1610 = vmatprep.subr.mxu0 0.0
        %1611 = vmatpush1.msra.mxu0 0.0
        %1612 = vmatprep.subr.mxu0 0.0
        %1613 = vmatpush1.msra.mxu0 0.0
        %1614 = vmatprep.subr.mxu0 0.0
        %1615 = vmatpush1.msra.mxu0 0.0
        %1616 = vmatprep.subr.mxu0 0.0
        %1617 = vmatpush1.msra.mxu0 0.0
        %1618 = vmatprep.subr.mxu0 0.0
        %1619 = vmatpush1.msra.mxu0 0.0
        %1620 = vmatprep.subr.mxu0 0.0
        %1621 = vmatpush1.msra.mxu0 0.0
        %1622 = vmatprep.subr.mxu0 0.0
        %1623 = vmatpush1.msra.mxu0 0.0
        %1624 = vmatprep.subr.mxu0 0.0
        %1625 = vmatpush1.msra.mxu0 0.0
        %1626 = vmatprep.subr.mxu0 0.0
        %1627 = vmatpush1.msra.mxu0 0.0
        %1628 = vmatprep.subr.mxu0 0.0
        %1629 = vmatpush1.msra.mxu0 0.0
        %1630 = vmatprep.subr.mxu0 0.0
        %1631 = vmatpush1.msra.mxu0 0.0
        %1632 = vmatprep.subr.mxu0 0.0
        %1633 = vmatpush1.msra.mxu0 0.0
        %1634 = vmatprep.subr.mxu0 0.0
        %1635 = vmatpush1.msra.mxu0 0.0
        %1636 = vmatprep.subr.mxu0 0.0
        %1637 = vmatpush1.msra.mxu0 0.0
        %1638 = vmatprep.subr.mxu0 0.0
        %1639 = vmatpush1.msra.mxu0 0.0
        %1640 = vmatprep.subr.mxu0 0.0
        %1641 = vmatpush1.msra.mxu0 0.0
        %1642 = vmatprep.subr.mxu0 0.0
        %1643 = vmatpush1.msra.mxu0 0.0
        %1644 = vmatprep.subr.mxu0 0.0
        %1645 = vmatpush1.msra.mxu0 0.0
        %1646 = vmatprep.subr.mxu0 0.0
        %1647 = vmatpush1.msra.mxu0 0.0
        %1648 = vmatprep.mubr.f32.mxu0 0.0
        %1649 = vmatmul.mubr.f32.gmra.mrb[0].mxu0 %v1582
        %v1650 = vpop.f32.mrb[0].mxu0
        %v1651 = vadd.f32 0.0, %v1650
        %v1652 = vpop.f32.mrb[0].mxu0
        %1653 = vdwg.mxu0
        %v1655 = vsel %vm1253, %v1413, 0
        %1657 = vmatprep.subr.mxu0 0.0
        %1658 = vmatpush1.msra.mxu0 %v1239
        %1659 = vmatprep.subr.mxu0 0.0
        %1660 = vmatpush1.msra.mxu0 0.0
        %1661 = vmatprep.subr.mxu0 0.0
        %1662 = vmatpush1.msra.mxu0 0.0
        %1663 = vmatprep.subr.mxu0 0.0
        %1664 = vmatpush1.msra.mxu0 0.0
        %1665 = vmatprep.subr.mxu0 0.0
        %1666 = vmatpush1.msra.mxu0 0.0
        %1667 = vmatprep.subr.mxu0 0.0
        %1668 = vmatpush1.msra.mxu0 0.0
        %1669 = vmatprep.subr.mxu0 0.0
        %1670 = vmatpush1.msra.mxu0 0.0
        %1671 = vmatprep.subr.mxu0 0.0
        %1672 = vmatpush1.msra.mxu0 0.0
        %1673 = vmatprep.subr.mxu0 0.0
        %1674 = vmatpush1.msra.mxu0 0.0
        %1675 = vmatprep.subr.mxu0 0.0
        %1676 = vmatpush1.msra.mxu0 0.0
        %1677 = vmatprep.subr.mxu0 0.0
        %1678 = vmatpush1.msra.mxu0 0.0
        %1679 = vmatprep.subr.mxu0 0.0
        %1680 = vmatpush1.msra.mxu0 0.0
        %1681 = vmatprep.subr.mxu0 0.0
        %1682 = vmatpush1.msra.mxu0 0.0
        %1683 = vmatprep.subr.mxu0 0.0
        %1684 = vmatpush1.msra.mxu0 0.0
        %1685 = vmatprep.subr.mxu0 0.0
        %1686 = vmatpush1.msra.mxu0 0.0
        %1687 = vmatprep.subr.mxu0 0.0
        %1688 = vmatpush1.msra.mxu0 0.0
        %1689 = vmatprep.subr.mxu0 0.0
        %1690 = vmatpush1.msra.mxu0 0.0
        %1691 = vmatprep.subr.mxu0 0.0
        %1692 = vmatpush1.msra.mxu0 0.0
        %1693 = vmatprep.subr.mxu0 0.0
        %1694 = vmatpush1.msra.mxu0 0.0
        %1695 = vmatprep.subr.mxu0 0.0
        %1696 = vmatpush1.msra.mxu0 0.0
        %1697 = vmatprep.subr.mxu0 0.0
        %1698 = vmatpush1.msra.mxu0 0.0
        %1699 = vmatprep.subr.mxu0 0.0
        %1700 = vmatpush1.msra.mxu0 0.0
        %1701 = vmatprep.subr.mxu0 0.0
        %1702 = vmatpush1.msra.mxu0 0.0
        %1703 = vmatprep.subr.mxu0 0.0
        %1704 = vmatpush1.msra.mxu0 0.0
        %1705 = vmatprep.subr.mxu0 0.0
        %1706 = vmatpush1.msra.mxu0 0.0
        %1707 = vmatprep.subr.mxu0 0.0
        %1708 = vmatpush1.msra.mxu0 0.0
        %1709 = vmatprep.subr.mxu0 0.0
        %1710 = vmatpush1.msra.mxu0 0.0
        %1711 = vmatprep.subr.mxu0 0.0
        %1712 = vmatpush1.msra.mxu0 0.0
        %1713 = vmatprep.subr.mxu0 0.0
        %1714 = vmatpush1.msra.mxu0 0.0
        %1715 = vmatprep.subr.mxu0 0.0
        %1716 = vmatpush1.msra.mxu0 0.0
        %1717 = vmatprep.subr.mxu0 0.0
        %1718 = vmatpush1.msra.mxu0 0.0
        %1719 = vmatprep.subr.mxu0 0.0
        %1720 = vmatpush1.msra.mxu0 0.0
        %1721 = vmatprep.mubr.f32.mxu0 0.0
        %1722 = vmatmul.mubr.f32.gmra.mrb[0].mxu0 %v1655
        %v1723 = vpop.f32.mrb[0].mxu0
        %v1724 = vadd.f32 %v1651, %v1723
        %v1725 = vpop.f32.mrb[0].mxu0
        %1726 = vdwg.mxu0
        %1727 = vrot.lane.b32.xlu0 %v1243, 112
        %v1728 = vpop.permute.xlu0 %1727
        %1729 = vrot.lane.b32.xlu0 %v1236, 80
        %v1730 = vpop.permute.xlu0 %1729
        %v1731 = vsel %vm1253, %v1728, 0
        %v1733 = vsel %vm1253, %v1730, 0
        %1735 = vmatprep.subr.mxu0 0.0
        %1736 = vmatpush1.xpose.msra.mxu0 %v1733
        %1737 = vmatprep.subr.mxu0 0.0
        %1738 = vmatpush1.xpose.msra.mxu0 0.0
        %1739 = vmatprep.subr.mxu0 0.0
        %1740 = vmatpush1.xpose.msra.mxu0 0.0
        %1741 = vmatprep.subr.mxu0 0.0
        %1742 = vmatpush1.xpose.msra.mxu0 0.0
        %1743 = vmatprep.subr.mxu0 0.0
        %1744 = vmatpush1.xpose.msra.mxu0 0.0
        %1745 = vmatprep.subr.mxu0 0.0
        %1746 = vmatpush1.xpose.msra.mxu0 0.0
        %1747 = vmatprep.subr.mxu0 0.0
        %1748 = vmatpush1.xpose.msra.mxu0 0.0
        %1749 = vmatprep.subr.mxu0 0.0
        %1750 = vmatpush1.xpose.msra.mxu0 0.0
        %1751 = vmatprep.subr.mxu0 0.0
        %1752 = vmatpush1.xpose.msra.mxu0 0.0
        %1753 = vmatprep.subr.mxu0 0.0
        %1754 = vmatpush1.xpose.msra.mxu0 0.0
        %1755 = vmatprep.subr.mxu0 0.0
        %1756 = vmatpush1.xpose.msra.mxu0 0.0
        %1757 = vmatprep.subr.mxu0 0.0
        %1758 = vmatpush1.xpose.msra.mxu0 0.0
        %1759 = vmatprep.subr.mxu0 0.0
        %1760 = vmatpush1.xpose.msra.mxu0 0.0
        %1761 = vmatprep.subr.mxu0 0.0
        %1762 = vmatpush1.xpose.msra.mxu0 0.0
        %1763 = vmatprep.subr.mxu0 0.0
        %1764 = vmatpush1.xpose.msra.mxu0 0.0
        %1765 = vmatprep.subr.mxu0 0.0
        %1766 = vmatpush1.xpose.msra.mxu0 0.0
        %1767 = vmatprep.subr.mxu0 0.0
        %1768 = vmatpush1.xpose.msra.mxu0 0.0
        %1769 = vmatprep.subr.mxu0 0.0
        %1770 = vmatpush1.xpose.msra.mxu0 0.0
        %1771 = vmatprep.subr.mxu0 0.0
        %1772 = vmatpush1.xpose.msra.mxu0 0.0
        %1773 = vmatprep.subr.mxu0 0.0
        %1774 = vmatpush1.xpose.msra.mxu0 0.0
        %1775 = vmatprep.subr.mxu0 0.0
        %1776 = vmatpush1.xpose.msra.mxu0 0.0
        %1777 = vmatprep.subr.mxu0 0.0
        %1778 = vmatpush1.xpose.msra.mxu0 0.0
        %1779 = vmatprep.subr.mxu0 0.0
        %1780 = vmatpush1.xpose.msra.mxu0 0.0
        %1781 = vmatprep.subr.mxu0 0.0
        %1782 = vmatpush1.xpose.msra.mxu0 0.0
        %1783 = vmatprep.subr.mxu0 0.0
        %1784 = vmatpush1.xpose.msra.mxu0 0.0
        %1785 = vmatprep.subr.mxu0 0.0
        %1786 = vmatpush1.xpose.msra.mxu0 0.0
        %1787 = vmatprep.subr.mxu0 0.0
        %1788 = vmatpush1.xpose.msra.mxu0 0.0
        %1789 = vmatprep.subr.mxu0 0.0
        %1790 = vmatpush1.xpose.msra.mxu0 0.0
        %1791 = vmatprep.subr.mxu0 0.0
        %1792 = vmatpush1.xpose.msra.mxu0 0.0
        %1793 = vmatprep.subr.mxu0 0.0
        %1794 = vmatpush1.xpose.msra.mxu0 0.0
        %1795 = vmatprep.subr.mxu0 0.0
        %1796 = vmatpush1.xpose.msra.mxu0 0.0
        %1797 = vmatprep.subr.mxu0 0.0
        %1798 = vmatpush1.xpose.msra.mxu0 0.0
        %1799 = vmatprep.mubr.f32.mxu0 0.0
        %1800 = vmatmul.mubr.f32.gmra.mrb[0].mxu0 %v1731
        %v1801 = vpop.f32.mrb[0].mxu0
        %v1802 = vadd.f32 %v1248, %v1801
        %v1803 = vpop.f32.mrb[0].mxu0
        %1804 = vdwg.mxu0
        %v1805 = vsel %vm1253, %v1802, -inf
        %1806 = vmax.xlane.f32.xlu0 %v1805
        %v1807 = vpop.xlane.xlu0 %1806
        %v1808 = vsub.f32 %v1802, %v1807
        %v1809 = vmul.f32 %v1808, 1.442695
        %v1810 = vpow.pop %v1809
        %v1811 = vsel %vm1253, %v1810, 0.0
        %1812 = vadd.xlane.f32.xlu0 %v1811
        %v1813 = vpop.xlane.xlu0 %1812
        %v1814 = vrcp.pop %v1813
        %v1815 = vmul.f32 %v1810, %v1814
        %1816 = vrot.lane.b32.xlu0 %v1236, 48
        %v1817 = vpop.permute.xlu0 %1816
        %v1820 = vsel %vm1253, %v1815, 0
        %1822 = vmatprep.subr.mxu0 0.0
        %1823 = vmatpush1.msra.mxu0 %v1817
        %1824 = vmatprep.subr.mxu0 0.0
        %1825 = vmatpush1.msra.mxu0 0.0
        %1826 = vmatprep.subr.mxu0 0.0
        %1827 = vmatpush1.msra.mxu0 0.0
        %1828 = vmatprep.subr.mxu0 0.0
        %1829 = vmatpush1.msra.mxu0 0.0
        %1830 = vmatprep.subr.mxu0 0.0
        %1831 = vmatpush1.msra.mxu0 0.0
        %1832 = vmatprep.subr.mxu0 0.0
        %1833 = vmatpush1.msra.mxu0 0.0
        %1834 = vmatprep.subr.mxu0 0.0
        %1835 = vmatpush1.msra.mxu0 0.0
        %1836 = vmatprep.subr.mxu0 0.0
        %1837 = vmatpush1.msra.mxu0 0.0
        %1838 = vmatprep.subr.mxu0 0.0
        %1839 = vmatpush1.msra.mxu0 0.0
        %1840 = vmatprep.subr.mxu0 0.0
        %1841 = vmatpush1.msra.mxu0 0.0
        %1842 = vmatprep.subr.mxu0 0.0
        %1843 = vmatpush1.msra.mxu0 0.0
        %1844 = vmatprep.subr.mxu0 0.0
        %1845 = vmatpush1.msra.mxu0 0.0
        %1846 = vmatprep.subr.mxu0 0.0
        %1847 = vmatpush1.msra.mxu0 0.0
        %1848 = vmatprep.subr.mxu0 0.0
        %1849 = vmatpush1.msra.mxu0 0.0
        %1850 = vmatprep.subr.mxu0 0.0
        %1851 = vmatpush1.msra.mxu0 0.0
        %1852 = vmatprep.subr.mxu0 0.0
        %1853 = vmatpush1.msra.mxu0 0.0
        %1854 = vmatprep.subr.mxu0 0.0
        %1855 = vmatpush1.msra.mxu0 0.0
        %1856 = vmatprep.subr.mxu0 0.0
        %1857 = vmatpush1.msra.mxu0 0.0
        %1858 = vmatprep.subr.mxu0 0.0
        %1859 = vmatpush1.msra.mxu0 0.0
        %1860 = vmatprep.subr.mxu0 0.0
        %1861 = vmatpush1.msra.mxu0 0.0
        %1862 = vmatprep.subr.mxu0 0.0
        %1863 = vmatpush1.msra.mxu0 0.0
        %1864 = vmatprep.subr.mxu0 0.0
        %1865 = vmatpush1.msra.mxu0 0.0
        %1866 = vmatprep.subr.mxu0 0.0
        %1867 = vmatpush1.msra.mxu0 0.0
        %1868 = vmatprep.subr.mxu0 0.0
        %1869 = vmatpush1.msra.mxu0 0.0
        %1870 = vmatprep.subr.mxu0 0.0
        %1871 = vmatpush1.msra.mxu0 0.0
        %1872 = vmatprep.subr.mxu0 0.0
        %1873 = vmatpush1.msra.mxu0 0.0
        %1874 = vmatprep.subr.mxu0 0.0
        %1875 = vmatpush1.msra.mxu0 0.0
        %1876 = vmatprep.subr.mxu0 0.0
        %1877 = vmatpush1.msra.mxu0 0.0
        %1878 = vmatprep.subr.mxu0 0.0
        %1879 = vmatpush1.msra.mxu0 0.0
        %1880 = vmatprep.subr.mxu0 0.0
        %1881 = vmatpush1.msra.mxu0 0.0
        %1882 = vmatprep.subr.mxu0 0.0
        %1883 = vmatpush1.msra.mxu0 0.0
        %1884 = vmatprep.subr.mxu0 0.0
        %1885 = vmatpush1.msra.mxu0 0.0
        %1886 = vmatprep.mubr.f32.mxu0 0.0
        %1887 = vmatmul.mubr.f32.gmra.mrb[0].mxu0 %v1820
        %v1888 = vpop.f32.mrb[0].mxu0
        %v1889 = vadd.f32 0.0, %v1888
        %v1890 = vpop.f32.mrb[0].mxu0
        %1891 = vdwg.mxu0
        %v1893 = vsel %vm1253, %v1889, 0
        %1895 = vmatprep.subr.mxu0 0.0
        %1896 = vmatpush1.msra.mxu0 %v1241
        %1897 = vmatprep.subr.mxu0 0.0
        %1898 = vmatpush1.msra.mxu0 0.0
        %1899 = vmatprep.subr.mxu0 0.0
        %1900 = vmatpush1.msra.mxu0 0.0
        %1901 = vmatprep.subr.mxu0 0.0
        %1902 = vmatpush1.msra.mxu0 0.0
        %1903 = vmatprep.subr.mxu0 0.0
        %1904 = vmatpush1.msra.mxu0 0.0
        %1905 = vmatprep.subr.mxu0 0.0
        %1906 = vmatpush1.msra.mxu0 0.0
        %1907 = vmatprep.subr.mxu0 0.0
        %1908 = vmatpush1.msra.mxu0 0.0
        %1909 = vmatprep.subr.mxu0 0.0
        %1910 = vmatpush1.msra.mxu0 0.0
        %1911 = vmatprep.subr.mxu0 0.0
        %1912 = vmatpush1.msra.mxu0 0.0
        %1913 = vmatprep.subr.mxu0 0.0
        %1914 = vmatpush1.msra.mxu0 0.0
        %1915 = vmatprep.subr.mxu0 0.0
        %1916 = vmatpush1.msra.mxu0 0.0
        %1917 = vmatprep.subr.mxu0 0.0
        %1918 = vmatpush1.msra.mxu0 0.0
        %1919 = vmatprep.subr.mxu0 0.0
        %1920 = vmatpush1.msra.mxu0 0.0
        %1921 = vmatprep.subr.mxu0 0.0
        %1922 = vmatpush1.msra.mxu0 0.0
        %1923 = vmatprep.subr.mxu0 0.0
        %1924 = vmatpush1.msra.mxu0 0.0
        %1925 = vmatprep.subr.mxu0 0.0
        %1926 = vmatpush1.msra.mxu0 0.0
        %1927 = vmatprep.subr.mxu0 0.0
        %1928 = vmatpush1.msra.mxu0 0.0
        %1929 = vmatprep.subr.mxu0 0.0
        %1930 = vmatpush1.msra.mxu0 0.0
        %1931 = vmatprep.subr.mxu0 0.0
        %1932 = vmatpush1.msra.mxu0 0.0
        %1933 = vmatprep.subr.mxu0 0.0
        %1934 = vmatpush1.msra.mxu0 0.0
        %1935 = vmatprep.subr.mxu0 0.0
        %1936 = vmatpush1.msra.mxu0 0.0
        %1937 = vmatprep.subr.mxu0 0.0
        %1938 = vmatpush1.msra.mxu0 0.0
        %1939 = vmatprep.subr.mxu0 0.0
        %1940 = vmatpush1.msra.mxu0 0.0
        %1941 = vmatprep.subr.mxu0 0.0
        %1942 = vmatpush1.msra.mxu0 0.0
        %1943 = vmatprep.subr.mxu0 0.0
        %1944 = vmatpush1.msra.mxu0 0.0
        %1945 = vmatprep.subr.mxu0 0.0
        %1946 = vmatpush1.msra.mxu0 0.0
        %1947 = vmatprep.subr.mxu0 0.0
        %1948 = vmatpush1.msra.mxu0 0.0
        %1949 = vmatprep.subr.mxu0 0.0
        %1950 = vmatpush1.msra.mxu0 0.0
        %1951 = vmatprep.subr.mxu0 0.0
        %1952 = vmatpush1.msra.mxu0 0.0
        %1953 = vmatprep.subr.mxu0 0.0
        %1954 = vmatpush1.msra.mxu0 0.0
        %1955 = vmatprep.subr.mxu0 0.0
        %1956 = vmatpush1.msra.mxu0 0.0
        %1957 = vmatprep.subr.mxu0 0.0
        %1958 = vmatpush1.msra.mxu0 0.0
        %1959 = vmatprep.mubr.f32.mxu0 0.0
        %1960 = vmatmul.mubr.f32.gmra.mrb[0].mxu0 %v1893
        %v1961 = vpop.f32.mrb[0].mxu0
        %v1962 = vadd.f32 0.0, %v1961
        %v1963 = vpop.f32.mrb[0].mxu0
        %1964 = vdwg.mxu0
        %v1965 = vadd.f32 %v1724, %v1962
        %1966 = vrot.lane.b32.xlu0 %v1243, 104
        %v1967 = vpop.permute.xlu0 %1966
        %1968 = vrot.lane.b32.xlu0 %v1236, 72
        %v1969 = vpop.permute.xlu0 %1968
        %v1970 = vsel %vm1253, %v1967, 0
        %v1972 = vsel %vm1253, %v1969, 0
        %1974 = vmatprep.subr.mxu0 0.0
        %1975 = vmatpush1.xpose.msra.mxu0 %v1972
        %1976 = vmatprep.subr.mxu0 0.0
        %1977 = vmatpush1.xpose.msra.mxu0 0.0
        %1978 = vmatprep.subr.mxu0 0.0
        %1979 = vmatpush1.xpose.msra.mxu0 0.0
        %1980 = vmatprep.subr.mxu0 0.0
        %1981 = vmatpush1.xpose.msra.mxu0 0.0
        %1982 = vmatprep.subr.mxu0 0.0
        %1983 = vmatpush1.xpose.msra.mxu0 0.0
        %1984 = vmatprep.subr.mxu0 0.0
        %1985 = vmatpush1.xpose.msra.mxu0 0.0
        %1986 = vmatprep.subr.mxu0 0.0
        %1987 = vmatpush1.xpose.msra.mxu0 0.0
        %1988 = vmatprep.subr.mxu0 0.0
        %1989 = vmatpush1.xpose.msra.mxu0 0.0
        %1990 = vmatprep.subr.mxu0 0.0
        %1991 = vmatpush1.xpose.msra.mxu0 0.0
        %1992 = vmatprep.subr.mxu0 0.0
        %1993 = vmatpush1.xpose.msra.mxu0 0.0
        %1994 = vmatprep.subr.mxu0 0.0
        %1995 = vmatpush1.xpose.msra.mxu0 0.0
        %1996 = vmatprep.subr.mxu0 0.0
        %1997 = vmatpush1.xpose.msra.mxu0 0.0
        %1998 = vmatprep.subr.mxu0 0.0
        %1999 = vmatpush1.xpose.msra.mxu0 0.0
        %2000 = vmatprep.subr.mxu0 0.0
        %2001 = vmatpush1.xpose.msra.mxu0 0.0
        %2002 = vmatprep.subr.mxu0 0.0
        %2003 = vmatpush1.xpose.msra.mxu0 0.0
        %2004 = vmatprep.subr.mxu0 0.0
        %2005 = vmatpush1.xpose.msra.mxu0 0.0
        %2006 = vmatprep.subr.mxu0 0.0
        %2007 = vmatpush1.xpose.msra.mxu0 0.0
        %2008 = vmatprep.subr.mxu0 0.0
        %2009 = vmatpush1.xpose.msra.mxu0 0.0
        %2010 = vmatprep.subr.mxu0 0.0
        %2011 = vmatpush1.xpose.msra.mxu0 0.0
        %2012 = vmatprep.subr.mxu0 0.0
        %2013 = vmatpush1.xpose.msra.mxu0 0.0
        %2014 = vmatprep.subr.mxu0 0.0
        %2015 = vmatpush1.xpose.msra.mxu0 0.0
        %2016 = vmatprep.subr.mxu0 0.0
        %2017 = vmatpush1.xpose.msra.mxu0 0.0
        %2018 = vmatprep.subr.mxu0 0.0
        %2019 = vmatpush1.xpose.msra.mxu0 0.0
        %2020 = vmatprep.subr.mxu0 0.0
        %2021 = vmatpush1.xpose.msra.mxu0 0.0
        %2022 = vmatprep.subr.mxu0 0.0
        %2023 = vmatpush1.xpose.msra.mxu0 0.0
        %2024 = vmatprep.subr.mxu0 0.0
        %2025 = vmatpush1.xpose.msra.mxu0 0.0
        %2026 = vmatprep.subr.mxu0 0.0
        %2027 = vmatpush1.xpose.msra.mxu0 0.0
        %2028 = vmatprep.subr.mxu0 0.0
        %2029 = vmatpush1.xpose.msra.mxu0 0.0
        %2030 = vmatprep.subr.mxu0 0.0
        %2031 = vmatpush1.xpose.msra.mxu0 0.0
        %2032 = vmatprep.subr.mxu0 0.0
        %2033 = vmatpush1.xpose.msra.mxu0 0.0
        %2034 = vmatprep.subr.mxu0 0.0
        %2035 = vmatpush1.xpose.msra.mxu0 0.0
        %2036 = vmatprep.subr.mxu0 0.0
        %2037 = vmatpush1.xpose.msra.mxu0 0.0
        %2038 = vmatprep.mubr.f32.mxu0 0.0
        %2039 = vmatmul.mubr.f32.gmra.mrb[0].mxu0 %v1970
        %v2040 = vpop.f32.mrb[0].mxu0
        %v2041 = vadd.f32 %v1248, %v2040
        %v2042 = vpop.f32.mrb[0].mxu0
        %2043 = vdwg.mxu0
        %v2044 = vsel %vm1253, %v2041, -inf
        %2045 = vmax.xlane.f32.xlu0 %v2044
        %v2046 = vpop.xlane.xlu0 %2045
        %v2047 = vsub.f32 %v2041, %v2046
        %v2048 = vmul.f32 %v2047, 1.442695
        %v2049 = vpow.pop %v2048
        %v2050 = vsel %vm1253, %v2049, 0.0
        %2051 = vadd.xlane.f32.xlu0 %v2050
        %v2052 = vpop.xlane.xlu0 %2051
        %v2053 = vrcp.pop %v2052
        %v2054 = vmul.f32 %v2049, %v2053
        %2055 = vrot.lane.b32.xlu0 %v1236, 40
        %v2056 = vpop.permute.xlu0 %2055
        %v2059 = vsel %vm1253, %v2054, 0
        %2061 = vmatprep.subr.mxu0 0.0
        %2062 = vmatpush1.msra.mxu0 %v2056
        %2063 = vmatprep.subr.mxu0 0.0
        %2064 = vmatpush1.msra.mxu0 0.0
        %2065 = vmatprep.subr.mxu0 0.0
        %2066 = vmatpush1.msra.mxu0 0.0
        %2067 = vmatprep.subr.mxu0 0.0
        %2068 = vmatpush1.msra.mxu0 0.0
        %2069 = vmatprep.subr.mxu0 0.0
        %2070 = vmatpush1.msra.mxu0 0.0
        %2071 = vmatprep.subr.mxu0 0.0
        %2072 = vmatpush1.msra.mxu0 0.0
        %2073 = vmatprep.subr.mxu0 0.0
        %2074 = vmatpush1.msra.mxu0 0.0
        %2075 = vmatprep.subr.mxu0 0.0
        %2076 = vmatpush1.msra.mxu0 0.0
        %2077 = vmatprep.subr.mxu0 0.0
        %2078 = vmatpush1.msra.mxu0 0.0
        %2079 = vmatprep.subr.mxu0 0.0
        %2080 = vmatpush1.msra.mxu0 0.0
        %2081 = vmatprep.subr.mxu0 0.0
        %2082 = vmatpush1.msra.mxu0 0.0
        %2083 = vmatprep.subr.mxu0 0.0
        %2084 = vmatpush1.msra.mxu0 0.0
        %2085 = vmatprep.subr.mxu0 0.0
        %2086 = vmatpush1.msra.mxu0 0.0
        %2087 = vmatprep.subr.mxu0 0.0
        %2088 = vmatpush1.msra.mxu0 0.0
        %2089 = vmatprep.subr.mxu0 0.0
        %2090 = vmatpush1.msra.mxu0 0.0
        %2091 = vmatprep.subr.mxu0 0.0
        %2092 = vmatpush1.msra.mxu0 0.0
        %2093 = vmatprep.subr.mxu0 0.0
        %2094 = vmatpush1.msra.mxu0 0.0
        %2095 = vmatprep.subr.mxu0 0.0
        %2096 = vmatpush1.msra.mxu0 0.0
        %2097 = vmatprep.subr.mxu0 0.0
        %2098 = vmatpush1.msra.mxu0 0.0
        %2099 = vmatprep.subr.mxu0 0.0
        %2100 = vmatpush1.msra.mxu0 0.0
        %2101 = vmatprep.subr.mxu0 0.0
        %2102 = vmatpush1.msra.mxu0 0.0
        %2103 = vmatprep.subr.mxu0 0.0
        %2104 = vmatpush1.msra.mxu0 0.0
        %2105 = vmatprep.subr.mxu0 0.0
        %2106 = vmatpush1.msra.mxu0 0.0
        %2107 = vmatprep.subr.mxu0 0.0
        %2108 = vmatpush1.msra.mxu0 0.0
        %2109 = vmatprep.subr.mxu0 0.0
        %2110 = vmatpush1.msra.mxu0 0.0
        %2111 = vmatprep.subr.mxu0 0.0
        %2112 = vmatpush1.msra.mxu0 0.0
        %2113 = vmatprep.subr.mxu0 0.0
        %2114 = vmatpush1.msra.mxu0 0.0
        %2115 = vmatprep.subr.mxu0 0.0
        %2116 = vmatpush1.msra.mxu0 0.0
        %2117 = vmatprep.subr.mxu0 0.0
        %2118 = vmatpush1.msra.mxu0 0.0
        %2119 = vmatprep.subr.mxu0 0.0
        %2120 = vmatpush1.msra.mxu0 0.0
        %2121 = vmatprep.subr.mxu0 0.0
        %2122 = vmatpush1.msra.mxu0 0.0
        %2123 = vmatprep.subr.mxu0 0.0
        %2124 = vmatpush1.msra.mxu0 0.0
        %2125 = vmatprep.mubr.f32.mxu0 0.0
        %2126 = vmatmul.mubr.f32.gmra.mrb[0].mxu0 %v2059
        %v2127 = vpop.f32.mrb[0].mxu0
        %v2128 = vadd.f32 0.0, %v2127
        %v2129 = vpop.f32.mrb[0].mxu0
        %2130 = vdwg.mxu0
        %v2132 = vsel %vm1253, %v2128, 0
        %2134 = vmatprep.subr.mxu0 0.0
        %2135 = vmatpush1.msra.mxu0 %v1242
        %2136 = vmatprep.subr.mxu0 0.0
        %2137 = vmatpush1.msra.mxu0 0.0
        %2138 = vmatprep.subr.mxu0 0.0
        %2139 = vmatpush1.msra.mxu0 0.0
        %2140 = vmatprep.subr.mxu0 0.0
        %2141 = vmatpush1.msra.mxu0 0.0
        %2142 = vmatprep.subr.mxu0 0.0
        %2143 = vmatpush1.msra.mxu0 0.0
        %2144 = vmatprep.subr.mxu0 0.0
        %2145 = vmatpush1.msra.mxu0 0.0
        %2146 = vmatprep.subr.mxu0 0.0
        %2147 = vmatpush1.msra.mxu0 0.0
        %2148 = vmatprep.subr.mxu0 0.0
        %2149 = vmatpush1.msra.mxu0 0.0
        %2150 = vmatprep.subr.mxu0 0.0
        %2151 = vmatpush1.msra.mxu0 0.0
        %2152 = vmatprep.subr.mxu0 0.0
        %2153 = vmatpush1.msra.mxu0 0.0
        %2154 = vmatprep.subr.mxu0 0.0
        %2155 = vmatpush1.msra.mxu0 0.0
        %2156 = vmatprep.subr.mxu0 0.0
        %2157 = vmatpush1.msra.mxu0 0.0
        %2158 = vmatprep.subr.mxu0 0.0
        %2159 = vmatpush1.msra.mxu0 0.0
        %2160 = vmatprep.subr.mxu0 0.0
        %2161 = vmatpush1.msra.mxu0 0.0
        %2162 = vmatprep.subr.mxu0 0.0
        %2163 = vmatpush1.msra.mxu0 0.0
        %2164 = vmatprep.subr.mxu0 0.0
        %2165 = vmatpush1.msra.mxu0 0.0
        %2166 = vmatprep.subr.mxu0 0.0
        %2167 = vmatpush1.msra.mxu0 0.0
        %2168 = vmatprep.subr.mxu0 0.0
        %2169 = vmatpush1.msra.mxu0 0.0
        %2170 = vmatprep.subr.mxu0 0.0
        %2171 = vmatpush1.msra.mxu0 0.0
        %2172 = vmatprep.subr.mxu0 0.0
        %2173 = vmatpush1.msra.mxu0 0.0
        %2174 = vmatprep.subr.mxu0 0.0
        %2175 = vmatpush1.msra.mxu0 0.0
        %2176 = vmatprep.subr.mxu0 0.0
        %2177 = vmatpush1.msra.mxu0 0.0
        %2178 = vmatprep.subr.mxu0 0.0
        %2179 = vmatpush1.msra.mxu0 0.0
        %2180 = vmatprep.subr.mxu0 0.0
        %2181 = vmatpush1.msra.mxu0 0.0
        %2182 = vmatprep.subr.mxu0 0.0
        %2183 = vmatpush1.msra.mxu0 0.0
        %2184 = vmatprep.subr.mxu0 0.0
        %2185 = vmatpush1.msra.mxu0 0.0
        %2186 = vmatprep.subr.mxu0 0.0
        %2187 = vmatpush1.msra.mxu0 0.0
        %2188 = vmatprep.subr.mxu0 0.0
        %2189 = vmatpush1.msra.mxu0 0.0
        %2190 = vmatprep.subr.mxu0 0.0
        %2191 = vmatpush1.msra.mxu0 0.0
        %2192 = vmatprep.subr.mxu0 0.0
        %2193 = vmatpush1.msra.mxu0 0.0
        %2194 = vmatprep.subr.mxu0 0.0
        %2195 = vmatpush1.msra.mxu0 0.0
        %2196 = vmatprep.subr.mxu0 0.0
        %2197 = vmatpush1.msra.mxu0 0.0
        %2198 = vmatprep.mubr.f32.mxu0 0.0
        %2199 = vmatmul.mubr.f32.gmra.mrb[0].mxu0 %v2132
        %v2200 = vpop.f32.mrb[0].mxu0
        %v2201 = vadd.f32 0.0, %v2200
        %v2202 = vpop.f32.mrb[0].mxu0
        %2203 = vdwg.mxu0
        %v2204 = vadd.f32 %v1965, %v2201
        %v2205 = vadd.f32 %v1117, %v2204
        %v2206 = vld [vmem:[#allocation11] sm:$0x1]
        %v2208 = vlaneseq
        %v2209 = vshrl.u32 %v2208, 7
        %v2210 = vsub.s32 0, %v2209
        %v2211 = vrot.slane %v2206, %v2210
        %v2213 = vadd.f32 %v2205, %v2211
        %v2214 = vld [vmem:[#allocation13] sm:$0x1]
        %v2215 = vld [vmem:[#allocation14] sm:$0x1]
        %v2216 = vsel %vm1123, %v2213, 0.0
        %2217 = vadd.xlane.f32.xlu0 %v2216
        %v2218 = vpop.xlane.xlu0 %2217
        %v2219 = vmul.f32 %v2218, %v1127
        %v2220 = vmul.f32 %v2213, %v2213
        %v2221 = vsel %vm1123, %v2220, 0.0
        %2222 = vadd.xlane.f32.xlu0 %v2221
        %v2223 = vpop.xlane.xlu0 %2222
        %v2224 = vmul.f32 %v2223, %v1127
        %v2225 = vmul.f32 %v2219, %v2219
        %v2226 = vsub.f32 %v2224, %v2225
        %v2227 = vmax.f32 %v2226, 0.0
        %v2228 = vsub.f32 %v2213, %v2219
        %v2229 = vadd.f32 %v2227, 1e-06
        %v2230 = vrsqrt.pop %v2229
        %v2231 = vmul.f32 %v2228, %v2230
        %v2233 = vlaneseq
        %v2234 = vshrl.u32 %v2233, 7
        %v2235 = vsub.s32 0, %v2234
        %v2236 = vrot.slane %v2214, %v2235
        %v2238 = vmul.f32 %v2231, %v2236
        %v2240 = vlaneseq
        %v2241 = vshrl.u32 %v2240, 7
        %v2242 = vsub.s32 0, %v2241
        %v2243 = vrot.slane %v2215, %v2242
        %v2245 = vadd.f32 %v2238, %v2243
        %v2246 = vld [vmem:[%s23] sm:$0xff]
        %v2247 = vld [vmem:[%s23 + $0x8] sm:$0xff]
        %v2248 = vld [vmem:[%s23 + $0x10] sm:$0xff]
        %v2249 = vld [vmem:[%s23 + $0x18] sm:$0xff]
        %v2250 = vld [vmem:[#allocation16] sm:$0x1]
        %v2252 = vlaneseq
        %v2253 = vshrl.u32 %v2252, 7
        %v2254 = vsub.s32 0, %v2253
        %v2255 = vrot.slane %v2250, %v2254
        %v2258 = vsel %vm1123, %v2245, 0
        %2260 = vmatprep.subr.mxu0 0.0
        %2261 = vmatpush1.msra.mxu0 %v2246
        %2262 = vmatprep.subr.mxu0 0.0
        %2263 = vmatpush1.msra.mxu0 %v2247
        %2264 = vmatprep.subr.mxu0 0.0
        %2265 = vmatpush1.msra.mxu0 %v2248
        %2266 = vmatprep.subr.mxu0 0.0
        %2267 = vmatpush1.msra.mxu0 %v2249
        %2268 = vmatprep.subr.mxu0 0.0
        %2269 = vmatpush1.msra.mxu0 0.0
        %2270 = vmatprep.subr.mxu0 0.0
        %2271 = vmatpush1.msra.mxu0 0.0
        %2272 = vmatprep.subr.mxu0 0.0
        %2273 = vmatpush1.msra.mxu0 0.0
        %2274 = vmatprep.subr.mxu0 0.0
        %2275 = vmatpush1.msra.mxu0 0.0
        %2276 = vmatprep.subr.mxu0 0.0
        %2277 = vmatpush1.msra.mxu0 0.0
        %2278 = vmatprep.subr.mxu0 0.0
        %2279 = vmatpush1.msra.mxu0 0.0
        %2280 = vmatprep.subr.mxu0 0.0
        %2281 = vmatpush1.msra.mxu0 0.0
        %2282 = vmatprep.subr.mxu0 0.0
        %2283 = vmatpush1.msra.mxu0 0.0
        %2284 = vmatprep.subr.mxu0 0.0
        %2285 = vmatpush1.msra.mxu0 0.0
        %2286 = vmatprep.subr.mxu0 0.0
        %2287 = vmatpush1.msra.mxu0 0.0
        %2288 = vmatprep.subr.mxu0 0.0
        %2289 = vmatpush1.msra.mxu0 0.0
        %2290 = vmatprep.subr.mxu0 0.0
        %2291 = vmatpush1.msra.mxu0 0.0
        %2292 = vmatprep.subr.mxu0 0.0
        %2293 = vmatpush1.msra.mxu0 0.0
        %2294 = vmatprep.subr.mxu0 0.0
        %2295 = vmatpush1.msra.mxu0 0.0
        %2296 = vmatprep.subr.mxu0 0.0
        %2297 = vmatpush1.msra.mxu0 0.0
        %2298 = vmatprep.subr.mxu0 0.0
        %2299 = vmatpush1.msra.mxu0 0.0
        %2300 = vmatprep.subr.mxu0 0.0
        %2301 = vmatpush1.msra.mxu0 0.0
        %2302 = vmatprep.subr.mxu0 0.0
        %2303 = vmatpush1.msra.mxu0 0.0
        %2304 = vmatprep.subr.mxu0 0.0
        %2305 = vmatpush1.msra.mxu0 0.0
        %2306 = vmatprep.subr.mxu0 0.0
        %2307 = vmatpush1.msra.mxu0 0.0
        %2308 = vmatprep.subr.mxu0 0.0
        %2309 = vmatpush1.msra.mxu0 0.0
        %2310 = vmatprep.subr.mxu0 0.0
        %2311 = vmatpush1.msra.mxu0 0.0
        %2312 = vmatprep.subr.mxu0 0.0
        %2313 = vmatpush1.msra.mxu0 0.0
        %2314 = vmatprep.subr.mxu0 0.0
        %2315 = vmatpush1.msra.mxu0 0.0
        %2316 = vmatprep.subr.mxu0 0.0
        %2317 = vmatpush1.msra.mxu0 0.0
        %2318 = vmatprep.subr.mxu0 0.0
        %2319 = vmatpush1.msra.mxu0 0.0
        %2320 = vmatprep.subr.mxu0 0.0
        %2321 = vmatpush1.msra.mxu0 0.0
        %2322 = vmatprep.subr.mxu0 0.0
        %2323 = vmatpush1.msra.mxu0 0.0
        %2324 = vmatprep.mubr.f32.mxu0 0.0
        %2325 = vmatmul.mubr.f32.gmra.mrb[0].mxu0 %v2258
        %v2326 = vpop.f32.mrb[0].mxu0
        %v2327 = vadd.f32 %v2255, %v2326
        %v2328 = vpop.f32.mrb[0].mxu0
        %2329 = vdwg.mxu0
        %v2330 = vmax.f32 %v2327, 0.0
        %v2331 = vld [vmem:[%s27] sm:$0xff]
        %v2332 = vld [vmem:[%s27 + $0x8] sm:$0xff]
        %v2333 = vld [vmem:[%s27 + $0x10] sm:$0xff]
        %v2334 = vld [vmem:[%s27 + $0x18] sm:$0xff]
        %v2335 = vld [vmem:[%s27 + $0x20] sm:$0xff]
        %v2336 = vld [vmem:[%s27 + $0x28] sm:$0xff]
        %v2337 = vld [vmem:[%s27 + $0x30] sm:$0xff]
        %v2338 = vld [vmem:[%s27 + $0x38] sm:$0xff]
        %vm2339 = vcmask 523264
        %v2341 = vsel %vm2339, %v2330, 0
        %2343 = vmatprep.subr.mxu0 0.0
        %2344 = vmatpush1.msra.mxu0 %v2331
        %2345 = vmatprep.subr.mxu0 0.0
        %2346 = vmatpush1.msra.mxu0 %v2332
        %2347 = vmatprep.subr.mxu0 0.0
        %2348 = vmatpush1.msra.mxu0 %v2333
        %2349 = vmatprep.subr.mxu0 0.0
        %2350 = vmatpush1.msra.mxu0 %v2334
        %2351 = vmatprep.subr.mxu0 0.0
        %2352 = vmatpush1.msra.mxu0 %v2335
        %2353 = vmatprep.subr.mxu0 0.0
        %2354 = vmatpush1.msra.mxu0 %v2336
        %2355 = vmatprep.subr.mxu0 0.0
        %2356 = vmatpush1.msra.mxu0 %v2337
        %2357 = vmatprep.subr.mxu0 0.0
        %2358 = vmatpush1.msra.mxu0 %v2338
        %2359 = vmatprep.subr.mxu0 0.0
        %2360 = vmatpush1.msra.mxu0 0.0
        %2361 = vmatprep.subr.mxu0 0.0
        %2362 = vmatpush1.msra.mxu0 0.0
        %2363 = vmatprep.subr.mxu0 0.0
        %2364 = vmatpush1.msra.mxu0 0.0
        %2365 = vmatprep.subr.mxu0 0.0
        %2366 = vmatpush1.msra.mxu0 0.0
        %2367 = vmatprep.subr.mxu0 0.0
        %2368 = vmatpush1.msra.mxu0 0.0
        %2369 = vmatprep.subr.mxu0 0.0
        %2370 = vmatpush1.msra.mxu0 0.0
        %2371 = vmatprep.subr.mxu0 0.0
        %2372 = vmatpush1.msra.mxu0 0.0
        %2373 = vmatprep.subr.mxu0 0.0
        %2374 = vmatpush1.msra.mxu0 0.0
        %2375 = vmatprep.subr.mxu0 0.0
        %2376 = vmatpush1.msra.mxu0 0.0
        %2377 = vmatprep.subr.mxu0 0.0
        %2378 = vmatpush1.msra.mxu0 0.0
        %2379 = vmatprep.subr.mxu0 0.0
        %2380 = vmatpush1.msra.mxu0 0.0
        %2381 = vmatprep.subr.mxu0 0.0
        %2382 = vmatpush1.msra.mxu0 0.0
        %2383 = vmatprep.subr.mxu0 0.0
        %2384 = vmatpush1.msra.mxu0 0.0
        %2385 = vmatprep.subr.mxu0 0.0
        %2386 = vmatpush1.msra.mxu0 0.0
        %2387 = vmatprep.subr.mxu0 0.0
        %2388 = vmatpush1.msra.mxu0 0.0
        %2389 = vmatprep.subr.mxu0 0.0
        %2390 = vmatpush1.msra.mxu0 0.0
        %2391 = vmatprep.subr.mxu0 0.0
        %2392 = vmatpush1.msra.mxu0 0.0
        %2393 = vmatprep.subr.mxu0 0.0
        %2394 = vmatpush1.msra.mxu0 0.0
        %2395 = vmatprep.subr.mxu0 0.0
        %2396 = vmatpush1.msra.mxu0 0.0
        %2397 = vmatprep.subr.mxu0 0.0
        %2398 = vmatpush1.msra.mxu0 0.0
        %2399 = vmatprep.subr.mxu0 0.0
        %2400 = vmatpush1.msra.mxu0 0.0
        %2401 = vmatprep.subr.mxu0 0.0
        %2402 = vmatpush1.msra.mxu0 0.0
        %2403 = vmatprep.subr.mxu0 0.0
        %2404 = vmatpush1.msra.mxu0 0.0
        %2405 = vmatprep.subr.mxu0 0.0
        %2406 = vmatpush1.msra.mxu0 0.0
        %2407 = vmatprep.mubr.f32.mxu0 0.0
        %2408 = vmatmul.mubr.f32.gmra.mrb[0].mxu0 %v2341
        %v2409 = vpop.f32.mrb[0].mxu0
        %v2410 = vadd.f32 0.0, %v2409
        %v2411 = vpop.f32.mrb[0].mxu0
        %2412 = vdwg.mxu0
        %v2413 = vadd.f32 %v2213, %v2410
        %v2414 = vld [vmem:[#allocation17] sm:$0x1]
        %v2416 = vlaneseq
        %v2417 = vshrl.u32 %v2416, 7
        %v2418 = vsub.s32 0, %v2417
        %v2419 = vrot.slane %v2414, %v2418
        %v2421 = vadd.f32 %v2413, %v2419
        %v2422 = vld [vmem:[%s31] sm:$0x1]
        %v2423 = vld [vmem:[%s33] sm:$0x1]
        %v2424 = vsel %vm1123, %v2421, 0.0
        %2425 = vadd.xlane.f32.xlu0 %v2424
        %v2426 = vpop.xlane.xlu0 %2425
        %v2427 = vmul.f32 %v2426, %v1127
        %v2428 = vmul.f32 %v2421, %v2421
        %v2429 = vsel %vm1123, %v2428, 0.0
        %2430 = vadd.xlane.f32.xlu0 %v2429
        %v2431 = vpop.xlane.xlu0 %2430
        %v2432 = vmul.f32 %v2431, %v1127
        %v2433 = vmul.f32 %v2427, %v2427
        %v2434 = vsub.f32 %v2432, %v2433
        %v2435 = vmax.f32 %v2434, 0.0
        %v2436 = vsub.f32 %v2421, %v2427
        %v2437 = vadd.f32 %v2435, 1e-06
        %v2438 = vrsqrt.pop %v2437
        %v2439 = vmul.f32 %v2436, %v2438
        %v2441 = vlaneseq
        %v2442 = vshrl.u32 %v2441, 7
        %v2443 = vsub.s32 0, %v2442
        %v2444 = vrot.slane %v2422, %v2443
        %v2446 = vmul.f32 %v2439, %v2444
        %v2448 = vlaneseq
        %v2449 = vshrl.u32 %v2448, 7
        %v2450 = vsub.s32 0, %v2449
        %v2451 = vrot.slane %v2423, %v2450
        %v2453 = vadd.f32 %v2446, %v2451
        %v2454 = vld [vmem:[%s35] sm:$0xff]
        %v2455 = vld [vmem:[%s35 + $0x8] sm:$0xff]
        %v2456 = vld [vmem:[%s35 + $0x10] sm:$0xff]
        %v2457 = vld [vmem:[%s35 + $0x18] sm:$0xff]
        %v2458 = vld [vmem:[#allocation19] sm:$0x1]
        %v2460 = vlaneseq
        %v2461 = vshrl.u32 %v2460, 7
        %v2462 = vsub.s32 0, %v2461
        %v2463 = vrot.slane %v2458, %v2462
        %v2466 = vsel %vm1123, %v2453, 0
        %2468 = vmatprep.subr.mxu0 0.0
        %2469 = vmatpush1.msra.mxu0 %v2454
        %2470 = vmatprep.subr.mxu0 0.0
        %2471 = vmatpush1.msra.mxu0 %v2455
        %2472 = vmatprep.subr.mxu0 0.0
        %2473 = vmatpush1.msra.mxu0 %v2456
        %2474 = vmatprep.subr.mxu0 0.0
        %2475 = vmatpush1.msra.mxu0 %v2457
        %2476 = vmatprep.subr.mxu0 0.0
        %2477 = vmatpush1.msra.mxu0 0.0
        %2478 = vmatprep.subr.mxu0 0.0
        %2479 = vmatpush1.msra.mxu0 0.0
        %2480 = vmatprep.subr.mxu0 0.0
        %2481 = vmatpush1.msra.mxu0 0.0
        %2482 = vmatprep.subr.mxu0 0.0
        %2483 = vmatpush1.msra.mxu0 0.0
        %2484 = vmatprep.subr.mxu0 0.0
        %2485 = vmatpush1.msra.mxu0 0.0
        %2486 = vmatprep.subr.mxu0 0.0
        %2487 = vmatpush1.msra.mxu0 0.0
        %2488 = vmatprep.subr.mxu0 0.0
        %2489 = vmatpush1.msra.mxu0 0.0
        %2490 = vmatprep.subr.mxu0 0.0
        %2491 = vmatpush1.msra.mxu0 0.0
        %2492 = vmatprep.subr.mxu0 0.0
        %2493 = vmatpush1.msra.mxu0 0.0
        %2494 = vmatprep.subr.mxu0 0.0
        %2495 = vmatpush1.msra.mxu0 0.0
        %2496 = vmatprep.subr.mxu0 0.0
        %2497 = vmatpush1.msra.mxu0 0.0
        %2498 = vmatprep.subr.mxu0 0.0
        %2499 = vmatpush1.msra.mxu0 0.0
        %2500 = vmatprep.subr.mxu0 0.0
        %2501 = vmatpush1.msra.mxu0 0.0
        %2502 = vmatprep.subr.mxu0 0.0
        %2503 = vmatpush1.msra.mxu0 0.0
        %2504 = vmatprep.subr.mxu0 0.0
        %2505 = vmatpush1.msra.mxu0 0.0
        %2506 = vmatprep.subr.mxu0 0.0
        %2507 = vmatpush1.msra.mxu0 0.0
        %2508 = vmatprep.subr.mxu0 0.0
        %2509 = vmatpush1.msra.mxu0 0.0
        %2510 = vmatprep.subr.mxu0 0.0
        %2511 = vmatpush1.msra.mxu0 0.0
        %2512 = vmatprep.subr.mxu0 0.0
        %2513 = vmatpush1.msra.mxu0 0.0
        %2514 = vmatprep.subr.mxu0 0.0
        %2515 = vmatpush1.msra.mxu0 0.0
        %2516 = vmatprep.subr.mxu0 0.0
        %2517 = vmatpush1.msra.mxu0 0.0
        %2518 = vmatprep.subr.mxu0 0.0
        %2519 = vmatpush1.msra.mxu0 0.0
        %2520 = vmatprep.subr.mxu0 0.0
        %2521 = vmatpush1.msra.mxu0 0.0
        %2522 = vmatprep.subr.mxu0 0.0
        %2523 = vmatpush1.msra.mxu0 0.0
        %2524 = vmatprep.subr.mxu0 0.0
        %2525 = vmatpush1.msra.mxu0 0.0
        %2526 = vmatprep.subr.mxu0 0.0
        %2527 = vmatpush1.msra.mxu0 0.0
        %2528 = vmatprep.subr.mxu0 0.0
        %2529 = vmatpush1.msra.mxu0 0.0
        %2530 = vmatprep.subr.mxu0 0.0
        %2531 = vmatpush1.msra.mxu0 0.0
        %2532 = vmatprep.mubr.f32.mxu0 0.0
        %2533 = vmatmul.mubr.f32.gmra.mrb[0].mxu0 %v2466
        %v2534 = vpop.f32.mrb[0].mxu0
        %v2535 = vadd.f32 %v2463, %v2534
        %v2536 = vpop.f32.mrb[0].mxu0
        %2537 = vdwg.mxu0
        %v2538 = vld [vmem:[%s39] sm:$0xff]
        %v2539 = vld [vmem:[%s39 + $0x8] sm:$0xff]
        %v2540 = vld [vmem:[%s39 + $0x10] sm:$0xff]
        %v2541 = vld [vmem:[%s39 + $0x18] sm:$0xff]
        %v2542 = vmul.f32 %v2535, 0.35355338
        %2544 = vrot.lane.b32.xlu0 %v2535, 96
        %v2545 = vpop.permute.xlu0 %2544
        %v2547 = vsel %vm1253, %v2542, 0
        %v2549 = vsel %vm1253, %v2545, 0
        %2551 = vmatprep.subr.mxu0 0.0
        %2552 = vmatpush1.xpose.msra.mxu0 %v2549
        %2553 = vmatprep.subr.mxu0 0.0
        %2554 = vmatpush1.xpose.msra.mxu0 0.0
        %2555 = vmatprep.subr.mxu0 0.0
        %2556 = vmatpush1.xpose.msra.mxu0 0.0
        %2557 = vmatprep.subr.mxu0 0.0
        %2558 = vmatpush1.xpose.msra.mxu0 0.0
        %2559 = vmatprep.subr.mxu0 0.0
        %2560 = vmatpush1.xpose.msra.mxu0 0.0
        %2561 = vmatprep.subr.mxu0 0.0
        %2562 = vmatpush1.xpose.msra.mxu0 0.0
        %2563 = vmatprep.subr.mxu0 0.0
        %2564 = vmatpush1.xpose.msra.mxu0 0.0
        %2565 = vmatprep.subr.mxu0 0.0
        %2566 = vmatpush1.xpose.msra.mxu0 0.0
        %2567 = vmatprep.subr.mxu0 0.0
        %2568 = vmatpush1.xpose.msra.mxu0 0.0
        %2569 = vmatprep.subr.mxu0 0.0
        %2570 = vmatpush1.xpose.msra.mxu0 0.0
        %2571 = vmatprep.subr.mxu0 0.0
        %2572 = vmatpush1.xpose.msra.mxu0 0.0
        %2573 = vmatprep.subr.mxu0 0.0
        %2574 = vmatpush1.xpose.msra.mxu0 0.0
        %2575 = vmatprep.subr.mxu0 0.0
        %2576 = vmatpush1.xpose.msra.mxu0 0.0
        %2577 = vmatprep.subr.mxu0 0.0
        %2578 = vmatpush1.xpose.msra.mxu0 0.0
        %2579 = vmatprep.subr.mxu0 0.0
        %2580 = vmatpush1.xpose.msra.mxu0 0.0
        %2581 = vmatprep.subr.mxu0 0.0
        %2582 = vmatpush1.xpose.msra.mxu0 0.0
        %2583 = vmatprep.subr.mxu0 0.0
        %2584 = vmatpush1.xpose.msra.mxu0 0.0
        %2585 = vmatprep.subr.mxu0 0.0
        %2586 = vmatpush1.xpose.msra.mxu0 0.0
        %2587 = vmatprep.subr.mxu0 0.0
        %2588 = vmatpush1.xpose.msra.mxu0 0.0
        %2589 = vmatprep.subr.mxu0 0.0
        %2590 = vmatpush1.xpose.msra.mxu0 0.0
        %2591 = vmatprep.subr.mxu0 0.0
        %2592 = vmatpush1.xpose.msra.mxu0 0.0
        %2593 = vmatprep.subr.mxu0 0.0
        %2594 = vmatpush1.xpose.msra.mxu0 0.0
        %2595 = vmatprep.subr.mxu0 0.0
        %2596 = vmatpush1.xpose.msra.mxu0 0.0
        %2597 = vmatprep.subr.mxu0 0.0
        %2598 = vmatpush1.xpose.msra.mxu0 0.0
        %2599 = vmatprep.subr.mxu0 0.0
        %2600 = vmatpush1.xpose.msra.mxu0 0.0
        %2601 = vmatprep.subr.mxu0 0.0
        %2602 = vmatpush1.xpose.msra.mxu0 0.0
        %2603 = vmatprep.subr.mxu0 0.0
        %2604 = vmatpush1.xpose.msra.mxu0 0.0
        %2605 = vmatprep.subr.mxu0 0.0
        %2606 = vmatpush1.xpose.msra.mxu0 0.0
        %2607 = vmatprep.subr.mxu0 0.0
        %2608 = vmatpush1.xpose.msra.mxu0 0.0
        %2609 = vmatprep.subr.mxu0 0.0
        %2610 = vmatpush1.xpose.msra.mxu0 0.0
        %2611 = vmatprep.subr.mxu0 0.0
        %2612 = vmatpush1.xpose.msra.mxu0 0.0
        %2613 = vmatprep.subr.mxu0 0.0
        %2614 = vmatpush1.xpose.msra.mxu0 0.0
        %2615 = vmatprep.mubr.f32.mxu0 0.0
        %2616 = vmatmul.mubr.f32.gmra.mrb[0].mxu0 %v2547
        %v2617 = vpop.f32.mrb[0].mxu0
        %v2618 = vadd.f32 %v1248, %v2617
        %v2619 = vpop.f32.mrb[0].mxu0
        %2620 = vdwg.mxu0
        %v2621 = vsel %vm1253, %v2618, -inf
        %2622 = vmax.xlane.f32.xlu0 %v2621
        %v2623 = vpop.xlane.xlu0 %2622
        %v2624 = vsub.f32 %v2618, %v2623
        %v2625 = vmul.f32 %v2624, 1.442695
        %v2626 = vpow.pop %v2625
        %v2627 = vsel %vm1253, %v2626, 0.0
        %2628 = vadd.xlane.f32.xlu0 %v2627
        %v2629 = vpop.xlane.xlu0 %2628
        %v2630 = vrcp.pop %v2629
        %v2631 = vmul.f32 %v2626, %v2630
        %2632 = vrot.lane.b32.xlu0 %v2535, 64
        %v2633 = vpop.permute.xlu0 %2632
        %v2636 = vsel %vm1253, %v2631, 0
        %2638 = vmatprep.subr.mxu0 0.0
        %2639 = vmatpush1.msra.mxu0 %v2633
        %2640 = vmatprep.subr.mxu0 0.0
        %2641 = vmatpush1.msra.mxu0 0.0
        %2642 = vmatprep.subr.mxu0 0.0
        %2643 = vmatpush1.msra.mxu0 0.0
        %2644 = vmatprep.subr.mxu0 0.0
        %2645 = vmatpush1.msra.mxu0 0.0
        %2646 = vmatprep.subr.mxu0 0.0
        %2647 = vmatpush1.msra.mxu0 0.0
        %2648 = vmatprep.subr.mxu0 0.0
        %2649 = vmatpush1.msra.mxu0 0.0
        %2650 = vmatprep.subr.mxu0 0.0
        %2651 = vmatpush1.msra.mxu0 0.0
        %2652 = vmatprep.subr.mxu0 0.0
        %2653 = vmatpush1.msra.mxu0 0.0
        %2654 = vmatprep.subr.mxu0 0.0
        %2655 = vmatpush1.msra.mxu0 0.0
        %2656 = vmatprep.subr.mxu0 0.0
        %2657 = vmatpush1.msra.mxu0 0.0
        %2658 = vmatprep.subr.mxu0 0.0
        %2659 = vmatpush1.msra.mxu0 0.0
        %2660 = vmatprep.subr.mxu0 0.0
        %2661 = vmatpush1.msra.mxu0 0.0
        %2662 = vmatprep.subr.mxu0 0.0
        %2663 = vmatpush1.msra.mxu0 0.0
        %2664 = vmatprep.subr.mxu0 0.0
        %2665 = vmatpush1.msra.mxu0 0.0
        %2666 = vmatprep.subr.mxu0 0.0
        %2667 = vmatpush1.msra.mxu0 0.0
        %2668 = vmatprep.subr.mxu0 0.0
        %2669 = vmatpush1.msra.mxu0 0.0
        %2670 = vmatprep.subr.mxu0 0.0
        %2671 = vmatpush1.msra.mxu0 0.0
        %2672 = vmatprep.subr.mxu0 0.0
        %2673 = vmatpush1.msra.mxu0 0.0
        %2674 = vmatprep.subr.mxu0 0.0
        %2675 = vmatpush1.msra.mxu0 0.0
        %2676 = vmatprep.subr.mxu0 0.0
        %2677 = vmatpush1.msra.mxu0 0.0
        %2678 = vmatprep.subr.mxu0 0.0
        %2679 = vmatpush1.msra.mxu0 0.0
        %2680 = vmatprep.subr.mxu0 0.0
        %2681 = vmatpush1.msra.mxu0 0.0
        %2682 = vmatprep.subr.mxu0 0.0
        %2683 = vmatpush1.msra.mxu0 0.0
        %2684 = vmatprep.subr.mxu0 0.0
        %2685 = vmatpush1.msra.mxu0 0.0
        %2686 = vmatprep.subr.mxu0 0.0
        %2687 = vmatpush1.msra.mxu0 0.0
        %2688 = vmatprep.subr.mxu0 0.0
        %2689 = vmatpush1.msra.mxu0 0.0
        %2690 = vmatprep.subr.mxu0 0.0
        %2691 = vmatpush1.msra.mxu0 0.0
        %2692 = vmatprep.subr.mxu0 0.0
        %2693 = vmatpush1.msra.mxu0 0.0
        %2694 = vmatprep.subr.mxu0 0.0
        %2695 = vmatpush1.msra.mxu0 0.0
        %2696 = vmatprep.subr.mxu0 0.0
        %2697 = vmatpush1.msra.mxu0 0.0
        %2698 = vmatprep.subr.mxu0 0.0
        %2699 = vmatpush1.msra.mxu0 0.0
        %2700 = vmatprep.subr.mxu0 0.0
        %2701 = vmatpush1.msra.mxu0 0.0
        %2702 = vmatprep.mubr.f32.mxu0 0.0
        %2703 = vmatmul.mubr.f32.gmra.mrb[0].mxu0 %v2636
        %v2704 = vpop.f32.mrb[0].mxu0
        %v2705 = vadd.f32 0.0, %v2704
        %v2706 = vpop.f32.mrb[0].mxu0
        %2707 = vdwg.mxu0
        %2708 = vrot.lane.b32.xlu0 %v2542, 120
        %v2709 = vpop.permute.xlu0 %2708
        %2710 = vrot.lane.b32.xlu0 %v2535, 88
        %v2711 = vpop.permute.xlu0 %2710
        %v2712 = vsel %vm1253, %v2709, 0
        %v2714 = vsel %vm1253, %v2711, 0
        %2716 = vmatprep.subr.mxu0 0.0
        %2717 = vmatpush1.xpose.msra.mxu0 %v2714
        %2718 = vmatprep.subr.mxu0 0.0
        %2719 = vmatpush1.xpose.msra.mxu0 0.0
        %2720 = vmatprep.subr.mxu0 0.0
        %2721 = vmatpush1.xpose.msra.mxu0 0.0
        %2722 = vmatprep.subr.mxu0 0.0
        %2723 = vmatpush1.xpose.msra.mxu0 0.0
        %2724 = vmatprep.subr.mxu0 0.0
        %2725 = vmatpush1.xpose.msra.mxu0 0.0
        %2726 = vmatprep.subr.mxu0 0.0
        %2727 = vmatpush1.xpose.msra.mxu0 0.0
        %2728 = vmatprep.subr.mxu0 0.0
        %2729 = vmatpush1.xpose.msra.mxu0 0.0
        %2730 = vmatprep.subr.mxu0 0.0
        %2731 = vmatpush1.xpose.msra.mxu0 0.0
        %2732 = vmatprep.subr.mxu0 0.0
        %2733 = vmatpush1.xpose.msra.mxu0 0.0
        %2734 = vmatprep.subr.mxu0 0.0
        %2735 = vmatpush1.xpose.msra.mxu0 0.0
        %2736 = vmatprep.subr.mxu0 0.0
        %2737 = vmatpush1.xpose.msra.mxu0 0.0
        %2738 = vmatprep.subr.mxu0 0.0
        %2739 = vmatpush1.xpose.msra.mxu0 0.0
        %2740 = vmatprep.subr.mxu0 0.0
        %2741 = vmatpush1.xpose.msra.mxu0 0.0
        %2742 = vmatprep.subr.mxu0 0.0
        %2743 = vmatpush1.xpose.msra.mxu0 0.0
        %2744 = vmatprep.subr.mxu0 0.0
        %2745 = vmatpush1.xpose.msra.mxu0 0.0
        %2746 = vmatprep.subr.mxu0 0.0
        %2747 = vmatpush1.xpose.msra.mxu0 0.0
        %2748 = vmatprep.subr.mxu0 0.0
        %2749 = vmatpush1.xpose.msra.mxu0 0.0
        %2750 = vmatprep.subr.mxu0 0.0
        %2751 = vmatpush1.xpose.msra.mxu0 0.0
        %2752 = vmatprep.subr.mxu0 0.0
        %2753 = vmatpush1.xpose.msra.mxu0 0.0
        %2754 = vmatprep.subr.mxu0 0.0
        %2755 = vmatpush1.xpose.msra.mxu0 0.0
        %2756 = vmatprep.subr.mxu0 0.0
        %2757 = vmatpush1.xpose.msra.mxu0 0.0
        %2758 = vmatprep.subr.mxu0 0.0
        %2759 = vmatpush1.xpose.msra.mxu0 0.0
        %2760 = vmatprep.subr.mxu0 0.0
        %2761 = vmatpush1.xpose.msra.mxu0 0.0
        %2762 = vmatprep.subr.mxu0 0.0
        %2763 = vmatpush1.xpose.msra.mxu0 0.0
        %2764 = vmatprep.subr.mxu0 0.0
        %2765 = vmatpush1.xpose.msra.mxu0 0.0
        %2766 = vmatprep.subr.mxu0 0.0
        %2767 = vmatpush1.xpose.msra.mxu0 0.0
        %2768 = vmatprep.subr.mxu0 0.0
        %2769 = vmatpush1.xpose.msra.mxu0 0.0
        %2770 = vmatprep.subr.mxu0 0.0
        %2771 = vmatpush1.xpose.msra.mxu0 0.0
        %2772 = vmatprep.subr.mxu0 0.0
        %2773 = vmatpush1.xpose.msra.mxu0 0.0
        %2774 = vmatprep.subr.mxu0 0.0
        %2775 = vmatpush1.xpose.msra.mxu0 0.0
        %2776 = vmatprep.subr.mxu0 0.0
        %2777 = vmatpush1.xpose.msra.mxu0 0.0
        %2778 = vmatprep.subr.mxu0 0.0
        %2779 = vmatpush1.xpose.msra.mxu0 0.0
        %2780 = vmatprep.mubr.f32.mxu0 0.0
        %2781 = vmatmul.mubr.f32.gmra.mrb[0].mxu0 %v2712
        %v2782 = vpop.f32.mrb[0].mxu0
        %v2783 = vadd.f32 %v1248, %v2782
        %v2784 = vpop.f32.mrb[0].mxu0
        %2785 = vdwg.mxu0
        %v2786 = vsel %vm1253, %v2783, -inf
        %2787 = vmax.xlane.f32.xlu0 %v2786
        %v2788 = vpop.xlane.xlu0 %2787
        %v2789 = vsub.f32 %v2783, %v2788
        %v2790 = vmul.f32 %v2789, 1.442695
        %v2791 = vpow.pop %v2790
        %v2792 = vsel %vm1253, %v2791, 0.0
        %2793 = vadd.xlane.f32.xlu0 %v2792
        %v2794 = vpop.xlane.xlu0 %2793
        %v2795 = vrcp.pop %v2794
        %v2796 = vmul.f32 %v2791, %v2795
        %2797 = vrot.lane.b32.xlu0 %v2535, 56
        %v2798 = vpop.permute.xlu0 %2797
        %v2801 = vsel %vm1253, %v2796, 0
        %2803 = vmatprep.subr.mxu0 0.0
        %2804 = vmatpush1.msra.mxu0 %v2798
        %2805 = vmatprep.subr.mxu0 0.0
        %2806 = vmatpush1.msra.mxu0 0.0
        %2807 = vmatprep.subr.mxu0 0.0
        %2808 = vmatpush1.msra.mxu0 0.0
        %2809 = vmatprep.subr.mxu0 0.0
        %2810 = vmatpush1.msra.mxu0 0.0
        %2811 = vmatprep.subr.mxu0 0.0
        %2812 = vmatpush1.msra.mxu0 0.0
        %2813 = vmatprep.subr.mxu0 0.0
        %2814 = vmatpush1.msra.mxu0 0.0
        %2815 = vmatprep.subr.mxu0 0.0
        %2816 = vmatpush1.msra.mxu0 0.0
        %2817 = vmatprep.subr.mxu0 0.0
        %2818 = vmatpush1.msra.mxu0 0.0
        %2819 = vmatprep.subr.mxu0 0.0
        %2820 = vmatpush1.msra.mxu0 0.0
        %2821 = vmatprep.subr.mxu0 0.0
        %2822 = vmatpush1.msra.mxu0 0.0
        %2823 = vmatprep.subr.mxu0 0.0
        %2824 = vmatpush1.msra.mxu0 0.0
        %2825 = vmatprep.subr.mxu0 0.0
        %2826 = vmatpush1.msra.mxu0 0.0
        %2827 = vmatprep.subr.mxu0 0.0
        %2828 = vmatpush1.msra.mxu0 0.0
        %2829 = vmatprep.subr.mxu0 0.0
        %2830 = vmatpush1.msra.mxu0 0.0
        %2831 = vmatprep.subr.mxu0 0.0
        %2832 = vmatpush1.msra.mxu0 0.0
        %2833 = vmatprep.subr.mxu0 0.0
        %2834 = vmatpush1.msra.mxu0 0.0
        %2835 = vmatprep.subr.mxu0 0.0
        %2836 = vmatpush1.msra.mxu0 0.0
        %2837 = vmatprep.subr.mxu0 0.0
        %2838 = vmatpush1.msra.mxu0 0.0
        %2839 = vmatprep.subr.mxu0 0.0
        %2840 = vmatpush1.msra.mxu0 0.0
        %2841 = vmatprep.subr.mxu0 0.0
        %2842 = vmatpush1.msra.mxu0 0.0
        %2843 = vmatprep.subr.mxu0 0.0
        %2844 = vmatpush1.msra.mxu0 0.0
        %2845 = vmatprep.subr.mxu0 0.0
        %2846 = vmatpush1.msra.mxu0 0.0
        %2847 = vmatprep.subr.mxu0 0.0
        %2848 = vmatpush1.msra.mxu0 0.0
        %2849 = vmatprep.subr.mxu0 0.0
        %2850 = vmatpush1.msra.mxu0 0.0
        %2851 = vmatprep.subr.mxu0 0.0
        %2852 = vmatpush1.msra.mxu0 0.0
        %2853 = vmatprep.subr.mxu0 0.0
        %2854 = vmatpush1.msra.mxu0 0.0
        %2855 = vmatprep.subr.mxu0 0.0
        %2856 = vmatpush1.msra.mxu0 0.0
        %2857 = vmatprep.subr.mxu0 0.0
        %2858 = vmatpush1.msra.mxu0 0.0
        %2859 = vmatprep.subr.mxu0 0.0
        %2860 = vmatpush1.msra.mxu0 0.0
        %2861 = vmatprep.subr.mxu0 0.0
        %2862 = vmatpush1.msra.mxu0 0.0
        %2863 = vmatprep.subr.mxu0 0.0
        %2864 = vmatpush1.msra.mxu0 0.0
        %2865 = vmatprep.subr.mxu0 0.0
        %2866 = vmatpush1.msra.mxu0 0.0
        %2867 = vmatprep.mubr.f32.mxu0 0.0
        %2868 = vmatmul.mubr.f32.gmra.mrb[0].mxu0 %v2801
        %v2869 = vpop.f32.mrb[0].mxu0
        %v2870 = vadd.f32 0.0, %v2869
        %v2871 = vpop.f32.mrb[0].mxu0
        %2872 = vdwg.mxu0
        %v2874 = vsel %vm1253, %v2870, 0
        %2876 = vmatprep.subr.mxu0 0.0
        %2877 = vmatpush1.msra.mxu0 %v2539
        %2878 = vmatprep.subr.mxu0 0.0
        %2879 = vmatpush1.msra.mxu0 0.0
        %2880 = vmatprep.subr.mxu0 0.0
        %2881 = vmatpush1.msra.mxu0 0.0
        %2882 = vmatprep.subr.mxu0 0.0
        %2883 = vmatpush1.msra.mxu0 0.0
        %2884 = vmatprep.subr.mxu0 0.0
        %2885 = vmatpush1.msra.mxu0 0.0
        %2886 = vmatprep.subr.mxu0 0.0
        %2887 = vmatpush1.msra.mxu0 0.0
        %2888 = vmatprep.subr.mxu0 0.0
        %2889 = vmatpush1.msra.mxu0 0.0
        %2890 = vmatprep.subr.mxu0 0.0
        %2891 = vmatpush1.msra.mxu0 0.0
        %2892 = vmatprep.subr.mxu0 0.0
        %2893 = vmatpush1.msra.mxu0 0.0
        %2894 = vmatprep.subr.mxu0 0.0
        %2895 = vmatpush1.msra.mxu0 0.0
        %2896 = vmatprep.subr.mxu0 0.0
        %2897 = vmatpush1.msra.mxu0 0.0
        %2898 = vmatprep.subr.mxu0 0.0
        %2899 = vmatpush1.msra.mxu0 0.0
        %2900 = vmatprep.subr.mxu0 0.0
        %2901 = vmatpush1.msra.mxu0 0.0
        %2902 = vmatprep.subr.mxu0 0.0
        %2903 = vmatpush1.msra.mxu0 0.0
        %2904 = vmatprep.subr.mxu0 0.0
        %2905 = vmatpush1.msra.mxu0 0.0
        %2906 = vmatprep.subr.mxu0 0.0
        %2907 = vmatpush1.msra.mxu0 0.0
        %2908 = vmatprep.subr.mxu0 0.0
        %2909 = vmatpush1.msra.mxu0 0.0
        %2910 = vmatprep.subr.mxu0 0.0
        %2911 = vmatpush1.msra.mxu0 0.0
        %2912 = vmatprep.subr.mxu0 0.0
        %2913 = vmatpush1.msra.mxu0 0.0
        %2914 = vmatprep.subr.mxu0 0.0
        %2915 = vmatpush1.msra.mxu0 0.0
        %2916 = vmatprep.subr.mxu0 0.0
        %2917 = vmatpush1.msra.mxu0 0.0
        %2918 = vmatprep.subr.mxu0 0.0
        %2919 = vmatpush1.msra.mxu0 0.0
        %2920 = vmatprep.subr.mxu0 0.0
        %2921 = vmatpush1.msra.mxu0 0.0
        %2922 = vmatprep.subr.mxu0 0.0
        %2923 = vmatpush1.msra.mxu0 0.0
        %2924 = vmatprep.subr.mxu0 0.0
        %2925 = vmatpush1.msra.mxu0 0.0
        %2926 = vmatprep.subr.mxu0 0.0
        %2927 = vmatpush1.msra.mxu0 0.0
        %2928 = vmatprep.subr.mxu0 0.0
        %2929 = vmatpush1.msra.mxu0 0.0
        %2930 = vmatprep.subr.mxu0 0.0
        %2931 = vmatpush1.msra.mxu0 0.0
        %2932 = vmatprep.subr.mxu0 0.0
        %2933 = vmatpush1.msra.mxu0 0.0
        %2934 = vmatprep.subr.mxu0 0.0
        %2935 = vmatpush1.msra.mxu0 0.0
        %2936 = vmatprep.subr.mxu0 0.0
        %2937 = vmatpush1.msra.mxu0 0.0
        %2938 = vmatprep.subr.mxu0 0.0
        %2939 = vmatpush1.msra.mxu0 0.0
        %2940 = vmatprep.mubr.f32.mxu0 0.0
        %2941 = vmatmul.mubr.f32.gmra.mrb[0].mxu0 %v2874
        %v2942 = vpop.f32.mrb[0].mxu0
        %v2943 = vadd.f32 0.0, %v2942
        %v2944 = vpop.f32.mrb[0].mxu0
        %2945 = vdwg.mxu0
        %v2947 = vsel %vm1253, %v2705, 0
        %2949 = vmatprep.subr.mxu0 0.0
        %2950 = vmatpush1.msra.mxu0 %v2538
        %2951 = vmatprep.subr.mxu0 0.0
        %2952 = vmatpush1.msra.mxu0 0.0
        %2953 = vmatprep.subr.mxu0 0.0
        %2954 = vmatpush1.msra.mxu0 0.0
        %2955 = vmatprep.subr.mxu0 0.0
        %2956 = vmatpush1.msra.mxu0 0.0
        %2957 = vmatprep.subr.mxu0 0.0
        %2958 = vmatpush1.msra.mxu0 0.0
        %2959 = vmatprep.subr.mxu0 0.0
        %2960 = vmatpush1.msra.mxu0 0.0
        %2961 = vmatprep.subr.mxu0 0.0
        %2962 = vmatpush1.msra.mxu0 0.0
        %2963 = vmatprep.subr.mxu0 0.0
        %2964 = vmatpush1.msra.mxu0 0.0
        %2965 = vmatprep.subr.mxu0 0.0
        %2966 = vmatpush1.msra.mxu0 0.0
        %2967 = vmatprep.subr.mxu0 0.0
        %2968 = vmatpush1.msra.mxu0 0.0
        %2969 = vmatprep.subr.mxu0 0.0
        %2970 = vmatpush1.msra.mxu0 0.0
        %2971 = vmatprep.subr.mxu0 0.0
        %2972 = vmatpush1.msra.mxu0 0.0
        %2973 = vmatprep.subr.mxu0 0.0
        %2974 = vmatpush1.msra.mxu0 0.0
        %2975 = vmatprep.subr.mxu0 0.0
        %2976 = vmatpush1.msra.mxu0 0.0
        %2977 = vmatprep.subr.mxu0 0.0
        %2978 = vmatpush1.msra.mxu0 0.0
        %2979 = vmatprep.subr.mxu0 0.0
        %2980 = vmatpush1.msra.mxu0 0.0
        %2981 = vmatprep.subr.mxu0 0.0
        %2982 = vmatpush1.msra.mxu0 0.0
        %2983 = vmatprep.subr.mxu0 0.0
        %2984 = vmatpush1.msra.mxu0 0.0
        %2985 = vmatprep.subr.mxu0 0.0
        %2986 = vmatpush1.msra.mxu0 0.0
        %2987 = vmatprep.subr.mxu0 0.0
        %2988 = vmatpush1.msra.mxu0 0.0
        %2989 = vmatprep.subr.mxu0 0.0
        %2990 = vmatpush1.msra.mxu0 0.0
        %2991 = vmatprep.subr.mxu0 0.0
        %2992 = vmatpush1.msra.mxu0 0.0
        %2993 = vmatprep.subr.mxu0 0.0
        %2994 = vmatpush1.msra.mxu0 0.0
        %2995 = vmatprep.subr.mxu0 0.0
        %2996 = vmatpush1.msra.mxu0 0.0
        %2997 = vmatprep.subr.mxu0 0.0
        %2998 = vmatpush1.msra.mxu0 0.0
        %2999 = vmatprep.subr.mxu0 0.0
        %3000 = vmatpush1.msra.mxu0 0.0
        %3001 = vmatprep.subr.mxu0 0.0
        %3002 = vmatpush1.msra.mxu0 0.0
        %3003 = vmatprep.subr.mxu0 0.0
        %3004 = vmatpush1.msra.mxu0 0.0
        %3005 = vmatprep.subr.mxu0 0.0
        %3006 = vmatpush1.msra.mxu0 0.0
        %3007 = vmatprep.subr.mxu0 0.0
        %3008 = vmatpush1.msra.mxu0 0.0
        %3009 = vmatprep.subr.mxu0 0.0
        %3010 = vmatpush1.msra.mxu0 0.0
        %3011 = vmatprep.subr.mxu0 0.0
        %3012 = vmatpush1.msra.mxu0 0.0
        %3013 = vmatprep.mubr.f32.mxu0 0.0
        %3014 = vmatmul.mubr.f32.gmra.mrb[0].mxu0 %v2947
        %v3015 = vpop.f32.mrb[0].mxu0
        %v3016 = vadd.f32 %v2943, %v3015
        %v3017 = vpop.f32.mrb[0].mxu0
        %3018 = vdwg.mxu0
        %3019 = vrot.lane.b32.xlu0 %v2542, 112
        %v3020 = vpop.permute.xlu0 %3019
        %3021 = vrot.lane.b32.xlu0 %v2535, 80
        %v3022 = vpop.permute.xlu0 %3021
        %v3023 = vsel %vm1253, %v3020, 0
        %v3025 = vsel %vm1253, %v3022, 0
        %3027 = vmatprep.subr.mxu0 0.0
        %3028 = vmatpush1.xpose.msra.mxu0 %v3025
        %3029 = vmatprep.subr.mxu0 0.0
        %3030 = vmatpush1.xpose.msra.mxu0 0.0
        %3031 = vmatprep.subr.mxu0 0.0
        %3032 = vmatpush1.xpose.msra.mxu0 0.0
        %3033 = vmatprep.subr.mxu0 0.0
        %3034 = vmatpush1.xpose.msra.mxu0 0.0
        %3035 = vmatprep.subr.mxu0 0.0
        %3036 = vmatpush1.xpose.msra.mxu0 0.0
        %3037 = vmatprep.subr.mxu0 0.0
        %3038 = vmatpush1.xpose.msra.mxu0 0.0
        %3039 = vmatprep.subr.mxu0 0.0
        %3040 = vmatpush1.xpose.msra.mxu0 0.0
        %3041 = vmatprep.subr.mxu0 0.0
        %3042 = vmatpush1.xpose.msra.mxu0 0.0
        %3043 = vmatprep.subr.mxu0 0.0
        %3044 = vmatpush1.xpose.msra.mxu0 0.0
        %3045 = vmatprep.subr.mxu0 0.0
        %3046 = vmatpush1.xpose.msra.mxu0 0.0
        %3047 = vmatprep.subr.mxu0 0.0
        %3048 = vmatpush1.xpose.msra.mxu0 0.0
        %3049 = vmatprep.subr.mxu0 0.0
        %3050 = vmatpush1.xpose.msra.mxu0 0.0
        %3051 = vmatprep.subr.mxu0 0.0
        %3052 = vmatpush1.xpose.msra.mxu0 0.0
        %3053 = vmatprep.subr.mxu0 0.0
        %3054 = vmatpush1.xpose.msra.mxu0 0.0
        %3055 = vmatprep.subr.mxu0 0.0
        %3056 = vmatpush1.xpose.msra.mxu0 0.0
        %3057 = vmatprep.subr.mxu0 0.0
        %3058 = vmatpush1.xpose.msra.mxu0 0.0
        %3059 = vmatprep.subr.mxu0 0.0
        %3060 = vmatpush1.xpose.msra.mxu0 0.0
        %3061 = vmatprep.subr.mxu0 0.0
        %3062 = vmatpush1.xpose.msra.mxu0 0.0
        %3063 = vmatprep.subr.mxu0 0.0
        %3064 = vmatpush1.xpose.msra.mxu0 0.0
        %3065 = vmatprep.subr.mxu0 0.0
        %3066 = vmatpush1.xpose.msra.mxu0 0.0
        %3067 = vmatprep.subr.mxu0 0.0
        %3068 = vmatpush1.xpose.msra.mxu0 0.0
        %3069 = vmatprep.subr.mxu0 0.0
        %3070 = vmatpush1.xpose.msra.mxu0 0.0
        %3071 = vmatprep.subr.mxu0 0.0
        %3072 = vmatpush1.xpose.msra.mxu0 0.0
        %3073 = vmatprep.subr.mxu0 0.0
        %3074 = vmatpush1.xpose.msra.mxu0 0.0
        %3075 = vmatprep.subr.mxu0 0.0
        %3076 = vmatpush1.xpose.msra.mxu0 0.0
        %3077 = vmatprep.subr.mxu0 0.0
        %3078 = vmatpush1.xpose.msra.mxu0 0.0
        %3079 = vmatprep.subr.mxu0 0.0
        %3080 = vmatpush1.xpose.msra.mxu0 0.0
        %3081 = vmatprep.subr.mxu0 0.0
        %3082 = vmatpush1.xpose.msra.mxu0 0.0
        %3083 = vmatprep.subr.mxu0 0.0
        %3084 = vmatpush1.xpose.msra.mxu0 0.0
        %3085 = vmatprep.subr.mxu0 0.0
        %3086 = vmatpush1.xpose.msra.mxu0 0.0
        %3087 = vmatprep.subr.mxu0 0.0
        %3088 = vmatpush1.xpose.msra.mxu0 0.0
        %3089 = vmatprep.subr.mxu0 0.0
        %3090 = vmatpush1.xpose.msra.mxu0 0.0
        %3091 = vmatprep.mubr.f32.mxu0 0.0
        %3092 = vmatmul.mubr.f32.gmra.mrb[0].mxu0 %v3023
        %v3093 = vpop.f32.mrb[0].mxu0
        %v3094 = vadd.f32 %v1248, %v3093
        %v3095 = vpop.f32.mrb[0].mxu0
        %3096 = vdwg.mxu0
        %v3097 = vsel %vm1253, %v3094, -inf
        %3098 = vmax.xlane.f32.xlu0 %v3097
        %v3099 = vpop.xlane.xlu0 %3098
        %v3100 = vsub.f32 %v3094, %v3099
        %v3101 = vmul.f32 %v3100, 1.442695
        %v3102 = vpow.pop %v3101
        %v3103 = vsel %vm1253, %v3102, 0.0
        %3104 = vadd.xlane.f32.xlu0 %v3103
        %v3105 = vpop.xlane.xlu0 %3104
        %v3106 = vrcp.pop %v3105
        %v3107 = vmul.f32 %v3102, %v3106
        %3108 = vrot.lane.b32.xlu0 %v2535, 48
        %v3109 = vpop.permute.xlu0 %3108
        %v3112 = vsel %vm1253, %v3107, 0
        %3114 = vmatprep.subr.mxu0 0.0
        %3115 = vmatpush1.msra.mxu0 %v3109
        %3116 = vmatprep.subr.mxu0 0.0
        %3117 = vmatpush1.msra.mxu0 0.0
        %3118 = vmatprep.subr.mxu0 0.0
        %3119 = vmatpush1.msra.mxu0 0.0
        %3120 = vmatprep.subr.mxu0 0.0
        %3121 = vmatpush1.msra.mxu0 0.0
        %3122 = vmatprep.subr.mxu0 0.0
        %3123 = vmatpush1.msra.mxu0 0.0
        %3124 = vmatprep.subr.mxu0 0.0
        %3125 = vmatpush1.msra.mxu0 0.0
        %3126 = vmatprep.subr.mxu0 0.0
        %3127 = vmatpush1.msra.mxu0 0.0
        %3128 = vmatprep.subr.mxu0 0.0
        %3129 = vmatpush1.msra.mxu0 0.0
        %3130 = vmatprep.subr.mxu0 0.0
        %3131 = vmatpush1.msra.mxu0 0.0
        %3132 = vmatprep.subr.mxu0 0.0
        %3133 = vmatpush1.msra.mxu0 0.0
        %3134 = vmatprep.subr.mxu0 0.0
        %3135 = vmatpush1.msra.mxu0 0.0
        %3136 = vmatprep.subr.mxu0 0.0
        %3137 = vmatpush1.msra.mxu0 0.0
        %3138 = vmatprep.subr.mxu0 0.0
        %3139 = vmatpush1.msra.mxu0 0.0
        %3140 = vmatprep.subr.mxu0 0.0
        %3141 = vmatpush1.msra.mxu0 0.0
        %3142 = vmatprep.subr.mxu0 0.0
        %3143 = vmatpush1.msra.mxu0 0.0
        %3144 = vmatprep.subr.mxu0 0.0
        %3145 = vmatpush1.msra.mxu0 0.0
        %3146 = vmatprep.subr.mxu0 0.0
        %3147 = vmatpush1.msra.mxu0 0.0
        %3148 = vmatprep.subr.mxu0 0.0
        %3149 = vmatpush1.msra.mxu0 0.0
        %3150 = vmatprep.subr.mxu0 0.0
        %3151 = vmatpush1.msra.mxu0 0.0
        %3152 = vmatprep.subr.mxu0 0.0
        %3153 = vmatpush1.msra.mxu0 0.0
        %3154 = vmatprep.subr.mxu0 0.0
        %3155 = vmatpush1.msra.mxu0 0.0
        %3156 = vmatprep.subr.mxu0 0.0
        %3157 = vmatpush1.msra.mxu0 0.0
        %3158 = vmatprep.subr.mxu0 0.0
        %3159 = vmatpush1.msra.mxu0 0.0
        %3160 = vmatprep.subr.mxu0 0.0
        %3161 = vmatpush1.msra.mxu0 0.0
        %3162 = vmatprep.subr.mxu0 0.0
        %3163 = vmatpush1.msra.mxu0 0.0
        %3164 = vmatprep.subr.mxu0 0.0
        %3165 = vmatpush1.msra.mxu0 0.0
        %3166 = vmatprep.subr.mxu0 0.0
        %3167 = vmatpush1.msra.mxu0 0.0
        %3168 = vmatprep.subr.mxu0 0.0
        %3169 = vmatpush1.msra.mxu0 0.0
        %3170 = vmatprep.subr.mxu0 0.0
        %3171 = vmatpush1.msra.mxu0 0.0
        %3172 = vmatprep.subr.mxu0 0.0
        %3173 = vmatpush1.msra.mxu0 0.0
        %3174 = vmatprep.subr.mxu0 0.0
        %3175 = vmatpush1.msra.mxu0 0.0
        %3176 = vmatprep.subr.mxu0 0.0
        %3177 = vmatpush1.msra.mxu0 0.0
        %3178 = vmatprep.mubr.f32.mxu0 0.0
        %3179 = vmatmul.mubr.f32.gmra.mrb[0].mxu0 %v3112
        %v3180 = vpop.f32.mrb[0].mxu0
        %v3181 = vadd.f32 0.0, %v3180
        %v3182 = vpop.f32.mrb[0].mxu0
        %3183 = vdwg.mxu0
        %v3185 = vsel %vm1253, %v3181, 0
        %3187 = vmatprep.subr.mxu0 0.0
        %3188 = vmatpush1.msra.mxu0 %v2540
        %3189 = vmatprep.subr.mxu0 0.0
        %3190 = vmatpush1.msra.mxu0 0.0
        %3191 = vmatprep.subr.mxu0 0.0
        %3192 = vmatpush1.msra.mxu0 0.0
        %3193 = vmatprep.subr.mxu0 0.0
        %3194 = vmatpush1.msra.mxu0 0.0
        %3195 = vmatprep.subr.mxu0 0.0
        %3196 = vmatpush1.msra.mxu0 0.0
        %3197 = vmatprep.subr.mxu0 0.0
        %3198 = vmatpush1.msra.mxu0 0.0
        %3199 = vmatprep.subr.mxu0 0.0
        %3200 = vmatpush1.msra.mxu0 0.0
        %3201 = vmatprep.subr.mxu0 0.0
        %3202 = vmatpush1.msra.mxu0 0.0
        %3203 = vmatprep.subr.mxu0 0.0
        %3204 = vmatpush1.msra.mxu0 0.0
        %3205 = vmatprep.subr.mxu0 0.0
        %3206 = vmatpush1.msra.mxu0 0.0
        %3207 = vmatprep.subr.mxu0 0.0
        %3208 = vmatpush1.msra.mxu0 0.0
        %3209 = vmatprep.subr.mxu0 0.0
        %3210 = vmatpush1.msra.mxu0 0.0
        %3211 = vmatprep.subr.mxu0 0.0
        %3212 = vmatpush1.msra.mxu0 0.0
        %3213 = vmatprep.subr.mxu0 0.0
        %3214 = vmatpush1.msra.mxu0 0.0
        %3215 = vmatprep.subr.mxu0 0.0
        %3216 = vmatpush1.msra.mxu0 0.0
        %3217 = vmatprep.subr.mxu0 0.0
        %3218 = vmatpush1.msra.mxu0 0.0
        %3219 = vmatprep.subr.mxu0 0.0
        %3220 = vmatpush1.msra.mxu0 0.0
        %3221 = vmatprep.subr.mxu0 0.0
        %3222 = vmatpush1.msra.mxu0 0.0
        %3223 = vmatprep.subr.mxu0 0.0
        %3224 = vmatpush1.msra.mxu0 0.0
        %3225 = vmatprep.subr.mxu0 0.0
        %3226 = vmatpush1.msra.mxu0 0.0
        %3227 = vmatprep.subr.mxu0 0.0
        %3228 = vmatpush1.msra.mxu0 0.0
        %3229 = vmatprep.subr.mxu0 0.0
        %3230 = vmatpush1.msra.mxu0 0.0
        %3231 = vmatprep.subr.mxu0 0.0
        %3232 = vmatpush1.msra.mxu0 0.0
        %3233 = vmatprep.subr.mxu0 0.0
        %3234 = vmatpush1.msra.mxu0 0.0
        %3235 = vmatprep.subr.mxu0 0.0
        %3236 = vmatpush1.msra.mxu0 0.0
        %3237 = vmatprep.subr.mxu0 0.0
        %3238 = vmatpush1.msra.mxu0 0.0
        %3239 = vmatprep.subr.mxu0 0.0
        %3240 = vmatpush1.msra.mxu0 0.0
        %3241 = vmatprep.subr.mxu0 0.0
        %3242 = vmatpush1.msra.mxu0 0.0
        %3243 = vmatprep.subr.mxu0 0.0
        %3244 = vmatpush1.msra.mxu0 0.0
        %3245 = vmatprep.subr.mxu0 0.0
        %3246 = vmatpush1.msra.mxu0 0.0
        %3247 = vmatprep.subr.mxu0 0.0
        %3248 = vmatpush1.msra.mxu0 0.0
        %3249 = vmatprep.subr.mxu0 0.0
        %3250 = vmatpush1.msra.mxu0 0.0
        %3251 = vmatprep.mubr.f32.mxu0 0.0
        %3252 = vmatmul.mubr.f32.gmra.mrb[0].mxu0 %v3185
        %v3253 = vpop.f32.mrb[0].mxu0
        %v3254 = vadd.f32 0.0, %v3253
        %v3255 = vpop.f32.mrb[0].mxu0
        %3256 = vdwg.mxu0
        %v3257 = vadd.f32 %v3016, %v3254
        %3258 = vrot.lane.b32.xlu0 %v2542, 104
        %v3259 = vpop.permute.xlu0 %3258
        %3260 = vrot.lane.b32.xlu0 %v2535, 72
        %v3261 = vpop.permute.xlu0 %3260
        %v3262 = vsel %vm1253, %v3259, 0
        %v3264 = vsel %vm1253, %v3261, 0
        %3266 = vmatprep.subr.mxu0 0.0
        %3267 = vmatpush1.xpose.msra.mxu0 %v3264
        %3268 = vmatprep.subr.mxu0 0.0
        %3269 = vmatpush1.xpose.msra.mxu0 0.0
        %3270 = vmatprep.subr.mxu0 0.0
        %3271 = vmatpush1.xpose.msra.mxu0 0.0
        %3272 = vmatprep.subr.mxu0 0.0
        %3273 = vmatpush1.xpose.msra.mxu0 0.0
        %3274 = vmatprep.subr.mxu0 0.0
        %3275 = vmatpush1.xpose.msra.mxu0 0.0
        %3276 = vmatprep.subr.mxu0 0.0
        %3277 = vmatpush1.xpose.msra.mxu0 0.0
        %3278 = vmatprep.subr.mxu0 0.0
        %3279 = vmatpush1.xpose.msra.mxu0 0.0
        %3280 = vmatprep.subr.mxu0 0.0
        %3281 = vmatpush1.xpose.msra.mxu0 0.0
        %3282 = vmatprep.subr.mxu0 0.0
        %3283 = vmatpush1.xpose.msra.mxu0 0.0
        %3284 = vmatprep.subr.mxu0 0.0
        %3285 = vmatpush1.xpose.msra.mxu0 0.0
        %3286 = vmatprep.subr.mxu0 0.0
        %3287 = vmatpush1.xpose.msra.mxu0 0.0
        %3288 = vmatprep.subr.mxu0 0.0
        %3289 = vmatpush1.xpose.msra.mxu0 0.0
        %3290 = vmatprep.subr.mxu0 0.0
        %3291 = vmatpush1.xpose.msra.mxu0 0.0
        %3292 = vmatprep.subr.mxu0 0.0
        %3293 = vmatpush1.xpose.msra.mxu0 0.0
        %3294 = vmatprep.subr.mxu0 0.0
        %3295 = vmatpush1.xpose.msra.mxu0 0.0
        %3296 = vmatprep.subr.mxu0 0.0
        %3297 = vmatpush1.xpose.msra.mxu0 0.0
        %3298 = vmatprep.subr.mxu0 0.0
        %3299 = vmatpush1.xpose.msra.mxu0 0.0
        %3300 = vmatprep.subr.mxu0 0.0
        %3301 = vmatpush1.xpose.msra.mxu0 0.0
        %3302 = vmatprep.subr.mxu0 0.0
        %3303 = vmatpush1.xpose.msra.mxu0 0.0
        %3304 = vmatprep.subr.mxu0 0.0
        %3305 = vmatpush1.xpose.msra.mxu0 0.0
        %3306 = vmatprep.subr.mxu0 0.0
        %3307 = vmatpush1.xpose.msra.mxu0 0.0
        %3308 = vmatprep.subr.mxu0 0.0
        %3309 = vmatpush1.xpose.msra.mxu0 0.0
        %3310 = vmatprep.subr.mxu0 0.0
        %3311 = vmatpush1.xpose.msra.mxu0 0.0
        %3312 = vmatprep.subr.mxu0 0.0
        %3313 = vmatpush1.xpose.msra.mxu0 0.0
        %3314 = vmatprep.subr.mxu0 0.0
        %3315 = vmatpush1.xpose.msra.mxu0 0.0
        %3316 = vmatprep.subr.mxu0 0.0
        %3317 = vmatpush1.xpose.msra.mxu0 0.0
        %3318 = vmatprep.subr.mxu0 0.0
        %3319 = vmatpush1.xpose.msra.mxu0 0.0
        %3320 = vmatprep.subr.mxu0 0.0
        %3321 = vmatpush1.xpose.msra.mxu0 0.0
        %3322 = vmatprep.subr.mxu0 0.0
        %3323 = vmatpush1.xpose.msra.mxu0 0.0
        %3324 = vmatprep.subr.mxu0 0.0
        %3325 = vmatpush1.xpose.msra.mxu0 0.0
        %3326 = vmatprep.subr.mxu0 0.0
        %3327 = vmatpush1.xpose.msra.mxu0 0.0
        %3328 = vmatprep.subr.mxu0 0.0
        %3329 = vmatpush1.xpose.msra.mxu0 0.0
        %3330 = vmatprep.mubr.f32.mxu0 0.0
        %3331 = vmatmul.mubr.f32.gmra.mrb[0].mxu0 %v3262
        %v3332 = vpop.f32.mrb[0].mxu0
        %v3333 = vadd.f32 %v1248, %v3332
        %v3334 = vpop.f32.mrb[0].mxu0
        %3335 = vdwg.mxu0
        %v3336 = vsel %vm1253, %v3333, -inf
        %3337 = vmax.xlane.f32.xlu0 %v3336
        %v3338 = vpop.xlane.xlu0 %3337
        %v3339 = vsub.f32 %v3333, %v3338
        %v3340 = vmul.f32 %v3339, 1.442695
        %v3341 = vpow.pop %v3340
        %v3342 = vsel %vm1253, %v3341, 0.0
        %3343 = vadd.xlane.f32.xlu0 %v3342
        %v3344 = vpop.xlane.xlu0 %3343
        %v3345 = vrcp.pop %v3344
        %v3346 = vmul.f32 %v3341, %v3345
        %3347 = vrot.lane.b32.xlu0 %v2535, 40
        %v3348 = vpop.permute.xlu0 %3347
        %v3351 = vsel %vm1253, %v3346, 0
        %3353 = vmatprep.subr.mxu0 0.0
        %3354 = vmatpush1.msra.mxu0 %v3348
        %3355 = vmatprep.subr.mxu0 0.0
        %3356 = vmatpush1.msra.mxu0 0.0
        %3357 = vmatprep.subr.mxu0 0.0
        %3358 = vmatpush1.msra.mxu0 0.0
        %3359 = vmatprep.subr.mxu0 0.0
        %3360 = vmatpush1.msra.mxu0 0.0
        %3361 = vmatprep.subr.mxu0 0.0
        %3362 = vmatpush1.msra.mxu0 0.0
        %3363 = vmatprep.subr.mxu0 0.0
        %3364 = vmatpush1.msra.mxu0 0.0
        %3365 = vmatprep.subr.mxu0 0.0
        %3366 = vmatpush1.msra.mxu0 0.0
        %3367 = vmatprep.subr.mxu0 0.0
        %3368 = vmatpush1.msra.mxu0 0.0
        %3369 = vmatprep.subr.mxu0 0.0
        %3370 = vmatpush1.msra.mxu0 0.0
        %3371 = vmatprep.subr.mxu0 0.0
        %3372 = vmatpush1.msra.mxu0 0.0
        %3373 = vmatprep.subr.mxu0 0.0
        %3374 = vmatpush1.msra.mxu0 0.0
        %3375 = vmatprep.subr.mxu0 0.0
        %3376 = vmatpush1.msra.mxu0 0.0
        %3377 = vmatprep.subr.mxu0 0.0
        %3378 = vmatpush1.msra.mxu0 0.0
        %3379 = vmatprep.subr.mxu0 0.0
        %3380 = vmatpush1.msra.mxu0 0.0
        %3381 = vmatprep.subr.mxu0 0.0
        %3382 = vmatpush1.msra.mxu0 0.0
        %3383 = vmatprep.subr.mxu0 0.0
        %3384 = vmatpush1.msra.mxu0 0.0
        %3385 = vmatprep.subr.mxu0 0.0
        %3386 = vmatpush1.msra.mxu0 0.0
        %3387 = vmatprep.subr.mxu0 0.0
        %3388 = vmatpush1.msra.mxu0 0.0
        %3389 = vmatprep.subr.mxu0 0.0
        %3390 = vmatpush1.msra.mxu0 0.0
        %3391 = vmatprep.subr.mxu0 0.0
        %3392 = vmatpush1.msra.mxu0 0.0
        %3393 = vmatprep.subr.mxu0 0.0
        %3394 = vmatpush1.msra.mxu0 0.0
        %3395 = vmatprep.subr.mxu0 0.0
        %3396 = vmatpush1.msra.mxu0 0.0
        %3397 = vmatprep.subr.mxu0 0.0
        %3398 = vmatpush1.msra.mxu0 0.0
        %3399 = vmatprep.subr.mxu0 0.0
        %3400 = vmatpush1.msra.mxu0 0.0
        %3401 = vmatprep.subr.mxu0 0.0
        %3402 = vmatpush1.msra.mxu0 0.0
        %3403 = vmatprep.subr.mxu0 0.0
        %3404 = vmatpush1.msra.mxu0 0.0
        %3405 = vmatprep.subr.mxu0 0.0
        %3406 = vmatpush1.msra.mxu0 0.0
        %3407 = vmatprep.subr.mxu0 0.0
        %3408 = vmatpush1.msra.mxu0 0.0
        %3409 = vmatprep.subr.mxu0 0.0
        %3410 = vmatpush1.msra.mxu0 0.0
        %3411 = vmatprep.subr.mxu0 0.0
        %3412 = vmatpush1.msra.mxu0 0.0
        %3413 = vmatprep.subr.mxu0 0.0
        %3414 = vmatpush1.msra.mxu0 0.0
        %3415 = vmatprep.subr.mxu0 0.0
        %3416 = vmatpush1.msra.mxu0 0.0
        %3417 = vmatprep.mubr.f32.mxu0 0.0
        %3418 = vmatmul.mubr.f32.gmra.mrb[0].mxu0 %v3351
        %v3419 = vpop.f32.mrb[0].mxu0
        %v3420 = vadd.f32 0.0, %v3419
        %v3421 = vpop.f32.mrb[0].mxu0
        %3422 = vdwg.mxu0
        %v3424 = vsel %vm1253, %v3420, 0
        %3426 = vmatprep.subr.mxu0 0.0
        %3427 = vmatpush1.msra.mxu0 %v2541
        %3428 = vmatprep.subr.mxu0 0.0
        %3429 = vmatpush1.msra.mxu0 0.0
        %3430 = vmatprep.subr.mxu0 0.0
        %3431 = vmatpush1.msra.mxu0 0.0
        %3432 = vmatprep.subr.mxu0 0.0
        %3433 = vmatpush1.msra.mxu0 0.0
        %3434 = vmatprep.subr.mxu0 0.0
        %3435 = vmatpush1.msra.mxu0 0.0
        %3436 = vmatprep.subr.mxu0 0.0
        %3437 = vmatpush1.msra.mxu0 0.0
        %3438 = vmatprep.subr.mxu0 0.0
        %3439 = vmatpush1.msra.mxu0 0.0
        %3440 = vmatprep.subr.mxu0 0.0
        %3441 = vmatpush1.msra.mxu0 0.0
        %3442 = vmatprep.subr.mxu0 0.0
        %3443 = vmatpush1.msra.mxu0 0.0
        %3444 = vmatprep.subr.mxu0 0.0
        %3445 = vmatpush1.msra.mxu0 0.0
        %3446 = vmatprep.subr.mxu0 0.0
        %3447 = vmatpush1.msra.mxu0 0.0
        %3448 = vmatprep.subr.mxu0 0.0
        %3449 = vmatpush1.msra.mxu0 0.0
        %3450 = vmatprep.subr.mxu0 0.0
        %3451 = vmatpush1.msra.mxu0 0.0
        %3452 = vmatprep.subr.mxu0 0.0
        %3453 = vmatpush1.msra.mxu0 0.0
        %3454 = vmatprep.subr.mxu0 0.0
        %3455 = vmatpush1.msra.mxu0 0.0
        %3456 = vmatprep.subr.mxu0 0.0
        %3457 = vmatpush1.msra.mxu0 0.0
        %3458 = vmatprep.subr.mxu0 0.0
        %3459 = vmatpush1.msra.mxu0 0.0
        %3460 = vmatprep.subr.mxu0 0.0
        %3461 = vmatpush1.msra.mxu0 0.0
        %3462 = vmatprep.subr.mxu0 0.0
        %3463 = vmatpush1.msra.mxu0 0.0
        %3464 = vmatprep.subr.mxu0 0.0
        %3465 = vmatpush1.msra.mxu0 0.0
        %3466 = vmatprep.subr.mxu0 0.0
        %3467 = vmatpush1.msra.mxu0 0.0
        %3468 = vmatprep.subr.mxu0 0.0
        %3469 = vmatpush1.msra.mxu0 0.0
        %3470 = vmatprep.subr.mxu0 0.0
        %3471 = vmatpush1.msra.mxu0 0.0
        %3472 = vmatprep.subr.mxu0 0.0
        %3473 = vmatpush1.msra.mxu0 0.0
        %3474 = vmatprep.subr.mxu0 0.0
        %3475 = vmatpush1.msra.mxu0 0.0
        %3476 = vmatprep.subr.mxu0 0.0
        %3477 = vmatpush1.msra.mxu0 0.0
        %3478 = vmatprep.subr.mxu0 0.0
        %3479 = vmatpush1.msra.mxu0 0.0
        %3480 = vmatprep.subr.mxu0 0.0
        %3481 = vmatpush1.msra.mxu0 0.0
        %3482 = vmatprep.subr.mxu0 0.0
        %3483 = vmatpush1.msra.mxu0 0.0
        %3484 = vmatprep.subr.mxu0 0.0
        %3485 = vmatpush1.msra.mxu0 0.0
        %3486 = vmatprep.subr.mxu0 0.0
        %3487 = vmatpush1.msra.mxu0 0.0
        %3488 = vmatprep.subr.mxu0 0.0
        %3489 = vmatpush1.msra.mxu0 0.0
        %3490 = vmatprep.mubr.f32.mxu0 0.0
        %3491 = vmatmul.mubr.f32.gmra.mrb[0].mxu0 %v3424
        %v3492 = vpop.f32.mrb[0].mxu0
        %v3493 = vadd.f32 0.0, %v3492
        %v3494 = vpop.f32.mrb[0].mxu0
        %3495 = vdwg.mxu0
        %v3496 = vadd.f32 %v3257, %v3493
        %v3497 = vadd.f32 %v2421, %v3496
        %v3498 = vld [vmem:[#allocation20] sm:$0x1]
        %v3500 = vlaneseq
        %v3501 = vshrl.u32 %v3500, 7
        %v3502 = vsub.s32 0, %v3501
        %v3503 = vrot.slane %v3498, %v3502
        %v3505 = vadd.f32 %v3497, %v3503
        %v3506 = vld [vmem:[%s43] sm:$0x1]
        %v3507 = vld [vmem:[#allocation22] sm:$0x1]
        %v3508 = vsel %vm1123, %v3505, 0.0
        %3509 = vadd.xlane.f32.xlu0 %v3508
        %v3510 = vpop.xlane.xlu0 %3509
        %v3511 = vmul.f32 %v3510, %v1127
        %v3512 = vmul.f32 %v3505, %v3505
        %v3513 = vsel %vm1123, %v3512, 0.0
        %3514 = vadd.xlane.f32.xlu0 %v3513
        %v3515 = vpop.xlane.xlu0 %3514
        %v3516 = vmul.f32 %v3515, %v1127
        %v3517 = vmul.f32 %v3511, %v3511
        %v3518 = vsub.f32 %v3516, %v3517
        %v3519 = vmax.f32 %v3518, 0.0
        %v3520 = vsub.f32 %v3505, %v3511
        %v3521 = vadd.f32 %v3519, 1e-06
        %v3522 = vrsqrt.pop %v3521
        %v3523 = vmul.f32 %v3520, %v3522
        %v3525 = vlaneseq
        %v3526 = vshrl.u32 %v3525, 7
        %v3527 = vsub.s32 0, %v3526
        %v3528 = vrot.slane %v3506, %v3527
        %v3530 = vmul.f32 %v3523, %v3528
        %v3532 = vlaneseq
        %v3533 = vshrl.u32 %v3532, 7
        %v3534 = vsub.s32 0, %v3533
        %v3535 = vrot.slane %v3507, %v3534
        %v3537 = vadd.f32 %v3530, %v3535
        %v3538 = vld [vmem:[%s47] sm:$0xff]
        %v3539 = vld [vmem:[%s47 + $0x8] sm:$0xff]
        %v3540 = vld [vmem:[%s47 + $0x10] sm:$0xff]
        %v3541 = vld [vmem:[%s47 + $0x18] sm:$0xff]
        %v3542 = vld [vmem:[#allocation23] sm:$0x1]
        %v3544 = vlaneseq
        %v3545 = vshrl.u32 %v3544, 7
        %v3546 = vsub.s32 0, %v3545
        %v3547 = vrot.slane %v3542, %v3546
        %v3550 = vsel %vm1123, %v3537, 0
        %3552 = vmatprep.subr.mxu0 0.0
        %3553 = vmatpush1.msra.mxu0 %v3538
        %3554 = vmatprep.subr.mxu0 0.0
        %3555 = vmatpush1.msra.mxu0 %v3539
        %3556 = vmatprep.subr.mxu0 0.0
        %3557 = vmatpush1.msra.mxu0 %v3540
        %3558 = vmatprep.subr.mxu0 0.0
        %3559 = vmatpush1.msra.mxu0 %v3541
        %3560 = vmatprep.subr.mxu0 0.0
        %3561 = vmatpush1.msra.mxu0 0.0
        %3562 = vmatprep.subr.mxu0 0.0
        %3563 = vmatpush1.msra.mxu0 0.0
        %3564 = vmatprep.subr.mxu0 0.0
        %3565 = vmatpush1.msra.mxu0 0.0
        %3566 = vmatprep.subr.mxu0 0.0
        %3567 = vmatpush1.msra.mxu0 0.0
        %3568 = vmatprep.subr.mxu0 0.0
        %3569 = vmatpush1.msra.mxu0 0.0
        %3570 = vmatprep.subr.mxu0 0.0
        %3571 = vmatpush1.msra.mxu0 0.0
        %3572 = vmatprep.subr.mxu0 0.0
        %3573 = vmatpush1.msra.mxu0 0.0
        %3574 = vmatprep.subr.mxu0 0.0
        %3575 = vmatpush1.msra.mxu0 0.0
        %3576 = vmatprep.subr.mxu0 0.0
        %3577 = vmatpush1.msra.mxu0 0.0
        %3578 = vmatprep.subr.mxu0 0.0
        %3579 = vmatpush1.msra.mxu0 0.0
        %3580 = vmatprep.subr.mxu0 0.0
        %3581 = vmatpush1.msra.mxu0 0.0
        %3582 = vmatprep.subr.mxu0 0.0
        %3583 = vmatpush1.msra.mxu0 0.0
        %3584 = vmatprep.subr.mxu0 0.0
        %3585 = vmatpush1.msra.mxu0 0.0
        %3586 = vmatprep.subr.mxu0 0.0
        %3587 = vmatpush1.msra.mxu0 0.0
        %3588 = vmatprep.subr.mxu0 0.0
        %3589 = vmatpush1.msra.mxu0 0.0
        %3590 = vmatprep.subr.mxu0 0.0
        %3591 = vmatpush1.msra.mxu0 0.0
        %3592 = vmatprep.subr.mxu0 0.0
        %3593 = vmatpush1.msra.mxu0 0.0
        %3594 = vmatprep.subr.mxu0 0.0
        %3595 = vmatpush1.msra.mxu0 0.0
        %3596 = vmatprep.subr.mxu0 0.0
        %3597 = vmatpush1.msra.mxu0 0.0
        %3598 = vmatprep.subr.mxu0 0.0
        %3599 = vmatpush1.msra.mxu0 0.0
        %3600 = vmatprep.subr.mxu0 0.0
        %3601 = vmatpush1.msra.mxu0 0.0
        %3602 = vmatprep.subr.mxu0 0.0
        %3603 = vmatpush1.msra.mxu0 0.0
        %3604 = vmatprep.subr.mxu0 0.0
        %3605 = vmatpush1.msra.mxu0 0.0
        %3606 = vmatprep.subr.mxu0 0.0
        %3607 = vmatpush1.msra.mxu0 0.0
        %3608 = vmatprep.subr.mxu0 0.0
        %3609 = vmatpush1.msra.mxu0 0.0
        %3610 = vmatprep.subr.mxu0 0.0
        %3611 = vmatpush1.msra.mxu0 0.0
        %3612 = vmatprep.subr.mxu0 0.0
        %3613 = vmatpush1.msra.mxu0 0.0
        %3614 = vmatprep.subr.mxu0 0.0
        %3615 = vmatpush1.msra.mxu0 0.0
        %3616 = vmatprep.mubr.f32.mxu0 0.0
        %3617 = vmatmul.mubr.f32.gmra.mrb[0].mxu0 %v3550
        %v3618 = vpop.f32.mrb[0].mxu0
        %v3619 = vadd.f32 %v3547, %v3618
        %v3620 = vpop.f32.mrb[0].mxu0
        %3621 = vdwg.mxu0
        %v3622 = vmax.f32 %v3619, 0.0
        %v3623 = vld [vmem:[%s51] sm:$0xff]
        %v3624 = vld [vmem:[%s51 + $0x8] sm:$0xff]
        %v3625 = vld [vmem:[%s51 + $0x10] sm:$0xff]
        %v3626 = vld [vmem:[%s51 + $0x18] sm:$0xff]
        %v3627 = vld [vmem:[%s51 + $0x20] sm:$0xff]
        %v3628 = vld [vmem:[%s51 + $0x28] sm:$0xff]
        %v3629 = vld [vmem:[%s51 + $0x30] sm:$0xff]
        %v3630 = vld [vmem:[%s51 + $0x38] sm:$0xff]
        %v3632 = vsel %vm2339, %v3622, 0
        %3634 = vmatprep.subr.mxu0 0.0
        %3635 = vmatpush1.msra.mxu0 %v3623
        %3636 = vmatprep.subr.mxu0 0.0
        %3637 = vmatpush1.msra.mxu0 %v3624
        %3638 = vmatprep.subr.mxu0 0.0
        %3639 = vmatpush1.msra.mxu0 %v3625
        %3640 = vmatprep.subr.mxu0 0.0
        %3641 = vmatpush1.msra.mxu0 %v3626
        %3642 = vmatprep.subr.mxu0 0.0
        %3643 = vmatpush1.msra.mxu0 %v3627
        %3644 = vmatprep.subr.mxu0 0.0
        %3645 = vmatpush1.msra.mxu0 %v3628
        %3646 = vmatprep.subr.mxu0 0.0
        %3647 = vmatpush1.msra.mxu0 %v3629
        %3648 = vmatprep.subr.mxu0 0.0
        %3649 = vmatpush1.msra.mxu0 %v3630
        %3650 = vmatprep.subr.mxu0 0.0
        %3651 = vmatpush1.msra.mxu0 0.0
        %3652 = vmatprep.subr.mxu0 0.0
        %3653 = vmatpush1.msra.mxu0 0.0
        %3654 = vmatprep.subr.mxu0 0.0
        %3655 = vmatpush1.msra.mxu0 0.0
        %3656 = vmatprep.subr.mxu0 0.0
        %3657 = vmatpush1.msra.mxu0 0.0
        %3658 = vmatprep.subr.mxu0 0.0
        %3659 = vmatpush1.msra.mxu0 0.0
        %3660 = vmatprep.subr.mxu0 0.0
        %3661 = vmatpush1.msra.mxu0 0.0
        %3662 = vmatprep.subr.mxu0 0.0
        %3663 = vmatpush1.msra.mxu0 0.0
        %3664 = vmatprep.subr.mxu0 0.0
        %3665 = vmatpush1.msra.mxu0 0.0
        %3666 = vmatprep.subr.mxu0 0.0
        %3667 = vmatpush1.msra.mxu0 0.0
        %3668 = vmatprep.subr.mxu0 0.0
        %3669 = vmatpush1.msra.mxu0 0.0
        %3670 = vmatprep.subr.mxu0 0.0
        %3671 = vmatpush1.msra.mxu0 0.0
        %3672 = vmatprep.subr.mxu0 0.0
        %3673 = vmatpush1.msra.mxu0 0.0
        %3674 = vmatprep.subr.mxu0 0.0
        %3675 = vmatpush1.msra.mxu0 0.0
        %3676 = vmatprep.subr.mxu0 0.0
        %3677 = vmatpush1.msra.mxu0 0.0
        %3678 = vmatprep.subr.mxu0 0.0
        %3679 = vmatpush1.msra.mxu0 0.0
        %3680 = vmatprep.subr.mxu0 0.0
        %3681 = vmatpush1.msra.mxu0 0.0
        %3682 = vmatprep.subr.mxu0 0.0
        %3683 = vmatpush1.msra.mxu0 0.0
        %3684 = vmatprep.subr.mxu0 0.0
        %3685 = vmatpush1.msra.mxu0 0.0
        %3686 = vmatprep.subr.mxu0 0.0
        %3687 = vmatpush1.msra.mxu0 0.0
        %3688 = vmatprep.subr.mxu0 0.0
        %3689 = vmatpush1.msra.mxu0 0.0
        %3690 = vmatprep.subr.mxu0 0.0
        %3691 = vmatpush1.msra.mxu0 0.0
        %3692 = vmatprep.subr.mxu0 0.0
        %3693 = vmatpush1.msra.mxu0 0.0
        %3694 = vmatprep.subr.mxu0 0.0
        %3695 = vmatpush1.msra.mxu0 0.0
        %3696 = vmatprep.subr.mxu0 0.0
        %3697 = vmatpush1.msra.mxu0 0.0
        %3698 = vmatprep.mubr.f32.mxu0 0.0
        %3699 = vmatmul.mubr.f32.gmra.mrb[0].mxu0 %v3632
        %v3700 = vpop.f32.mrb[0].mxu0
        %v3701 = vadd.f32 0.0, %v3700
        %v3702 = vpop.f32.mrb[0].mxu0
        %3703 = vdwg.mxu0
        %v3704 = vadd.f32 %v3505, %v3701
        %v3705 = vld [vmem:[#allocation25] sm:$0x1]
        %v3707 = vlaneseq
        %v3708 = vshrl.u32 %v3707, 7
        %v3709 = vsub.s32 0, %v3708
        %v3710 = vrot.slane %v3705, %v3709
        %v3712 = vadd.f32 %v3704, %v3710
        %v3713 = vld [vmem:[%s55] sm:$0x1]
        %v3714 = vld [vmem:[%s57] sm:$0x1]
        %v3715 = vsel %vm1123, %v3712, 0.0
        %3716 = vadd.xlane.f32.xlu0 %v3715
        %v3717 = vpop.xlane.xlu0 %3716
        %v3718 = vmul.f32 %v3717, %v1127
        %v3719 = vmul.f32 %v3712, %v3712
        %v3720 = vsel %vm1123, %v3719, 0.0
        %3721 = vadd.xlane.f32.xlu0 %v3720
        %v3722 = vpop.xlane.xlu0 %3721
        %v3723 = vmul.f32 %v3722, %v1127
        %v3724 = vmul.f32 %v3718, %v3718
        %v3725 = vsub.f32 %v3723, %v3724
        %v3726 = vmax.f32 %v3725, 0.0
        %v3727 = vsub.f32 %v3712, %v3718
        %v3728 = vadd.f32 %v3726, 1e-06
        %v3729 = vrsqrt.pop %v3728
        %v3730 = vmul.f32 %v3727, %v3729
        %v3732 = vlaneseq
        %v3733 = vshrl.u32 %v3732, 7
        %v3734 = vsub.s32 0, %v3733
        %v3735 = vrot.slane %v3713, %v3734
        %v3737 = vmul.f32 %v3730, %v3735
        %v3739 = vlaneseq
        %v3740 = vshrl.u32 %v3739, 7
        %v3741 = vsub.s32 0, %v3740
        %v3742 = vrot.slane %v3714, %v3741
        %v3744 = vadd.f32 %v3737, %v3742
        %3745 = vst.msk [vmem:[%s1113] sm:$0xff] %vm1123, %v3744
        %s3746 = sand.u32 %s712, 1
        %s3747 = scalar_lea.sflag [#allocation4], %s3746
        %s3748 = sand.u32 %s712, 1
        %s3749 = smul.addr %s3748, 8
        %s3750 = scalar_lea.vmem [#allocation26], %s3749
        // Predicated region
        $region197: #{encoder_forward.1} parent=135 // pred_check
          %p3751 = pneg %p722
        $region198: #{encoder_forward.1} parent=135 // pred_check_branch
          %3753 = sbr.rel (%p3751) target = $region200
        $region199: #{encoder_forward.1} parent=135 // pred_region
          %s3755 = ssub.s32 128, 128
          %3756 = vsyncadd %s3747, %s3755
          %s3757 = smul.addr %s85, 128
          %s3758 = scalar_lea.hbm %s59, %s3757
          %s3760 = sshll.u32 %s3750, 4
          %s3761 = int_to_ptr.vmem [resolvable:$true] %s3760
          %3763 = dma.vmem_to_hbm [thread:$0]  %s3761, 128, %s3758, %s3747
        $region200: #{encoder_forward.1} parent=135 // pred_fallthru
          _
      $region136: #{encoder_forward.1} parent=5 // pred_fallthru
        _
      %p3764 = scmp.le.s32.totalorder 2, %s80
      // Predicated region
      $region201: #{encoder_forward.1} parent=5 // pred_check
        %p3765 = pneg %p3764
      $region202: #{encoder_forward.1} parent=5 // pred_check_branch
        %3767 = sbr.rel (%p3765) target = $region204
      $region203: #{encoder_forward.1} parent=5 // pred_region
        %s3768 = ssub.s32 %s80, 2
        // Predicated region
        $region205: #{encoder_forward.1} parent=203 // pred_check
          %p3769 = pneg %p728
        $region206: #{encoder_forward.1} parent=203 // pred_check_branch
          %3771 = sbr.rel (%p3769) target = $region208
        $region207: #{encoder_forward.1} parent=203 // pred_region
          %s3772 = sand.u32 %s713, 1
          %s3773 = scalar_lea.sflag [#allocation4], %s3772
          %s3774 = sand.u32 %s713, 1
          %s3775 = smul.addr %s3774, 8
          %s3776 = scalar_lea.vmem [#allocation26], %s3775
          %3777 = dma.done %s3773, 128
        $region208: #{encoder_forward.1} parent=203 // pred_fallthru
          _
      $region204: #{encoder_forward.1} parent=5 // pred_fallthru
        _
    $region6: #{encoder_forward.1} parent=1 // loop_footer
      %s84 = sadd.s32 1, %s80
    $region7: #{encoder_forward.1} parent=1 // loop_footer_branch
      %79 = sbr.rel target = $region3
    $region8: #{encoder_forward.1} parent=1 // loop_exit
      _
    %3778 = vsyncpa [#allocation3], 1
    %s3779 = scalar_lea.sflag [#allocation3], 1
    %3780 = vsyncpa %s3779, 1
    %3781 = vsyncpa [#allocation6], 1
    %s3782 = scalar_lea.sflag [#allocation6], 1
    %3783 = vsyncpa %s3782, 1
    %3784 = vsyncpa [#allocation9], 1
    %3785 = vsyncpa [#allocation12], 1
    %3786 = vsyncpa [#allocation15], 1
    %3787 = vsyncpa [#allocation18], 1
    %3788 = vsyncpa [#allocation21], 1
    %3789 = vsyncpa [#allocation24], 1
    %3790 = vsyncpa [#allocation4], 1
    %s3791 = scalar_lea.sflag [#allocation4], 1
    %3792 = vsyncpa %s3791, 1

</llo_original>
